<compile_context>
chip_gen: v7x
topology: tpu7x:2x2x1
jax: 0.10.0
libtpu: 0.0.40
codegen_flags: <defaults>
</compile_context>

<pallas_src>
import jax
import jax.numpy as jnp
from jax.experimental import pallas as pl
from jax.experimental.pallas import tpu as pltpu

# ---------------- configuration (small shapes, consistent with the torch module) -----------
BATCH = 2
SEQ = 8
TOKEN_LEN = 16                                   # chars per token
VOCAB_C = 64                                     # len(vocab_c)
CHAR_EMB_DIM = 32
CHAR_CONV_FILTERS = ((1, 32), (2, 32), (3, 64))  # (kernel_size, out_channels)
NUM_HIGHWAYS = 2
OUTPUT_DIM = 64
NUM_FILTERS = sum(oc for _, oc in CHAR_CONV_FILTERS)   # 128 -> lane-dense feature dim
KMAX = max(k for k, _ in CHAR_CONV_FILTERS)            # 3 conv taps (im2col width)
VBAND = VOCAB_C + 1                                    # per-tap one-hot band (+1 "oob" slot)
Q_DIM = KMAX * VBAND                                   # fused one-hot width (taps x band)


def _round_up(x, m):
    return (x + m - 1) // m * m


OUT_PAD = _round_up(OUTPUT_DIM, 128)             # pad projection to 128 lanes (unmasked stores)


# ---------------- Pallas kernel --------------------------------------------------------------
def make_conv_token_embedder_kernel(tn, T, Q, kmax, D, num_highways):
    """tn tokens per grid step; conv/highway structure is static and traced once."""
    R = tn * T           # char positions per tile (rows of the fused conv matmul)

    def kernel(*refs):
        ids_ref, ew_hi_ref, ew_lo_ref, cbias_ref = refs[0:4]
        hw_refs = [(refs[4 + 2 * l], refs[5 + 2 * l]) for l in range(num_highways)]
        pw_ref, pb_ref, out_ref = refs[4 + 2 * num_highways:]

        # --- one-hot im2col: int32 compares -> bool OR -> ONE cast to bf16 (exact 0/1) ------
        ids3 = ids_ref[...]                                    # (R, kmax) int32, pre-offset
        q = jax.lax.broadcasted_iota(jnp.int32, (R, Q), 1)
        hit = ids3[:, 0:1] == q
        for j in range(1, kmax):
            hit = hit | (ids3[:, j:j + 1] == q)                # disjoint bands: OR == sum
        oh = hit.astype(jnp.bfloat16)

        # --- fused conv as bf16 MXU matmuls with f32 accumulation (hi + lo split) -----------
        conv = (jnp.dot(oh, ew_hi_ref[...], preferred_element_type=jnp.float32)
                + jnp.dot(oh, ew_lo_ref[...], preferred_element_type=jnp.float32))   # (R, D)

        # --- max over time (invalid positions already hold ~-1e30 from EW), bias + relu -----
        conv = conv.reshape(tn, T, D)
        # bias is time-invariant, so max(conv) + b == max(conv + b)
        h = jnp.maximum(jnp.max(conv, axis=1) + cbias_ref[...], 0.0)                 # (tn, D)

        # --- Highway layers: gate * x + (1 - gate) * relu(hidden) ---------------------------
        for w_ref, b_ref in hw_refs:
            p = jnp.dot(h, w_ref[...], preferred_element_type=jnp.float32) + b_ref[...]
            hidden = jnp.maximum(p[:, :D], 0.0)
            gate = jax.nn.sigmoid(p[:, D:])
            h = gate * h + (1.0 - gate) * hidden

        # --- final projection (zero-padded to 128 lanes -> lane-dense, unmasked stores) -----
        out_ref[...] = (jnp.dot(h, pw_ref[...], preferred_element_type=jnp.float32)
                        + pb_ref[...])

    return kernel


# ---------------- one-time weight preprocessing (hoisted out of the forward path) ------------
def prepare_params(params):
    """Fold the embedding table into the conv weights and pre-layout all weights.

    EW[j*VBAND + v, o] = sum_c emb[v, c] * conv_w[filter(o)][o_local, c, j]   (0 if j >= k(o))
    EW[j*VBAND + V, o] = -1e30 if k(o) > j else 0     (kills out-of-range positions in the max)
    so (one-hot ids) @ EW performs embedding lookup + every conv tap of every filter + the
    time-validity masking in a single MXU contraction.  EW is shipped as bf16 hi + lo.
    """
    C, V, D, T = CHAR_EMB_DIM, VOCAB_C, NUM_FILTERS, TOKEN_LEN
    w_tap = jnp.zeros((KMAX, C, D), jnp.float32)
    biases, kernel_sizes = [], []
    col = 0
    for i, (k, oc) in enumerate(CHAR_CONV_FILTERS):
        w = params[f"conv{i}_w"].astype(jnp.float32)           # (oc, C, k) torch Conv1d layout
        for j in range(k):
            w_tap = w_tap.at[j, :, col:col + oc].set(w[:, :, j].T)
        biases.append(params[f"conv{i}_b"].astype(jnp.float32))
        kernel_sizes.append(jnp.full((oc,), k, jnp.int32))
        col += oc
    ew_real = jnp.einsum("vc,jcd->jvd", params["emb"].astype(jnp.float32), w_tap,
                         precision=jax.lax.Precision.HIGHEST)          # (KMAX, V, D)
    kcol = jnp.concatenate(kernel_sizes)                               # (D,)
    # per-tap "out of range" row: -1e30 only for filters that actually use tap j.
    oob = jnp.where(kcol[None, :] > jnp.arange(KMAX)[:, None], -1e30, 0.0)   # (KMAX, D)
    ew = jnp.concatenate([ew_real, oob[:, None, :]], axis=1).reshape(KMAX * VBAND, D)
    ew_hi = ew.astype(jnp.bfloat16)
    ew_lo = (ew - ew_hi.astype(jnp.float32)).astype(jnp.bfloat16)
    conv_bias = jnp.concatenate(biases).reshape(1, D)

    prepared = [ew_hi, ew_lo, conv_bias]
    for l in range(NUM_HIGHWAYS):
        prepared.append(params[f"hw{l}_w"].T.astype(jnp.float32))             # (D, 2D)
        prepared.append(params[f"hw{l}_b"].reshape(1, 2 * D).astype(jnp.float32))
    pw = jnp.zeros((D, OUT_PAD), jnp.float32).at[:, :OUTPUT_DIM].set(
        params["proj_w"].T.astype(jnp.float32))
    pb = jnp.zeros((1, OUT_PAD), jnp.float32).at[:, :OUTPUT_DIM].set(
        params["proj_b"].astype(jnp.float32))
    prepared += [pw, pb]
    return tuple(prepared)


# ---------------- generation-aware tiling helpers ---------------------------------------------
def _default_tokens_per_tile():
    # v5e/v6e: 128 MiB VMEM -> large tiles amortize the ~0.35us per-grid-step overhead and
    # feed long MXU runs.  v7x: 64 MiB per TensorCore (32 MiB scoped default) -> keep tiles
    # modest and rely on >=2 grid steps to use both TensorCores.
    try:
        vmem_bytes = pltpu.get_tpu_info().vmem_capacity_bytes
    except Exception:
        vmem_bytes = 64 << 20          # conservative fallback (assume v7x-sized VMEM)
    return 512 if vmem_bytes >= (96 << 20) else 256


def _vmem_limit_bytes(tn):
    # Rough per-tile budget (includes the 3->128 lane padding of the ids block and the int32
    # lane iota), with 1.5x slack; clamped to [32 MiB, 112 MiB] so it is always <= physical.
    T, D = TOKEN_LEN, NUM_FILTERS
    q_pad = _round_up(Q_DIM, 128)
    r = tn * T
    per_tile = (2 * r * 128 * 4        # ids tile (KMAX lanes padded to 128), double-buffered
                + r * q_pad * 4        # int32 lane iota
                + r * q_pad * 2        # bf16 one-hot
                + 3 * r * D * 4        # f32 conv partials + sum
                + 2 * tn * OUT_PAD * 4)  # double-buffered output tile
    weights_etc = 4 << 20
    return int(min(112 << 20, max(32 << 20, (per_tile + weights_etc) * 3 // 2)))


# ---------------- wrapper ----------------------------------------------------------------------
def conv_token_embedder(char_ids, prepared, tokens_per_tile=None):
    B, S, T = char_ids.shape
    N = B * S

    # im2col on the int32 ids only (tiny): column j holds the id at char position t+j, or the
    # dedicated per-tap "out of range" id when t+j >= T; ids are pre-offset by j*VBAND so the
    # kernel's one-hot row directly selects tap-j's block of the folded weight matrix EW.
    ids = char_ids.reshape(N, T).astype(jnp.int32)
    pos = jnp.arange(T)[:, None] + jnp.arange(KMAX)[None, :]                 # (T, KMAX)
    gathered = ids[:, jnp.minimum(pos, T - 1)]                               # (N, T, KMAX)
    offs = (jnp.arange(KMAX, dtype=jnp.int32) * VBAND)[None, None, :]
    ids3 = jnp.where((pos <= T - 1)[None, :, :], gathered, VOCAB_C) + offs
    ids3 = ids3.reshape(N * T, KMAX).astype(jnp.int32)

    if tokens_per_tile is None:
        tokens_per_tile = _default_tokens_per_tile()
    tokens_per_tile = max(8, _round_up(int(tokens_per_tile), 8))
    # cap the tile so the grid has >= 2 steps (v7x megacore: both TCs get work), tile mult of 8
    tn = min(tokens_per_tile, max(8, _round_up(pl.cdiv(N, 2), 8)))
    n_pad = _round_up(N, tn)
    if n_pad > N:
        ids3 = jnp.concatenate([ids3, jnp.zeros(((n_pad - N) * T, KMAX), jnp.int32)], axis=0)

    kernel = make_conv_token_embedder_kernel(tn, T, Q_DIM, KMAX, NUM_FILTERS, NUM_HIGHWAYS)

    def _run(single_buffer_weights):
        weight_kwargs = ({"pipeline_mode": pl.Buffered(1)} if single_buffer_weights else {})
        in_specs = [pl.BlockSpec((tn * T, KMAX), lambda i: (i, 0))]       # ids tile (pipelined)
        # weights/biases: constant index map -> resident; single-buffered (no re-fetch ever).
        in_specs += [pl.BlockSpec(w.shape, lambda i: (0, 0), **weight_kwargs)
                     for w in prepared]
        return pl.pallas_call(
            kernel,
            out_shape=jax.ShapeDtypeStruct((n_pad, OUT_PAD), jnp.float32),
            grid=(n_pad // tn,),
            in_specs=in_specs,
            out_specs=pl.BlockSpec((tn, OUT_PAD), lambda i: (i, 0)),
            compiler_params=pltpu.CompilerParams(
                dimension_semantics=("parallel",),
                vmem_limit_bytes=_vmem_limit_bytes(tn)),
        )(ids3, *prepared)

    try:
        out = _run(True)
    except Exception:
        # Some builds may reject pipeline_mode on top-level pallas_call; fall back to the
        # proven double-buffered-weights configuration rather than failing outright.
        out = _run(False)
    return out[:N, :OUTPUT_DIM].reshape(B, S, OUTPUT_DIM)


# ---------------- deterministic parameter init (shapes match the torch __init__) --------------
def init_params(key):
    p = {}
    D = NUM_FILTERS
    k_emb, key = jax.random.split(key)
    # nn.Embedding(len(vocab_c), char_embedding_dim); weight.uniform_(-0.25, 0.25)
    # (padding_idx only affects gradients, not this forward pass.)
    p["emb"] = jax.random.uniform(k_emb, (VOCAB_C, CHAR_EMB_DIM), jnp.float32, -0.25, 0.25)
    for i, (ksz, oc) in enumerate(CHAR_CONV_FILTERS):
        kw, kb, key = jax.random.split(key, 3)
        # torch Conv1d weight: (out_channels, in_channels, kernel_size)
        p[f"conv{i}_w"] = jax.random.normal(kw, (oc, CHAR_EMB_DIM, ksz), jnp.float32) * 0.1
        p[f"conv{i}_b"] = jax.random.normal(kb, (oc,), jnp.float32) * 0.1
    for l in range(NUM_HIGHWAYS):
        kw, kb, key = jax.random.split(key, 3)
        # torch Linear(D, 2D): weight (2D, D); bias[D:] filled with 1 (transform gate)
        p[f"hw{l}_w"] = jax.random.normal(kw, (2 * D, D), jnp.float32) * 0.05
        b = jax.random.normal(kb, (2 * D,), jnp.float32) * 0.05
        p[f"hw{l}_b"] = b.at[D:].set(1.0)
    kw, kb = jax.random.split(key)
    # torch Linear(D, output_dim): weight (output_dim, D)
    p["proj_w"] = jax.random.normal(kw, (OUTPUT_DIM, D), jnp.float32) * 0.05
    p["proj_b"] = jax.random.normal(kb, (OUTPUT_DIM,), jnp.float32) * 0.05
    return p


# ---------------- pure-JAX reference (mirrors the torch forward) -------------------------------
def reference(char_ids, params):
    B, S, T = char_ids.shape
    N = B * S
    ids = char_ids.reshape(N, T)
    x = params["emb"][ids]                                 # (N, T, C)
    feats = []
    for i, (ksz, oc) in enumerate(CHAR_CONV_FILTERS):
        w = params[f"conv{i}_w"]                           # (oc, C, k)
        b = params[f"conv{i}_b"]
        t_out = T - ksz + 1
        acc = jnp.zeros((N, t_out, oc), jnp.float32)
        for j in range(ksz):
            acc = acc + jnp.einsum("ntc,oc->nto", x[:, j:j + t_out, :], w[:, :, j])
        acc = acc + b
        feats.append(jax.nn.relu(jnp.max(acc, axis=1)))
    h = jnp.concatenate(feats, axis=-1)
    D = NUM_FILTERS
    for l in range(NUM_HIGHWAYS):
        proj = h @ params[f"hw{l}_w"].T + params[f"hw{l}_b"]
        hidden = jax.nn.relu(proj[:, :D])
        gate = jax.nn.sigmoid(proj[:, D:])
        h = gate * h + (1.0 - gate) * hidden
    out = h @ params["proj_w"].T + params["proj_b"]
    return out.reshape(B, S, OUTPUT_DIM)


if __name__ == "__main__":
    root = jax.random.PRNGKey(0)
    k_params, k_ids = jax.random.split(root)
    params = init_params(k_params)
    prepared = prepare_params(params)      # one-time weight folding / layout (not per-forward)
    char_ids = jax.random.randint(k_ids, (BATCH, SEQ, TOKEN_LEN), 0, VOCAB_C, dtype=jnp.int32)

    out = jax.block_until_ready(conv_token_embedder(char_ids, prepared))
    ref = jax.block_until_ready(reference(char_ids, params))

    assert out.shape == (BATCH, SEQ, OUTPUT_DIM), out.shape
    max_err = float(jnp.max(jnp.abs(out - ref)))
    assert jnp.allclose(out, ref, rtol=5e-4, atol=5e-4), max_err

    print("KERNEL_OK")
</pallas_src>

<mosaic_0001>
module attributes {stable_mosaic.version = 11 : i64} {
  func.func @kernel(%arg0: i32, %arg1: memref<128x3xi32, #tpu.memory_space<vmem>>, %arg2: memref<195x128xbf16, #tpu.memory_space<vmem>>, %arg3: memref<195x128xbf16, #tpu.memory_space<vmem>>, %arg4: memref<1x128xf32, #tpu.memory_space<vmem>>, %arg5: memref<128x256xf32, #tpu.memory_space<vmem>>, %arg6: memref<1x256xf32, #tpu.memory_space<vmem>>, %arg7: memref<128x256xf32, #tpu.memory_space<vmem>>, %arg8: memref<1x256xf32, #tpu.memory_space<vmem>>, %arg9: memref<128x128xf32, #tpu.memory_space<vmem>>, %arg10: memref<1x128xf32, #tpu.memory_space<vmem>>, %arg11: memref<8x128xf32, #tpu.memory_space<vmem>>) attributes {dimension_semantics = [#tpu.dimension_semantics<parallel>], iteration_bounds = array<i64: 2>, scalar_prefetch = 0 : i64, scratch_operands = 0 : i64, tpu.core_type = #tpu.core_type<tc>, window_params = [{transform_indices = @transform_0, window_bounds = array<i64: 128, 3>}, {pipeline_mode = #tpu.pipeline_mode<synchronous>, transform_indices = @transform_1, window_bounds = array<i64: 195, 128>}, {pipeline_mode = #tpu.pipeline_mode<synchronous>, transform_indices = @transform_2, window_bounds = array<i64: 195, 128>}, {pipeline_mode = #tpu.pipeline_mode<synchronous>, transform_indices = @transform_3, window_bounds = array<i64: 1, 128>}, {pipeline_mode = #tpu.pipeline_mode<synchronous>, transform_indices = @transform_4, window_bounds = array<i64: 128, 256>}, {pipeline_mode = #tpu.pipeline_mode<synchronous>, transform_indices = @transform_5, window_bounds = array<i64: 1, 256>}, {pipeline_mode = #tpu.pipeline_mode<synchronous>, transform_indices = @transform_6, window_bounds = array<i64: 128, 256>}, {pipeline_mode = #tpu.pipeline_mode<synchronous>, transform_indices = @transform_7, window_bounds = array<i64: 1, 256>}, {pipeline_mode = #tpu.pipeline_mode<synchronous>, transform_indices = @transform_8, window_bounds = array<i64: 128, 128>}, {pipeline_mode = #tpu.pipeline_mode<synchronous>, transform_indices = @transform_9, window_bounds = array<i64: 1, 128>}, {transform_indices = @transform_10, window_bounds = array<i64: 8, 128>}]} {
    %c0 = arith.constant 0 : index
    %c0_0 = arith.constant 0 : index
    %0 = vector.load %arg1[%c0, %c0_0] : memref<128x3xi32, #tpu.memory_space<vmem>>, vector<128x3xi32>
    %1 = tpu.iota {dimensions = array<i32: 1>} : vector<128x195xi32>
    %2 = vector.extract_strided_slice %0 {offsets = [0, 0], sizes = [128, 1], strides = [1, 1]} : vector<128x3xi32> to vector<128x1xi32>
    %3 = vector.broadcast %2 : vector<128x1xi32> to vector<128x195xi32>
    %4 = arith.cmpi eq, %3, %1 : vector<128x195xi32>
    %5 = vector.extract_strided_slice %0 {offsets = [0, 1], sizes = [128, 1], strides = [1, 1]} : vector<128x3xi32> to vector<128x1xi32>
    %6 = vector.broadcast %5 : vector<128x1xi32> to vector<128x195xi32>
    %7 = arith.cmpi eq, %6, %1 : vector<128x195xi32>
    %8 = arith.ori %4, %7 : vector<128x195xi1>
    %9 = vector.extract_strided_slice %0 {offsets = [0, 2], sizes = [128, 1], strides = [1, 1]} : vector<128x3xi32> to vector<128x1xi32>
    %10 = vector.broadcast %9 : vector<128x1xi32> to vector<128x195xi32>
    %11 = arith.cmpi eq, %10, %1 : vector<128x195xi32>
    %12 = arith.ori %8, %11 : vector<128x195xi1>
    %13 = arith.extui %12 : vector<128x195xi1> to vector<128x195xi32>
    %14 = arith.sitofp %13 : vector<128x195xi32> to vector<128x195xf32>
    %15 = arith.truncf %14 : vector<128x195xf32> to vector<128x195xbf16>
    %c0_1 = arith.constant 0 : index
    %c0_2 = arith.constant 0 : index
    %16 = vector.load %arg2[%c0_1, %c0_2] : memref<195x128xbf16, #tpu.memory_space<vmem>>, vector<195x128xbf16>
    %cst = arith.constant dense<0.000000e+00> : vector<128x128xf32>
    %17 = tpu.matmul %15, %16, %cst {dimension_numbers = #tpu.dot_dimension_numbers<[1], [0], [0], [1], [0, 0, 1, 1], [], []>} : vector<128x195xbf16>, vector<195x128xbf16>, vector<128x128xf32> -> vector<128x128xf32>
    %c0_3 = arith.constant 0 : index
    %c0_4 = arith.constant 0 : index
    %18 = vector.load %arg3[%c0_3, %c0_4] : memref<195x128xbf16, #tpu.memory_space<vmem>>, vector<195x128xbf16>
    %cst_5 = arith.constant dense<0.000000e+00> : vector<128x128xf32>
    %19 = tpu.matmul %15, %18, %cst_5 {dimension_numbers = #tpu.dot_dimension_numbers<[1], [0], [0], [1], [0, 0, 1, 1], [], []>} : vector<128x195xbf16>, vector<195x128xbf16>, vector<128x128xf32> -> vector<128x128xf32>
    %20 = arith.addf %17, %19 : vector<128x128xf32>
    %21 = vector.shape_cast %20 : vector<128x128xf32> to vector<8x16x128xf32>
    %cst_6 = arith.constant dense<0xFF800000> : vector<8x128xf32>
    %22 = vector.multi_reduction <maximumf>, %21, %cst_6 [1] : vector<8x16x128xf32> to vector<8x128xf32>
    %c0_7 = arith.constant 0 : index
    %c0_8 = arith.constant 0 : index
    %23 = vector.load %arg4[%c0_7, %c0_8] : memref<1x128xf32, #tpu.memory_space<vmem>>, vector<1x128xf32>
    %24 = vector.broadcast %23 : vector<1x128xf32> to vector<8x128xf32>
    %25 = arith.addf %22, %24 : vector<8x128xf32>
    %cst_9 = arith.constant 0.000000e+00 : f32
    %26 = vector.broadcast %cst_9 : f32 to vector<8x128xf32>
    %27 = arith.maximumf %25, %26 : vector<8x128xf32>
    %c0_10 = arith.constant 0 : index
    %c0_11 = arith.constant 0 : index
    %28 = vector.load %arg5[%c0_10, %c0_11] : memref<128x256xf32, #tpu.memory_space<vmem>>, vector<128x256xf32>
    %cst_12 = arith.constant dense<0.000000e+00> : vector<8x256xf32>
    %29 = tpu.matmul %27, %28, %cst_12 {dimension_numbers = #tpu.dot_dimension_numbers<[1], [0], [0], [1], [0, 0, 1, 1], [], []>} : vector<8x128xf32>, vector<128x256xf32>, vector<8x256xf32> -> vector<8x256xf32>
    %c0_13 = arith.constant 0 : index
    %c0_14 = arith.constant 0 : index
    %30 = vector.load %arg6[%c0_13, %c0_14] : memref<1x256xf32, #tpu.memory_space<vmem>>, vector<1x256xf32>
    %31 = vector.broadcast %30 : vector<1x256xf32> to vector<8x256xf32>
    %32 = arith.addf %29, %31 : vector<8x256xf32>
    %33 = vector.extract_strided_slice %32 {offsets = [0, 0], sizes = [8, 128], strides = [1, 1]} : vector<8x256xf32> to vector<8x128xf32>
    %cst_15 = arith.constant 0.000000e+00 : f32
    %34 = vector.broadcast %cst_15 : f32 to vector<8x128xf32>
    %35 = arith.maximumf %33, %34 : vector<8x128xf32>
    %36 = vector.extract_strided_slice %32 {offsets = [0, 128], sizes = [8, 128], strides = [1, 1]} : vector<8x256xf32> to vector<8x128xf32>
    %37 = arith.negf %36 : vector<8x128xf32>
    %38 = math.exp %37 : vector<8x128xf32>
    %cst_16 = arith.constant 1.000000e+00 : f32
    %39 = vector.broadcast %cst_16 : f32 to vector<8x128xf32>
    %40 = arith.addf %39, %38 : vector<8x128xf32>
    %41 = arith.divf %39, %40 : vector<8x128xf32>
    %42 = arith.mulf %41, %27 : vector<8x128xf32>
    %cst_17 = arith.constant 1.000000e+00 : f32
    %43 = vector.broadcast %cst_17 : f32 to vector<8x128xf32>
    %44 = arith.subf %43, %41 : vector<8x128xf32>
    %45 = arith.mulf %44, %35 : vector<8x128xf32>
    %46 = arith.addf %42, %45 : vector<8x128xf32>
    %c0_18 = arith.constant 0 : index
    %c0_19 = arith.constant 0 : index
    %47 = vector.load %arg7[%c0_18, %c0_19] : memref<128x256xf32, #tpu.memory_space<vmem>>, vector<128x256xf32>
    %cst_20 = arith.constant dense<0.000000e+00> : vector<8x256xf32>
    %48 = tpu.matmul %46, %47, %cst_20 {dimension_numbers = #tpu.dot_dimension_numbers<[1], [0], [0], [1], [0, 0, 1, 1], [], []>} : vector<8x128xf32>, vector<128x256xf32>, vector<8x256xf32> -> vector<8x256xf32>
    %c0_21 = arith.constant 0 : index
    %c0_22 = arith.constant 0 : index
    %49 = vector.load %arg8[%c0_21, %c0_22] : memref<1x256xf32, #tpu.memory_space<vmem>>, vector<1x256xf32>
    %50 = vector.broadcast %49 : vector<1x256xf32> to vector<8x256xf32>
    %51 = arith.addf %48, %50 : vector<8x256xf32>
    %52 = vector.extract_strided_slice %51 {offsets = [0, 0], sizes = [8, 128], strides = [1, 1]} : vector<8x256xf32> to vector<8x128xf32>
    %cst_23 = arith.constant 0.000000e+00 : f32
    %53 = vector.broadcast %cst_23 : f32 to vector<8x128xf32>
    %54 = arith.maximumf %52, %53 : vector<8x128xf32>
    %55 = vector.extract_strided_slice %51 {offsets = [0, 128], sizes = [8, 128], strides = [1, 1]} : vector<8x256xf32> to vector<8x128xf32>
    %56 = arith.negf %55 : vector<8x128xf32>
    %57 = math.exp %56 : vector<8x128xf32>
    %cst_24 = arith.constant 1.000000e+00 : f32
    %58 = vector.broadcast %cst_24 : f32 to vector<8x128xf32>
    %59 = arith.addf %58, %57 : vector<8x128xf32>
    %60 = arith.divf %58, %59 : vector<8x128xf32>
    %61 = arith.mulf %60, %46 : vector<8x128xf32>
    %cst_25 = arith.constant 1.000000e+00 : f32
    %62 = vector.broadcast %cst_25 : f32 to vector<8x128xf32>
    %63 = arith.subf %62, %60 : vector<8x128xf32>
    %64 = arith.mulf %63, %54 : vector<8x128xf32>
    %65 = arith.addf %61, %64 : vector<8x128xf32>
    %c0_26 = arith.constant 0 : index
    %c0_27 = arith.constant 0 : index
    %66 = vector.load %arg9[%c0_26, %c0_27] : memref<128x128xf32, #tpu.memory_space<vmem>>, vector<128x128xf32>
    %cst_28 = arith.constant dense<0.000000e+00> : vector<8x128xf32>
    %67 = tpu.matmul %65, %66, %cst_28 {dimension_numbers = #tpu.dot_dimension_numbers<[1], [0], [0], [1], [0, 0, 1, 1], [], []>} : vector<8x128xf32>, vector<128x128xf32>, vector<8x128xf32> -> vector<8x128xf32>
    %c0_29 = arith.constant 0 : index
    %c0_30 = arith.constant 0 : index
    %68 = vector.load %arg10[%c0_29, %c0_30] : memref<1x128xf32, #tpu.memory_space<vmem>>, vector<1x128xf32>
    %69 = vector.broadcast %68 : vector<1x128xf32> to vector<8x128xf32>
    %70 = arith.addf %67, %69 : vector<8x128xf32>
    %c0_31 = arith.constant 0 : index
    %c0_32 = arith.constant 0 : index
    %71 = vector.load %arg11[%c0_31, %c0_32] : memref<8x128xf32, #tpu.memory_space<vmem>>, vector<8x128xf32>
    tpu.vector_store %arg11[%c0_31, %c0_32], %70 {strides = array<i32>} : memref<8x128xf32, #tpu.memory_space<vmem>>, vector<8x128xf32>,
    return
  }
  func.func @transform_0(%arg0: i32) -> (i32, i32) {
    %c0_i32 = arith.constant 0 : i32
    %c0_i32_0 = arith.constant 0 : i32
    return %arg0, %c0_i32 : i32, i32
  }
  func.func @transform_1(%arg0: i32) -> (i32, i32) {
    %c0_i32 = arith.constant 0 : i32
    %c0_i32_0 = arith.constant 0 : i32
    %c0_i32_1 = arith.constant 0 : i32
    return %c0_i32, %c0_i32_0 : i32, i32
  }
  func.func @transform_2(%arg0: i32) -> (i32, i32) {
    %c0_i32 = arith.constant 0 : i32
    %c0_i32_0 = arith.constant 0 : i32
    %c0_i32_1 = arith.constant 0 : i32
    return %c0_i32, %c0_i32_0 : i32, i32
  }
  func.func @transform_3(%arg0: i32) -> (i32, i32) {
    %c0_i32 = arith.constant 0 : i32
    %c0_i32_0 = arith.constant 0 : i32
    %c0_i32_1 = arith.constant 0 : i32
    return %c0_i32, %c0_i32_0 : i32, i32
  }
  func.func @transform_4(%arg0: i32) -> (i32, i32) {
    %c0_i32 = arith.constant 0 : i32
    %c0_i32_0 = arith.constant 0 : i32
    %c0_i32_1 = arith.constant 0 : i32
    return %c0_i32, %c0_i32_0 : i32, i32
  }
  func.func @transform_5(%arg0: i32) -> (i32, i32) {
    %c0_i32 = arith.constant 0 : i32
    %c0_i32_0 = arith.constant 0 : i32
    %c0_i32_1 = arith.constant 0 : i32
    return %c0_i32, %c0_i32_0 : i32, i32
  }
  func.func @transform_6(%arg0: i32) -> (i32, i32) {
    %c0_i32 = arith.constant 0 : i32
    %c0_i32_0 = arith.constant 0 : i32
    %c0_i32_1 = arith.constant 0 : i32
    return %c0_i32, %c0_i32_0 : i32, i32
  }
  func.func @transform_7(%arg0: i32) -> (i32, i32) {
    %c0_i32 = arith.constant 0 : i32
    %c0_i32_0 = arith.constant 0 : i32
    %c0_i32_1 = arith.constant 0 : i32
    return %c0_i32, %c0_i32_0 : i32, i32
  }
  func.func @transform_8(%arg0: i32) -> (i32, i32) {
    %c0_i32 = arith.constant 0 : i32
    %c0_i32_0 = arith.constant 0 : i32
    %c0_i32_1 = arith.constant 0 : i32
    return %c0_i32, %c0_i32_0 : i32, i32
  }
  func.func @transform_9(%arg0: i32) -> (i32, i32) {
    %c0_i32 = arith.constant 0 : i32
    %c0_i32_0 = arith.constant 0 : i32
    %c0_i32_1 = arith.constant 0 : i32
    return %c0_i32, %c0_i32_0 : i32, i32
  }
  func.func @transform_10(%arg0: i32) -> (i32, i32) {
    %c0_i32 = arith.constant 0 : i32
    %c0_i32_0 = arith.constant 0 : i32
    return %arg0, %c0_i32 : i32, i32
  }
}

module attributes {stable_mosaic.version = 11 : i64} {
  func.func @kernel(%arg0: i32, %arg1: memref<128x3xi32, #tpu.memory_space<vmem>>, %arg2: memref<195x128xbf16, #tpu.memory_space<vmem>>, %arg3: memref<195x128xbf16, #tpu.memory_space<vmem>>, %arg4: memref<1x128xf32, #tpu.memory_space<vmem>>, %arg5: memref<128x256xf32, #tpu.memory_space<vmem>>, %arg6: memref<1x256xf32, #tpu.memory_space<vmem>>, %arg7: memref<128x256xf32, #tpu.memory_space<vmem>>, %arg8: memref<1x256xf32, #tpu.memory_space<vmem>>, %arg9: memref<128x128xf32, #tpu.memory_space<vmem>>, %arg10: memref<1x128xf32, #tpu.memory_space<vmem>>, %arg11: memref<8x128xf32, #tpu.memory_space<vmem>>) attributes {dimension_semantics = [#tpu.dimension_semantics<parallel>], iteration_bounds = array<i64: 2>, scalar_prefetch = 0 : i64, scratch_operands = 0 : i64, tpu.core_type = #tpu.core_type<tc>, window_params = [{transform_indices = @transform_0, window_bounds = array<i64: 128, 3>}, {pipeline_mode = #tpu.pipeline_mode<synchronous>, transform_indices = @transform_1, window_bounds = array<i64: 195, 128>}, {pipeline_mode = #tpu.pipeline_mode<synchronous>, transform_indices = @transform_2, window_bounds = array<i64: 195, 128>}, {pipeline_mode = #tpu.pipeline_mode<synchronous>, transform_indices = @transform_3, window_bounds = array<i64: 1, 128>}, {pipeline_mode = #tpu.pipeline_mode<synchronous>, transform_indices = @transform_4, window_bounds = array<i64: 128, 256>}, {pipeline_mode = #tpu.pipeline_mode<synchronous>, transform_indices = @transform_5, window_bounds = array<i64: 1, 256>}, {pipeline_mode = #tpu.pipeline_mode<synchronous>, transform_indices = @transform_6, window_bounds = array<i64: 128, 256>}, {pipeline_mode = #tpu.pipeline_mode<synchronous>, transform_indices = @transform_7, window_bounds = array<i64: 1, 256>}, {pipeline_mode = #tpu.pipeline_mode<synchronous>, transform_indices = @transform_8, window_bounds = array<i64: 128, 128>}, {pipeline_mode = #tpu.pipeline_mode<synchronous>, transform_indices = @transform_9, window_bounds = array<i64: 1, 128>}, {transform_indices = @transform_10, window_bounds = array<i64: 8, 128>}]} {
    %c0 = arith.constant 0 : index
    %c0_0 = arith.constant 0 : index
    %0 = vector.load %arg1[%c0, %c0_0] : memref<128x3xi32, #tpu.memory_space<vmem>>, vector<128x3xi32>
    %1 = tpu.iota {dimensions = array<i32: 1>} : vector<128x195xi32>
    %2 = vector.extract_strided_slice %0 {offsets = [0, 0], sizes = [128, 1], strides = [1, 1]} : vector<128x3xi32> to vector<128x1xi32>
    %3 = vector.broadcast %2 : vector<128x1xi32> to vector<128x195xi32>
    %4 = arith.cmpi eq, %3, %1 : vector<128x195xi32>
    %5 = vector.extract_strided_slice %0 {offsets = [0, 1], sizes = [128, 1], strides = [1, 1]} : vector<128x3xi32> to vector<128x1xi32>
    %6 = vector.broadcast %5 : vector<128x1xi32> to vector<128x195xi32>
    %7 = arith.cmpi eq, %6, %1 : vector<128x195xi32>
    %8 = arith.ori %4, %7 : vector<128x195xi1>
    %9 = vector.extract_strided_slice %0 {offsets = [0, 2], sizes = [128, 1], strides = [1, 1]} : vector<128x3xi32> to vector<128x1xi32>
    %10 = vector.broadcast %9 : vector<128x1xi32> to vector<128x195xi32>
    %11 = arith.cmpi eq, %10, %1 : vector<128x195xi32>
    %12 = arith.ori %8, %11 : vector<128x195xi1>
    %13 = arith.extui %12 : vector<128x195xi1> to vector<128x195xi32>
    %14 = arith.sitofp %13 : vector<128x195xi32> to vector<128x195xf32>
    %15 = arith.truncf %14 : vector<128x195xf32> to vector<128x195xbf16>
    %c0_1 = arith.constant 0 : index
    %c0_2 = arith.constant 0 : index
    %16 = vector.load %arg2[%c0_1, %c0_2] : memref<195x128xbf16, #tpu.memory_space<vmem>>, vector<195x128xbf16>
    %cst = arith.constant dense<0.000000e+00> : vector<128x128xf32>
    %17 = tpu.matmul %15, %16, %cst {dimension_numbers = #tpu.dot_dimension_numbers<[1], [0], [0], [1], [0, 0, 1, 1], [], []>} : vector<128x195xbf16>, vector<195x128xbf16>, vector<128x128xf32> -> vector<128x128xf32>
    %c0_3 = arith.constant 0 : index
    %c0_4 = arith.constant 0 : index
    %18 = vector.load %arg3[%c0_3, %c0_4] : memref<195x128xbf16, #tpu.memory_space<vmem>>, vector<195x128xbf16>
    %cst_5 = arith.constant dense<0.000000e+00> : vector<128x128xf32>
    %19 = tpu.matmul %15, %18, %cst_5 {dimension_numbers = #tpu.dot_dimension_numbers<[1], [0], [0], [1], [0, 0, 1, 1], [], []>} : vector<128x195xbf16>, vector<195x128xbf16>, vector<128x128xf32> -> vector<128x128xf32>
    %20 = arith.addf %17, %19 : vector<128x128xf32>
    %21 = vector.shape_cast %20 : vector<128x128xf32> to vector<8x16x128xf32>
    %cst_6 = arith.constant dense<0xFF800000> : vector<8x128xf32>
    %22 = vector.multi_reduction <maximumf>, %21, %cst_6 [1] : vector<8x16x128xf32> to vector<8x128xf32>
    %c0_7 = arith.constant 0 : index
    %c0_8 = arith.constant 0 : index
    %23 = vector.load %arg4[%c0_7, %c0_8] : memref<1x128xf32, #tpu.memory_space<vmem>>, vector<1x128xf32>
    %24 = vector.broadcast %23 : vector<1x128xf32> to vector<8x128xf32>
    %25 = arith.addf %22, %24 : vector<8x128xf32>
    %cst_9 = arith.constant 0.000000e+00 : f32
    %26 = vector.broadcast %cst_9 : f32 to vector<8x128xf32>
    %27 = arith.maximumf %25, %26 : vector<8x128xf32>
    %c0_10 = arith.constant 0 : index
    %c0_11 = arith.constant 0 : index
    %28 = vector.load %arg5[%c0_10, %c0_11] : memref<128x256xf32, #tpu.memory_space<vmem>>, vector<128x256xf32>
    %cst_12 = arith.constant dense<0.000000e+00> : vector<8x256xf32>
    %29 = tpu.matmul %27, %28, %cst_12 {dimension_numbers = #tpu.dot_dimension_numbers<[1], [0], [0], [1], [0, 0, 1, 1], [], []>} : vector<8x128xf32>, vector<128x256xf32>, vector<8x256xf32> -> vector<8x256xf32>
    %c0_13 = arith.constant 0 : index
    %c0_14 = arith.constant 0 : index
    %30 = vector.load %arg6[%c0_13, %c0_14] : memref<1x256xf32, #tpu.memory_space<vmem>>, vector<1x256xf32>
    %31 = vector.broadcast %30 : vector<1x256xf32> to vector<8x256xf32>
    %32 = arith.addf %29, %31 : vector<8x256xf32>
    %33 = vector.extract_strided_slice %32 {offsets = [0, 0], sizes = [8, 128], strides = [1, 1]} : vector<8x256xf32> to vector<8x128xf32>
    %cst_15 = arith.constant 0.000000e+00 : f32
    %34 = vector.broadcast %cst_15 : f32 to vector<8x128xf32>
    %35 = arith.maximumf %33, %34 : vector<8x128xf32>
    %36 = vector.extract_strided_slice %32 {offsets = [0, 128], sizes = [8, 128], strides = [1, 1]} : vector<8x256xf32> to vector<8x128xf32>
    %37 = arith.negf %36 : vector<8x128xf32>
    %38 = math.exp %37 : vector<8x128xf32>
    %cst_16 = arith.constant 1.000000e+00 : f32
    %39 = vector.broadcast %cst_16 : f32 to vector<8x128xf32>
    %40 = arith.addf %39, %38 : vector<8x128xf32>
    %41 = arith.divf %39, %40 : vector<8x128xf32>
    %42 = arith.mulf %41, %27 : vector<8x128xf32>
    %cst_17 = arith.constant 1.000000e+00 : f32
    %43 = vector.broadcast %cst_17 : f32 to vector<8x128xf32>
    %44 = arith.subf %43, %41 : vector<8x128xf32>
    %45 = arith.mulf %44, %35 : vector<8x128xf32>
    %46 = arith.addf %42, %45 : vector<8x128xf32>
    %c0_18 = arith.constant 0 : index
    %c0_19 = arith.constant 0 : index
    %47 = vector.load %arg7[%c0_18, %c0_19] : memref<128x256xf32, #tpu.memory_space<vmem>>, vector<128x256xf32>
    %cst_20 = arith.constant dense<0.000000e+00> : vector<8x256xf32>
    %48 = tpu.matmul %46, %47, %cst_20 {dimension_numbers = #tpu.dot_dimension_numbers<[1], [0], [0], [1], [0, 0, 1, 1], [], []>} : vector<8x128xf32>, vector<128x256xf32>, vector<8x256xf32> -> vector<8x256xf32>
    %c0_21 = arith.constant 0 : index
    %c0_22 = arith.constant 0 : index
    %49 = vector.load %arg8[%c0_21, %c0_22] : memref<1x256xf32, #tpu.memory_space<vmem>>, vector<1x256xf32>
    %50 = vector.broadcast %49 : vector<1x256xf32> to vector<8x256xf32>
    %51 = arith.addf %48, %50 : vector<8x256xf32>
    %52 = vector.extract_strided_slice %51 {offsets = [0, 0], sizes = [8, 128], strides = [1, 1]} : vector<8x256xf32> to vector<8x128xf32>
    %cst_23 = arith.constant 0.000000e+00 : f32
    %53 = vector.broadcast %cst_23 : f32 to vector<8x128xf32>
    %54 = arith.maximumf %52, %53 : vector<8x128xf32>
    %55 = vector.extract_strided_slice %51 {offsets = [0, 128], sizes = [8, 128], strides = [1, 1]} : vector<8x256xf32> to vector<8x128xf32>
    %56 = arith.negf %55 : vector<8x128xf32>
    %57 = math.exp %56 : vector<8x128xf32>
    %cst_24 = arith.constant 1.000000e+00 : f32
    %58 = vector.broadcast %cst_24 : f32 to vector<8x128xf32>
    %59 = arith.addf %58, %57 : vector<8x128xf32>
    %60 = arith.divf %58, %59 : vector<8x128xf32>
    %61 = arith.mulf %60, %46 : vector<8x128xf32>
    %cst_25 = arith.constant 1.000000e+00 : f32
    %62 = vector.broadcast %cst_25 : f32 to vector<8x128xf32>
    %63 = arith.subf %62, %60 : vector<8x128xf32>
    %64 = arith.mulf %63, %54 : vector<8x128xf32>
    %65 = arith.addf %61, %64 : vector<8x128xf32>
    %c0_26 = arith.constant 0 : index
    %c0_27 = arith.constant 0 : index
    %66 = vector.load %arg9[%c0_26, %c0_27] : memref<128x128xf32, #tpu.memory_space<vmem>>, vector<128x128xf32>
    %cst_28 = arith.constant dense<0.000000e+00> : vector<8x128xf32>
    %67 = tpu.matmul %65, %66, %cst_28 {dimension_numbers = #tpu.dot_dimension_numbers<[1], [0], [0], [1], [0, 0, 1, 1], [], []>} : vector<8x128xf32>, vector<128x128xf32>, vector<8x128xf32> -> vector<8x128xf32>
    %c0_29 = arith.constant 0 : index
    %c0_30 = arith.constant 0 : index
    %68 = vector.load %arg10[%c0_29, %c0_30] : memref<1x128xf32, #tpu.memory_space<vmem>>, vector<1x128xf32>
    %69 = vector.broadcast %68 : vector<1x128xf32> to vector<8x128xf32>
    %70 = arith.addf %67, %69 : vector<8x128xf32>
    %c0_31 = arith.constant 0 : index
    %c0_32 = arith.constant 0 : index
    %71 = vector.load %arg11[%c0_31, %c0_32] : memref<8x128xf32, #tpu.memory_space<vmem>>, vector<8x128xf32>
    tpu.vector_store %arg11[%c0_31, %c0_32], %70 {strides = array<i32>} : memref<8x128xf32, #tpu.memory_space<vmem>>, vector<8x128xf32>,
    return
  }
  func.func @transform_0(%arg0: i32) -> (i32, i32) {
    %c0_i32 = arith.constant 0 : i32
    %c0_i32_0 = arith.constant 0 : i32
    return %arg0, %c0_i32 : i32, i32
  }
  func.func @transform_1(%arg0: i32) -> (i32, i32) {
    %c0_i32 = arith.constant 0 : i32
    %c0_i32_0 = arith.constant 0 : i32
    %c0_i32_1 = arith.constant 0 : i32
    return %c0_i32, %c0_i32_0 : i32, i32
  }
  func.func @transform_2(%arg0: i32) -> (i32, i32) {
    %c0_i32 = arith.constant 0 : i32
    %c0_i32_0 = arith.constant 0 : i32
    %c0_i32_1 = arith.constant 0 : i32
    return %c0_i32, %c0_i32_0 : i32, i32
  }
  func.func @transform_3(%arg0: i32) -> (i32, i32) {
    %c0_i32 = arith.constant 0 : i32
    %c0_i32_0 = arith.constant 0 : i32
    %c0_i32_1 = arith.constant 0 : i32
    return %c0_i32, %c0_i32_0 : i32, i32
  }
  func.func @transform_4(%arg0: i32) -> (i32, i32) {
    %c0_i32 = arith.constant 0 : i32
    %c0_i32_0 = arith.constant 0 : i32
    %c0_i32_1 = arith.constant 0 : i32
    return %c0_i32, %c0_i32_0 : i32, i32
  }
  func.func @transform_5(%arg0: i32) -> (i32, i32) {
    %c0_i32 = arith.constant 0 : i32
    %c0_i32_0 = arith.constant 0 : i32
    %c0_i32_1 = arith.constant 0 : i32
    return %c0_i32, %c0_i32_0 : i32, i32
  }
  func.func @transform_6(%arg0: i32) -> (i32, i32) {
    %c0_i32 = arith.constant 0 : i32
    %c0_i32_0 = arith.constant 0 : i32
    %c0_i32_1 = arith.constant 0 : i32
    return %c0_i32, %c0_i32_0 : i32, i32
  }
  func.func @transform_7(%arg0: i32) -> (i32, i32) {
    %c0_i32 = arith.constant 0 : i32
    %c0_i32_0 = arith.constant 0 : i32
    %c0_i32_1 = arith.constant 0 : i32
    return %c0_i32, %c0_i32_0 : i32, i32
  }
  func.func @transform_8(%arg0: i32) -> (i32, i32) {
    %c0_i32 = arith.constant 0 : i32
    %c0_i32_0 = arith.constant 0 : i32
    %c0_i32_1 = arith.constant 0 : i32
    return %c0_i32, %c0_i32_0 : i32, i32
  }
  func.func @transform_9(%arg0: i32) -> (i32, i32) {
    %c0_i32 = arith.constant 0 : i32
    %c0_i32_0 = arith.constant 0 : i32
    %c0_i32_1 = arith.constant 0 : i32
    return %c0_i32, %c0_i32_0 : i32, i32
  }
  func.func @transform_10(%arg0: i32) -> (i32, i32) {
    %c0_i32 = arith.constant 0 : i32
    %c0_i32_0 = arith.constant 0 : i32
    return %arg0, %c0_i32 : i32, i32
  }
}

</mosaic_0001>

<llo_original>
// kernel: tpu_custom_call.1
$region0: #{tpu_custom_call.1}
  #allocation0 [shape = 'u32[]', space=smem, size = 0x4, offset = 0x4, fixed_abs, tag = 'smem constant byte address 0x4 - core index']
  #allocation1 [shape = 'u32[144,128]{1,0:T(1,128)}', space=vmem, size = 0x12000, scoped, tag = 'internal scratch']
  %s0 = inlined_call_operand.vmem [shape: s32[256,3], index: 0, kind: input, shape index: {}]
  %s1 = inlined_call_operand.hbm [shape: bf16[195,128], index: 1, kind: input, shape index: {}]
  %s2 = inlined_call_operand.hbm [shape: bf16[195,128], index: 2, kind: input, shape index: {}]
  %s3 = inlined_call_operand.vmem [shape: f32[1,128], index: 3, kind: input, shape index: {}]
  %s4 = inlined_call_operand.vmem [shape: f32[128,256], index: 4, kind: input, shape index: {}]
  %s5 = inlined_call_operand.vmem [shape: f32[1,256], index: 5, kind: input, shape index: {}]
  %s6 = inlined_call_operand.hbm [shape: f32[128,256], index: 6, kind: input, shape index: {}]
  %s7 = inlined_call_operand.vmem [shape: f32[1,256], index: 7, kind: input, shape index: {}]
  %s8 = inlined_call_operand.hbm [shape: f32[128,128], index: 8, kind: input, shape index: {}]
  %s9 = inlined_call_operand.vmem [shape: f32[1,128], index: 9, kind: input, shape index: {}]
  %s10 = inlined_call_operand.hbm [shape: f32[16,128], index: 10, kind: output, shape index: {}]
  %s11 = sld [smem:[#allocation0]]
  $region89: #{tpu_custom_call.1} parent=0
    _
  %s13 = ssub.s32 1, %s11
  %s14 = scalar_select 0, %s13, %s11
  $region1: #{tpu_custom_call.1} parent=0
    #allocation2 [shape = 'u8[51200]{0}', space=vmem, size = 0xc800, scoped, tag = 'input window, operand 1, single buffered']
    #allocation3 [shape = 's32[2]{0}', space=sflag, size = 0x8, scoped, tag = 'scoped memory for tpu_custom_call.1']
    #allocation4 [shape = 's32[2]{0}', space=sflag, size = 0x8, scoped, tag = 'scoped memory for tpu_custom_call.1']
    #allocation5 [shape = 'u8[51200]{0}', space=vmem, size = 0xc800, scoped, tag = 'input window, operand 2, single buffered']
    #allocation6 [shape = 's32[1]{0}', space=sflag, size = 0x4, scoped, tag = 'scoped memory for tpu_custom_call.1']
    #allocation7 [shape = 'u8[131072]{0}', space=vmem, size = 0x20000, scoped, tag = 'input window, operand 6, single buffered']
    #allocation8 [shape = 'u8[65536]{0}', space=vmem, size = 0x10000, scoped, tag = 'input window, operand 8, single buffered']
    #allocation9 [shape = 's32[1]{0}', space=sflag, size = 0x4, scoped, tag = 'scoped memory for tpu_custom_call.1']
    #allocation10 [shape = 'u8[8192]{0}', space=vmem, size = 0x2000, scoped, tag = 'output window, operand 0']
    %15 = vsyncpa [#allocation3], 0
    %16 = vsyncpa [#allocation6], 0
    %17 = vsyncpa [#allocation9], 0
    %18 = vsyncpa [#allocation4], 0
    %s19 = scalar_lea.sflag [#allocation4], 1
    %20 = vsyncpa %s19, 0
    loop: start=0, step=1, limit=4
    $region2: #{tpu_custom_call.1} parent=1 // loop_pre_header
      _
    $region3: #{tpu_custom_call.1} parent=1 // loop_header
      %s22 = sphi 0, %s26
      %p23 = scmp.ge.s32.totalorder %s22, 4
      %s32 = sphi 0, %s34
      %s35 = sphi 0, %s32
      %s36 = sphi 0, %s35
      %s52 = sphi 0, %s36
      %s56 = sphi 0, %s56
      %s58 = sphi 0, %s56
      %s59 = sphi 0, %s58
      %s73 = sphi 0, %s59
      %s77 = sphi 0, %s77
      %s79 = sphi 0, %s77
      %s80 = sphi 0, %s79
      %s94 = sphi 0, %s80
      %s98 = sphi 0, %s98
      %s100 = sphi 0, %s98
      %s101 = sphi 0, %s100
      %s115 = sphi 0, %s101
      %s119 = sphi 0, %s119
      %s121 = sphi 0, %s119
      %s122 = sphi 0, %s121
      %s136 = sphi 0, %s122
      %s140 = sphi 0, %s140
      %s142 = sphi 0, %s140
      %s143 = sphi 0, %s142
      %s157 = sphi 0, %s143
      %s161 = sphi 0, %s161
      %s163 = sphi 0, %s161
      %s164 = sphi 0, %s163
      %s178 = sphi 0, %s164
      %s182 = sphi 0, %s182
      %s184 = sphi 0, %s182
      %s185 = sphi 0, %s184
      %s199 = sphi 0, %s185
      %s203 = sphi 0, %s203
      %s205 = sphi 0, %s203
      %s206 = sphi 0, %s205
      %s220 = sphi 0, %s206
      %s224 = sphi 0, %s224
      %s226 = sphi 0, %s224
      %s227 = sphi 0, %s226
      %s241 = sphi 0, %s227
      %s247 = sphi 0, %s249
      %s250 = sphi 0, %s247
      %s251 = sphi 0, %s250
      %s267 = sphi 0, %s251
    $region4: #{tpu_custom_call.1} parent=1 // loop_header_branch
      %25 = sbr.rel (%p23) target = $region8
    $region5: #{tpu_custom_call.1} parent=1 // loop_body
      %s27 = ssub.s32 %s22, 1
      %s28 = ssub.s32 %s22, 2
      %s29 = sadd.s32 %s22, 1
      %s30 = ssub.s32 %s22, %s29
      %p31 = scmp.eq.s32.totalorder %s30, 0
      %s33 = sadd.s32 %s32, 1
      %s34 = scalar_select %p31, %s32, %s33
      %p37 = pneg %p31
      %p38 = scmp.eq.s32.totalorder %s22, 1
      %p39 = por %p37, %p38
      %p40 = scmp.ne.s32.totalorder %s32, %s35
      %p41 = scmp.eq.s32.totalorder %s22, 0
      %p42 = por %p40, %p41
      %p43 = scmp.ne.s32.totalorder %s32, %s35
      %p44 = scmp.eq.s32.totalorder %s27, 1
      %p45 = por %p43, %p44
      %p46 = scmp.ne.s32.totalorder %s35, %s36
      %p47 = scmp.eq.s32.totalorder %s27, 0
      %p48 = por %p46, %p47
      %p49 = scmp.ne.s32.totalorder %s35, %s36
      %p50 = scmp.eq.s32.totalorder %s28, 1
      %p51 = por %p49, %p50
      %p53 = scmp.ne.s32.totalorder %s36, %s52
      %p54 = scmp.eq.s32.totalorder %s28, 0
      %p55 = por %p53, %p54
      %s57 = sadd.s32 %s56, 1
      %p60 = scmp.eq.s32.totalorder %s22, 1
      %p61 = scmp.ne.s32.totalorder %s56, %s58
      %p62 = scmp.eq.s32.totalorder %s22, 0
      %p63 = por %p61, %p62
      %p64 = scmp.ne.s32.totalorder %s56, %s58
      %p65 = scmp.eq.s32.totalorder %s27, 1
      %p66 = por %p64, %p65
      %p67 = scmp.ne.s32.totalorder %s58, %s59
      %p68 = scmp.eq.s32.totalorder %s27, 0
      %p69 = por %p67, %p68
      %p70 = scmp.ne.s32.totalorder %s58, %s59
      %p71 = scmp.eq.s32.totalorder %s28, 1
      %p72 = por %p70, %p71
      %p74 = scmp.ne.s32.totalorder %s59, %s73
      %p75 = scmp.eq.s32.totalorder %s28, 0
      %p76 = por %p74, %p75
      %s78 = sadd.s32 %s77, 1
      %p81 = scmp.eq.s32.totalorder %s22, 1
      %p82 = scmp.ne.s32.totalorder %s77, %s79
      %p83 = scmp.eq.s32.totalorder %s22, 0
      %p84 = por %p82, %p83
      %p85 = scmp.ne.s32.totalorder %s77, %s79
      %p86 = scmp.eq.s32.totalorder %s27, 1
      %p87 = por %p85, %p86
      %p88 = scmp.ne.s32.totalorder %s79, %s80
      %p89 = scmp.eq.s32.totalorder %s27, 0
      %p90 = por %p88, %p89
      %p91 = scmp.ne.s32.totalorder %s79, %s80
      %p92 = scmp.eq.s32.totalorder %s28, 1
      %p93 = por %p91, %p92
      %p95 = scmp.ne.s32.totalorder %s80, %s94
      %p96 = scmp.eq.s32.totalorder %s28, 0
      %p97 = por %p95, %p96
      %s99 = sadd.s32 %s98, 1
      %p102 = scmp.eq.s32.totalorder %s22, 1
      %p103 = scmp.ne.s32.totalorder %s98, %s100
      %p104 = scmp.eq.s32.totalorder %s22, 0
      %p105 = por %p103, %p104
      %p106 = scmp.ne.s32.totalorder %s98, %s100
      %p107 = scmp.eq.s32.totalorder %s27, 1
      %p108 = por %p106, %p107
      %p109 = scmp.ne.s32.totalorder %s100, %s101
      %p110 = scmp.eq.s32.totalorder %s27, 0
      %p111 = por %p109, %p110
      %p112 = scmp.ne.s32.totalorder %s100, %s101
      %p113 = scmp.eq.s32.totalorder %s28, 1
      %p114 = por %p112, %p113
      %p116 = scmp.ne.s32.totalorder %s101, %s115
      %p117 = scmp.eq.s32.totalorder %s28, 0
      %p118 = por %p116, %p117
      %s120 = sadd.s32 %s119, 1
      %p123 = scmp.eq.s32.totalorder %s22, 1
      %p124 = scmp.ne.s32.totalorder %s119, %s121
      %p125 = scmp.eq.s32.totalorder %s22, 0
      %p126 = por %p124, %p125
      %p127 = scmp.ne.s32.totalorder %s119, %s121
      %p128 = scmp.eq.s32.totalorder %s27, 1
      %p129 = por %p127, %p128
      %p130 = scmp.ne.s32.totalorder %s121, %s122
      %p131 = scmp.eq.s32.totalorder %s27, 0
      %p132 = por %p130, %p131
      %p133 = scmp.ne.s32.totalorder %s121, %s122
      %p134 = scmp.eq.s32.totalorder %s28, 1
      %p135 = por %p133, %p134
      %p137 = scmp.ne.s32.totalorder %s122, %s136
      %p138 = scmp.eq.s32.totalorder %s28, 0
      %p139 = por %p137, %p138
      %s141 = sadd.s32 %s140, 1
      %p144 = scmp.eq.s32.totalorder %s22, 1
      %p145 = scmp.ne.s32.totalorder %s140, %s142
      %p146 = scmp.eq.s32.totalorder %s22, 0
      %p147 = por %p145, %p146
      %p148 = scmp.ne.s32.totalorder %s140, %s142
      %p149 = scmp.eq.s32.totalorder %s27, 1
      %p150 = por %p148, %p149
      %p151 = scmp.ne.s32.totalorder %s142, %s143
      %p152 = scmp.eq.s32.totalorder %s27, 0
      %p153 = por %p151, %p152
      %p154 = scmp.ne.s32.totalorder %s142, %s143
      %p155 = scmp.eq.s32.totalorder %s28, 1
      %p156 = por %p154, %p155
      %p158 = scmp.ne.s32.totalorder %s143, %s157
      %p159 = scmp.eq.s32.totalorder %s28, 0
      %p160 = por %p158, %p159
      %s162 = sadd.s32 %s161, 1
      %p165 = scmp.eq.s32.totalorder %s22, 1
      %p166 = scmp.ne.s32.totalorder %s161, %s163
      %p167 = scmp.eq.s32.totalorder %s22, 0
      %p168 = por %p166, %p167
      %p169 = scmp.ne.s32.totalorder %s161, %s163
      %p170 = scmp.eq.s32.totalorder %s27, 1
      %p171 = por %p169, %p170
      %p172 = scmp.ne.s32.totalorder %s163, %s164
      %p173 = scmp.eq.s32.totalorder %s27, 0
      %p174 = por %p172, %p173
      %p175 = scmp.ne.s32.totalorder %s163, %s164
      %p176 = scmp.eq.s32.totalorder %s28, 1
      %p177 = por %p175, %p176
      %p179 = scmp.ne.s32.totalorder %s164, %s178
      %p180 = scmp.eq.s32.totalorder %s28, 0
      %p181 = por %p179, %p180
      %s183 = sadd.s32 %s182, 1
      %p186 = scmp.eq.s32.totalorder %s22, 1
      %p187 = scmp.ne.s32.totalorder %s182, %s184
      %p188 = scmp.eq.s32.totalorder %s22, 0
      %p189 = por %p187, %p188
      %p190 = scmp.ne.s32.totalorder %s182, %s184
      %p191 = scmp.eq.s32.totalorder %s27, 1
      %p192 = por %p190, %p191
      %p193 = scmp.ne.s32.totalorder %s184, %s185
      %p194 = scmp.eq.s32.totalorder %s27, 0
      %p195 = por %p193, %p194
      %p196 = scmp.ne.s32.totalorder %s184, %s185
      %p197 = scmp.eq.s32.totalorder %s28, 1
      %p198 = por %p196, %p197
      %p200 = scmp.ne.s32.totalorder %s185, %s199
      %p201 = scmp.eq.s32.totalorder %s28, 0
      %p202 = por %p200, %p201
      %s204 = sadd.s32 %s203, 1
      %p207 = scmp.eq.s32.totalorder %s22, 1
      %p208 = scmp.ne.s32.totalorder %s203, %s205
      %p209 = scmp.eq.s32.totalorder %s22, 0
      %p210 = por %p208, %p209
      %p211 = scmp.ne.s32.totalorder %s203, %s205
      %p212 = scmp.eq.s32.totalorder %s27, 1
      %p213 = por %p211, %p212
      %p214 = scmp.ne.s32.totalorder %s205, %s206
      %p215 = scmp.eq.s32.totalorder %s27, 0
      %p216 = por %p214, %p215
      %p217 = scmp.ne.s32.totalorder %s205, %s206
      %p218 = scmp.eq.s32.totalorder %s28, 1
      %p219 = por %p217, %p218
      %p221 = scmp.ne.s32.totalorder %s206, %s220
      %p222 = scmp.eq.s32.totalorder %s28, 0
      %p223 = por %p221, %p222
      %s225 = sadd.s32 %s224, 1
      %p228 = scmp.eq.s32.totalorder %s22, 1
      %p229 = scmp.ne.s32.totalorder %s224, %s226
      %p230 = scmp.eq.s32.totalorder %s22, 0
      %p231 = por %p229, %p230
      %p232 = scmp.ne.s32.totalorder %s224, %s226
      %p233 = scmp.eq.s32.totalorder %s27, 1
      %p234 = por %p232, %p233
      %p235 = scmp.ne.s32.totalorder %s226, %s227
      %p236 = scmp.eq.s32.totalorder %s27, 0
      %p237 = por %p235, %p236
      %p238 = scmp.ne.s32.totalorder %s226, %s227
      %p239 = scmp.eq.s32.totalorder %s28, 1
      %p240 = por %p238, %p239
      %p242 = scmp.ne.s32.totalorder %s227, %s241
      %p243 = scmp.eq.s32.totalorder %s28, 0
      %p244 = por %p242, %p243
      %s245 = ssub.s32 %s22, %s29
      %p246 = scmp.eq.s32.totalorder %s245, 0
      %s248 = sadd.s32 %s247, 1
      %s249 = scalar_select %p246, %s247, %s248
      %p252 = pneg %p246
      %p253 = scmp.eq.s32.totalorder %s22, 1
      %p254 = por %p252, %p253
      %p255 = scmp.ne.s32.totalorder %s247, %s250
      %p256 = scmp.eq.s32.totalorder %s22, 0
      %p257 = por %p255, %p256
      %p258 = scmp.ne.s32.totalorder %s247, %s250
      %p259 = scmp.eq.s32.totalorder %s27, 1
      %p260 = por %p258, %p259
      %p261 = scmp.ne.s32.totalorder %s250, %s251
      %p262 = scmp.eq.s32.totalorder %s27, 0
      %p263 = por %p261, %p262
      %p264 = scmp.ne.s32.totalorder %s250, %s251
      %p265 = scmp.eq.s32.totalorder %s28, 1
      %p266 = por %p264, %p265
      %p268 = scmp.ne.s32.totalorder %s251, %s267
      %p269 = scmp.eq.s32.totalorder %s28, 0
      %p270 = por %p268, %p269
      %p271 = scmp.le.s32.totalorder 1, %s22
      %p272 = scmp.lt.s32.totalorder %s22, 3
      %p273 = pnand %p271, %p272
      %p274 = pneg %p273
      // Predicated region
      $region9: #{tpu_custom_call.1} parent=5 // pred_check
        _
      $region10: #{tpu_custom_call.1} parent=5 // pred_check_branch
        %276 = sbr.rel (%p273) target = $region12
      $region11: #{tpu_custom_call.1} parent=5 // pred_region
        %s277 = ssub.s32 %s22, 1
        // Predicated region
        $region13: #{tpu_custom_call.1} parent=11 // pred_check
          %p278 = pneg %p69
        $region14: #{tpu_custom_call.1} parent=11 // pred_check_branch
          %280 = sbr.rel (%p278) target = $region16
        $region15: #{tpu_custom_call.1} parent=11 // pred_region
          %s282 = ssub.s32 1600, 1600
          %283 = vsyncadd [#allocation3], %s282
          %s284 = sshll.u32 [#allocation2], 4
          %s285 = int_to_ptr.vmem [resolvable:$true] %s284
          %290 = dma.hbm_to_vmem [thread:$0]  %s1, 1600, %s285, [#allocation3], 64, 64, 4
        $region16: #{tpu_custom_call.1} parent=11 // pred_fallthru
          _
        // Predicated region
        $region17: #{tpu_custom_call.1} parent=11 // pred_check
          %p291 = pneg %p90
        $region18: #{tpu_custom_call.1} parent=11 // pred_check_branch
          %293 = sbr.rel (%p291) target = $region20
        $region19: #{tpu_custom_call.1} parent=11 // pred_region
          %s295 = ssub.s32 1600, 1600
          %296 = vsyncadd [#allocation6], %s295
          %s297 = sshll.u32 [#allocation5], 4
          %s298 = int_to_ptr.vmem [resolvable:$true] %s297
          %303 = dma.hbm_to_vmem [thread:$0]  %s2, 1600, %s298, [#allocation6], 64, 64, 4
        $region20: #{tpu_custom_call.1} parent=11 // pred_fallthru
          _
        // Predicated region
        $region21: #{tpu_custom_call.1} parent=11 // pred_check
          %p304 = pneg %p111
        $region22: #{tpu_custom_call.1} parent=11 // pred_check_branch
          %306 = sbr.rel (%p304) target = $region24
        $region23: #{tpu_custom_call.1} parent=11 // pred_region
          _
        $region24: #{tpu_custom_call.1} parent=11 // pred_fallthru
          _
        // Predicated region
        $region25: #{tpu_custom_call.1} parent=11 // pred_check
          %p307 = pneg %p132
        $region26: #{tpu_custom_call.1} parent=11 // pred_check_branch
          %309 = sbr.rel (%p307) target = $region28
        $region27: #{tpu_custom_call.1} parent=11 // pred_region
          _
        $region28: #{tpu_custom_call.1} parent=11 // pred_fallthru
          _
        // Predicated region
        $region29: #{tpu_custom_call.1} parent=11 // pred_check
          %p310 = pneg %p153
        $region30: #{tpu_custom_call.1} parent=11 // pred_check_branch
          %312 = sbr.rel (%p310) target = $region32
        $region31: #{tpu_custom_call.1} parent=11 // pred_region
          _
        $region32: #{tpu_custom_call.1} parent=11 // pred_fallthru
          _
        // Predicated region
        $region33: #{tpu_custom_call.1} parent=11 // pred_check
          %p313 = pneg %p174
        $region34: #{tpu_custom_call.1} parent=11 // pred_check_branch
          %315 = sbr.rel (%p313) target = $region36
        $region35: #{tpu_custom_call.1} parent=11 // pred_region
          %s317 = ssub.s32 4096, 4096
          %318 = vsyncadd [#allocation6], %s317
          %s319 = sshll.u32 [#allocation7], 4
          %s320 = int_to_ptr.vmem [resolvable:$true] %s319
          %325 = dma.hbm_to_vmem [thread:$0]  %s6, 4096, %s320, [#allocation6], 256, 256, 16
        $region36: #{tpu_custom_call.1} parent=11 // pred_fallthru
          _
        // Predicated region
        $region37: #{tpu_custom_call.1} parent=11 // pred_check
          %p326 = pneg %p195
        $region38: #{tpu_custom_call.1} parent=11 // pred_check_branch
          %328 = sbr.rel (%p326) target = $region40
        $region39: #{tpu_custom_call.1} parent=11 // pred_region
          _
        $region40: #{tpu_custom_call.1} parent=11 // pred_fallthru
          _
        // Predicated region
        $region41: #{tpu_custom_call.1} parent=11 // pred_check
          %p329 = pneg %p216
        $region42: #{tpu_custom_call.1} parent=11 // pred_check_branch
          %331 = sbr.rel (%p329) target = $region44
        $region43: #{tpu_custom_call.1} parent=11 // pred_region
          %s333 = ssub.s32 2048, 2048
          %334 = vsyncadd [#allocation9], %s333
          %s335 = sshll.u32 [#allocation8], 4
          %s336 = int_to_ptr.vmem [resolvable:$true] %s335
          %341 = dma.hbm_to_vmem [thread:$0]  %s8, 2048, %s336, [#allocation9], 128, 128, 8
        $region44: #{tpu_custom_call.1} parent=11 // pred_fallthru
          _
        // Predicated region
        $region45: #{tpu_custom_call.1} parent=11 // pred_check
          %p342 = pneg %p237
        $region46: #{tpu_custom_call.1} parent=11 // pred_check_branch
          %344 = sbr.rel (%p342) target = $region48
        $region47: #{tpu_custom_call.1} parent=11 // pred_region
          _
        $region48: #{tpu_custom_call.1} parent=11 // pred_fallthru
          _
      $region12: #{tpu_custom_call.1} parent=5 // pred_fallthru
        _
      %p345 = scmp.lt.s32.totalorder %s22, 2
      // Predicated region
      $region49: #{tpu_custom_call.1} parent=5 // pred_check
        %p346 = pneg %p345
      $region50: #{tpu_custom_call.1} parent=5 // pred_check_branch
        %348 = sbr.rel (%p346) target = $region52
      $region51: #{tpu_custom_call.1} parent=5 // pred_region
        // Predicated region
        $region53: #{tpu_custom_call.1} parent=51 // pred_check
          %p349 = pneg %p42
        $region54: #{tpu_custom_call.1} parent=51 // pred_check_branch
          %351 = sbr.rel (%p349) target = $region56
        $region55: #{tpu_custom_call.1} parent=51 // pred_region
          %s352 = smul.u32 16, %s22
          %p353 = scmp.lt.s32.totalorder %s352, 31
          %s354 = scalar_select %p353, %s352, 31
          %s355 = smul.addr %s354, 8
          %s356 = scalar_lea.vmem %s0, %s355
          %s357 = smul.u32 16, %s22
        $region56: #{tpu_custom_call.1} parent=51 // pred_fallthru
          _
      $region52: #{tpu_custom_call.1} parent=5 // pred_fallthru
        _
      %p358 = scmp.le.s32.totalorder 1, %s22
      %p359 = scmp.lt.s32.totalorder %s22, 3
      %p360 = pnand %p358, %p359
      %p361 = pneg %p360
      // Predicated region
      $region57: #{tpu_custom_call.1} parent=5 // pred_check
        _
      $region58: #{tpu_custom_call.1} parent=5 // pred_check_branch
        %363 = sbr.rel (%p360) target = $region60
      $region59: #{tpu_custom_call.1} parent=5 // pred_region
        %s364 = ssub.s32 %s22, 1
        // Predicated region
        $region61: #{tpu_custom_call.1} parent=59 // pred_check
          %p365 = pneg %p69
        $region62: #{tpu_custom_call.1} parent=59 // pred_check_branch
          %367 = sbr.rel (%p365) target = $region64
        $region63: #{tpu_custom_call.1} parent=59 // pred_region
          %368 = dma.done [#allocation3], 1600
        $region64: #{tpu_custom_call.1} parent=59 // pred_fallthru
          _
        // Predicated region
        $region65: #{tpu_custom_call.1} parent=59 // pred_check
          %p369 = pneg %p90
        $region66: #{tpu_custom_call.1} parent=59 // pred_check_branch
          %371 = sbr.rel (%p369) target = $region68
        $region67: #{tpu_custom_call.1} parent=59 // pred_region
          %372 = dma.done [#allocation6], 1600
        $region68: #{tpu_custom_call.1} parent=59 // pred_fallthru
          _
        // Predicated region
        $region69: #{tpu_custom_call.1} parent=59 // pred_check
          %p373 = pneg %p174
        $region70: #{tpu_custom_call.1} parent=59 // pred_check_branch
          %375 = sbr.rel (%p373) target = $region72
        $region71: #{tpu_custom_call.1} parent=59 // pred_region
          %376 = dma.done [#allocation6], 4096
        $region72: #{tpu_custom_call.1} parent=59 // pred_fallthru
          _
        // Predicated region
        $region73: #{tpu_custom_call.1} parent=59 // pred_check
          %p377 = pneg %p216
        $region74: #{tpu_custom_call.1} parent=59 // pred_check_branch
          %379 = sbr.rel (%p377) target = $region76
        $region75: #{tpu_custom_call.1} parent=59 // pred_region
          %380 = dma.done [#allocation9], 2048
        $region76: #{tpu_custom_call.1} parent=59 // pred_fallthru
          _
        %s381 = smul.u32 16, %s27
        %p382 = scmp.lt.s32.totalorder %s381, 31
        %s383 = scalar_select %p382, %s381, 31
        %s384 = smul.addr %s383, 8
        %s385 = scalar_lea.vmem %s0, %s384
        %p386 = pneg %p48
        %p387 = pneg %p45
        %p388 = pneg %p69
        %p389 = pneg %p66
        %p390 = pneg %p90
        %p391 = pneg %p87
        %p392 = pneg %p111
        %p393 = pneg %p108
        %p394 = pneg %p132
        %p395 = pneg %p129
        %p396 = pneg %p153
        %p397 = pneg %p150
        %p398 = pneg %p174
        %p399 = pneg %p171
        %p400 = pneg %p195
        %p401 = pneg %p192
        %p402 = pneg %p216
        %p403 = pneg %p213
        %p404 = pneg %p237
        %p405 = pneg %p234
        %p406 = pneg %p263
        %p407 = pneg %p260
        %s408 = sand.u32 %s250, 1
        %s409 = scalar_lea.sflag [#allocation4], %s408
        %s410 = sand.u32 %s250, 1
        %s411 = smul.addr %s410, 8
        %s412 = scalar_lea.vmem [#allocation10], %s411
        %s413 = smul.u32 16, %s27
        %p414 = scmp.lt.s32.totalorder %s413, 31
        %s415 = scalar_select %p414, %s413, 31
        %s416 = smul.addr %s415, 8
        %s417 = scalar_lea.vmem %s0, %s416
        %s418 = smul.u32 16, %s27
        %v420 = vld [vmem:[%s417] sm:$0xff]
        %v421 = vld [vmem:[%s417 + $0x8] sm:$0xff]
        %v422 = vld [vmem:[%s417 + $0x10] sm:$0xff]
        %v423 = vld [vmem:[%s417 + $0x18] sm:$0xff]
        %v424 = vld [vmem:[%s417 + $0x20] sm:$0xff]
        %v425 = vld [vmem:[%s417 + $0x28] sm:$0xff]
        %v426 = vld [vmem:[%s417 + $0x30] sm:$0xff]
        %v427 = vld [vmem:[%s417 + $0x38] sm:$0xff]
        %v428 = vld [vmem:[%s417 + $0x40] sm:$0xff]
        %v429 = vld [vmem:[%s417 + $0x48] sm:$0xff]
        %v430 = vld [vmem:[%s417 + $0x50] sm:$0xff]
        %v431 = vld [vmem:[%s417 + $0x58] sm:$0xff]
        %v432 = vld [vmem:[%s417 + $0x60] sm:$0xff]
        %v433 = vld [vmem:[%s417 + $0x68] sm:$0xff]
        %v434 = vld [vmem:[%s417 + $0x70] sm:$0xff]
        %v435 = vld [vmem:[%s417 + $0x78] sm:$0xff]
        %v436 = vlaneseq
        %v437 = vand.u32 %v436, 127
        %v438 = vadd.s32 %v437, 128
        %439 = vset.pattern.permute.xlu0 0
        %440 = vperm.xlu0 %439, %v420
        %v441 = vpop.permute.xlu0 %440
        %442 = vset.pattern.permute.xlu0 0
        %443 = vperm.xlu0 %442, %v421
        %v444 = vpop.permute.xlu0 %443
        %445 = vset.pattern.permute.xlu0 0
        %446 = vperm.xlu0 %445, %v422
        %v447 = vpop.permute.xlu0 %446
        %448 = vset.pattern.permute.xlu0 0
        %449 = vperm.xlu0 %448, %v423
        %v450 = vpop.permute.xlu0 %449
        %451 = vset.pattern.permute.xlu0 0
        %452 = vperm.xlu0 %451, %v424
        %v453 = vpop.permute.xlu0 %452
        %454 = vset.pattern.permute.xlu0 0
        %455 = vperm.xlu0 %454, %v425
        %v456 = vpop.permute.xlu0 %455
        %457 = vset.pattern.permute.xlu0 0
        %458 = vperm.xlu0 %457, %v426
        %v459 = vpop.permute.xlu0 %458
        %460 = vset.pattern.permute.xlu0 0
        %461 = vperm.xlu0 %460, %v427
        %v462 = vpop.permute.xlu0 %461
        %463 = vset.pattern.permute.xlu0 0
        %464 = vperm.xlu0 %463, %v428
        %v465 = vpop.permute.xlu0 %464
        %466 = vset.pattern.permute.xlu0 0
        %467 = vperm.xlu0 %466, %v429
        %v468 = vpop.permute.xlu0 %467
        %469 = vset.pattern.permute.xlu0 0
        %470 = vperm.xlu0 %469, %v430
        %v471 = vpop.permute.xlu0 %470
        %472 = vset.pattern.permute.xlu0 0
        %473 = vperm.xlu0 %472, %v431
        %v474 = vpop.permute.xlu0 %473
        %475 = vset.pattern.permute.xlu0 0
        %476 = vperm.xlu0 %475, %v432
        %v477 = vpop.permute.xlu0 %476
        %478 = vset.pattern.permute.xlu0 0
        %479 = vperm.xlu0 %478, %v433
        %v480 = vpop.permute.xlu0 %479
        %481 = vset.pattern.permute.xlu0 0
        %482 = vperm.xlu0 %481, %v434
        %v483 = vpop.permute.xlu0 %482
        %484 = vset.pattern.permute.xlu0 0
        %485 = vperm.xlu0 %484, %v435
        %v486 = vpop.permute.xlu0 %485
        %vm487 = vcmp.eq.s32.totalorder %v441, %v437
        %vm488 = vcmp.eq.s32.totalorder %v441, %v438
        %vm489 = vcmp.eq.s32.totalorder %v444, %v437
        %vm490 = vcmp.eq.s32.totalorder %v444, %v438
        %vm491 = vcmp.eq.s32.totalorder %v447, %v437
        %vm492 = vcmp.eq.s32.totalorder %v447, %v438
        %vm493 = vcmp.eq.s32.totalorder %v450, %v437
        %vm494 = vcmp.eq.s32.totalorder %v450, %v438
        %vm495 = vcmp.eq.s32.totalorder %v453, %v437
        %vm496 = vcmp.eq.s32.totalorder %v453, %v438
        %vm497 = vcmp.eq.s32.totalorder %v456, %v437
        %vm498 = vcmp.eq.s32.totalorder %v456, %v438
        %vm499 = vcmp.eq.s32.totalorder %v459, %v437
        %vm500 = vcmp.eq.s32.totalorder %v459, %v438
        %vm501 = vcmp.eq.s32.totalorder %v462, %v437
        %vm502 = vcmp.eq.s32.totalorder %v462, %v438
        %vm503 = vcmp.eq.s32.totalorder %v465, %v437
        %vm504 = vcmp.eq.s32.totalorder %v465, %v438
        %vm505 = vcmp.eq.s32.totalorder %v468, %v437
        %vm506 = vcmp.eq.s32.totalorder %v468, %v438
        %vm507 = vcmp.eq.s32.totalorder %v471, %v437
        %vm508 = vcmp.eq.s32.totalorder %v471, %v438
        %vm509 = vcmp.eq.s32.totalorder %v474, %v437
        %vm510 = vcmp.eq.s32.totalorder %v474, %v438
        %vm511 = vcmp.eq.s32.totalorder %v477, %v437
        %vm512 = vcmp.eq.s32.totalorder %v477, %v438
        %vm513 = vcmp.eq.s32.totalorder %v480, %v437
        %vm514 = vcmp.eq.s32.totalorder %v480, %v438
        %vm515 = vcmp.eq.s32.totalorder %v483, %v437
        %vm516 = vcmp.eq.s32.totalorder %v483, %v438
        %vm517 = vcmp.eq.s32.totalorder %v486, %v437
        %vm518 = vcmp.eq.s32.totalorder %v486, %v438
        %519 = vset.pattern.permute.xlu0 1
        %520 = vperm.xlu0 %519, %v420
        %v521 = vpop.permute.xlu0 %520
        %522 = vset.pattern.permute.xlu0 1
        %523 = vperm.xlu0 %522, %v421
        %v524 = vpop.permute.xlu0 %523
        %525 = vset.pattern.permute.xlu0 1
        %526 = vperm.xlu0 %525, %v422
        %v527 = vpop.permute.xlu0 %526
        %528 = vset.pattern.permute.xlu0 1
        %529 = vperm.xlu0 %528, %v423
        %v530 = vpop.permute.xlu0 %529
        %531 = vset.pattern.permute.xlu0 1
        %532 = vperm.xlu0 %531, %v424
        %v533 = vpop.permute.xlu0 %532
        %534 = vset.pattern.permute.xlu0 1
        %535 = vperm.xlu0 %534, %v425
        %v536 = vpop.permute.xlu0 %535
        %537 = vset.pattern.permute.xlu0 1
        %538 = vperm.xlu0 %537, %v426
        %v539 = vpop.permute.xlu0 %538
        %540 = vset.pattern.permute.xlu0 1
        %541 = vperm.xlu0 %540, %v427
        %v542 = vpop.permute.xlu0 %541
        %543 = vset.pattern.permute.xlu0 1
        %544 = vperm.xlu0 %543, %v428
        %v545 = vpop.permute.xlu0 %544
        %546 = vset.pattern.permute.xlu0 1
        %547 = vperm.xlu0 %546, %v429
        %v548 = vpop.permute.xlu0 %547
        %549 = vset.pattern.permute.xlu0 1
        %550 = vperm.xlu0 %549, %v430
        %v551 = vpop.permute.xlu0 %550
        %552 = vset.pattern.permute.xlu0 1
        %553 = vperm.xlu0 %552, %v431
        %v554 = vpop.permute.xlu0 %553
        %555 = vset.pattern.permute.xlu0 1
        %556 = vperm.xlu0 %555, %v432
        %v557 = vpop.permute.xlu0 %556
        %558 = vset.pattern.permute.xlu0 1
        %559 = vperm.xlu0 %558, %v433
        %v560 = vpop.permute.xlu0 %559
        %561 = vset.pattern.permute.xlu0 1
        %562 = vperm.xlu0 %561, %v434
        %v563 = vpop.permute.xlu0 %562
        %564 = vset.pattern.permute.xlu0 1
        %565 = vperm.xlu0 %564, %v435
        %v566 = vpop.permute.xlu0 %565
        %vm567 = vcmp.eq.s32.totalorder %v521, %v437
        %vm568 = vcmp.eq.s32.totalorder %v521, %v438
        %vm569 = vcmp.eq.s32.totalorder %v524, %v437
        %vm570 = vcmp.eq.s32.totalorder %v524, %v438
        %vm571 = vcmp.eq.s32.totalorder %v527, %v437
        %vm572 = vcmp.eq.s32.totalorder %v527, %v438
        %vm573 = vcmp.eq.s32.totalorder %v530, %v437
        %vm574 = vcmp.eq.s32.totalorder %v530, %v438
        %vm575 = vcmp.eq.s32.totalorder %v533, %v437
        %vm576 = vcmp.eq.s32.totalorder %v533, %v438
        %vm577 = vcmp.eq.s32.totalorder %v536, %v437
        %vm578 = vcmp.eq.s32.totalorder %v536, %v438
        %vm579 = vcmp.eq.s32.totalorder %v539, %v437
        %vm580 = vcmp.eq.s32.totalorder %v539, %v438
        %vm581 = vcmp.eq.s32.totalorder %v542, %v437
        %vm582 = vcmp.eq.s32.totalorder %v542, %v438
        %vm583 = vcmp.eq.s32.totalorder %v545, %v437
        %vm584 = vcmp.eq.s32.totalorder %v545, %v438
        %vm585 = vcmp.eq.s32.totalorder %v548, %v437
        %vm586 = vcmp.eq.s32.totalorder %v548, %v438
        %vm587 = vcmp.eq.s32.totalorder %v551, %v437
        %vm588 = vcmp.eq.s32.totalorder %v551, %v438
        %vm589 = vcmp.eq.s32.totalorder %v554, %v437
        %vm590 = vcmp.eq.s32.totalorder %v554, %v438
        %vm591 = vcmp.eq.s32.totalorder %v557, %v437
        %vm592 = vcmp.eq.s32.totalorder %v557, %v438
        %vm593 = vcmp.eq.s32.totalorder %v560, %v437
        %vm594 = vcmp.eq.s32.totalorder %v560, %v438
        %vm595 = vcmp.eq.s32.totalorder %v563, %v437
        %vm596 = vcmp.eq.s32.totalorder %v563, %v438
        %vm597 = vcmp.eq.s32.totalorder %v566, %v437
        %vm598 = vcmp.eq.s32.totalorder %v566, %v438
        %vm599 = vmor %vm487, %vm567
        %vm600 = vmor %vm488, %vm568
        %vm601 = vmor %vm489, %vm569
        %vm602 = vmor %vm490, %vm570
        %vm603 = vmor %vm491, %vm571
        %vm604 = vmor %vm492, %vm572
        %vm605 = vmor %vm493, %vm573
        %vm606 = vmor %vm494, %vm574
        %vm607 = vmor %vm495, %vm575
        %vm608 = vmor %vm496, %vm576
        %vm609 = vmor %vm497, %vm577
        %vm610 = vmor %vm498, %vm578
        %vm611 = vmor %vm499, %vm579
        %vm612 = vmor %vm500, %vm580
        %vm613 = vmor %vm501, %vm581
        %vm614 = vmor %vm502, %vm582
        %vm615 = vmor %vm503, %vm583
        %vm616 = vmor %vm504, %vm584
        %vm617 = vmor %vm505, %vm585
        %vm618 = vmor %vm506, %vm586
        %vm619 = vmor %vm507, %vm587
        %vm620 = vmor %vm508, %vm588
        %vm621 = vmor %vm509, %vm589
        %vm622 = vmor %vm510, %vm590
        %vm623 = vmor %vm511, %vm591
        %vm624 = vmor %vm512, %vm592
        %vm625 = vmor %vm513, %vm593
        %vm626 = vmor %vm514, %vm594
        %vm627 = vmor %vm515, %vm595
        %vm628 = vmor %vm516, %vm596
        %vm629 = vmor %vm517, %vm597
        %vm630 = vmor %vm518, %vm598
        %631 = vset.pattern.permute.xlu0 2
        %632 = vperm.xlu0 %631, %v420
        %v633 = vpop.permute.xlu0 %632
        %634 = vset.pattern.permute.xlu0 2
        %635 = vperm.xlu0 %634, %v421
        %v636 = vpop.permute.xlu0 %635
        %637 = vset.pattern.permute.xlu0 2
        %638 = vperm.xlu0 %637, %v422
        %v639 = vpop.permute.xlu0 %638
        %640 = vset.pattern.permute.xlu0 2
        %641 = vperm.xlu0 %640, %v423
        %v642 = vpop.permute.xlu0 %641
        %643 = vset.pattern.permute.xlu0 2
        %644 = vperm.xlu0 %643, %v424
        %v645 = vpop.permute.xlu0 %644
        %646 = vset.pattern.permute.xlu0 2
        %647 = vperm.xlu0 %646, %v425
        %v648 = vpop.permute.xlu0 %647
        %649 = vset.pattern.permute.xlu0 2
        %650 = vperm.xlu0 %649, %v426
        %v651 = vpop.permute.xlu0 %650
        %652 = vset.pattern.permute.xlu0 2
        %653 = vperm.xlu0 %652, %v427
        %v654 = vpop.permute.xlu0 %653
        %655 = vset.pattern.permute.xlu0 2
        %656 = vperm.xlu0 %655, %v428
        %v657 = vpop.permute.xlu0 %656
        %658 = vset.pattern.permute.xlu0 2
        %659 = vperm.xlu0 %658, %v429
        %v660 = vpop.permute.xlu0 %659
        %661 = vset.pattern.permute.xlu0 2
        %662 = vperm.xlu0 %661, %v430
        %v663 = vpop.permute.xlu0 %662
        %664 = vset.pattern.permute.xlu0 2
        %665 = vperm.xlu0 %664, %v431
        %v666 = vpop.permute.xlu0 %665
        %667 = vset.pattern.permute.xlu0 2
        %668 = vperm.xlu0 %667, %v432
        %v669 = vpop.permute.xlu0 %668
        %670 = vset.pattern.permute.xlu0 2
        %671 = vperm.xlu0 %670, %v433
        %v672 = vpop.permute.xlu0 %671
        %673 = vset.pattern.permute.xlu0 2
        %674 = vperm.xlu0 %673, %v434
        %v675 = vpop.permute.xlu0 %674
        %676 = vset.pattern.permute.xlu0 2
        %677 = vperm.xlu0 %676, %v435
        %v678 = vpop.permute.xlu0 %677
        %vm679 = vcmp.eq.s32.totalorder %v633, %v437
        %vm680 = vcmp.eq.s32.totalorder %v633, %v438
        %vm681 = vcmp.eq.s32.totalorder %v636, %v437
        %vm682 = vcmp.eq.s32.totalorder %v636, %v438
        %vm683 = vcmp.eq.s32.totalorder %v639, %v437
        %vm684 = vcmp.eq.s32.totalorder %v639, %v438
        %vm685 = vcmp.eq.s32.totalorder %v642, %v437
        %vm686 = vcmp.eq.s32.totalorder %v642, %v438
        %vm687 = vcmp.eq.s32.totalorder %v645, %v437
        %vm688 = vcmp.eq.s32.totalorder %v645, %v438
        %vm689 = vcmp.eq.s32.totalorder %v648, %v437
        %vm690 = vcmp.eq.s32.totalorder %v648, %v438
        %vm691 = vcmp.eq.s32.totalorder %v651, %v437
        %vm692 = vcmp.eq.s32.totalorder %v651, %v438
        %vm693 = vcmp.eq.s32.totalorder %v654, %v437
        %vm694 = vcmp.eq.s32.totalorder %v654, %v438
        %vm695 = vcmp.eq.s32.totalorder %v657, %v437
        %vm696 = vcmp.eq.s32.totalorder %v657, %v438
        %vm697 = vcmp.eq.s32.totalorder %v660, %v437
        %vm698 = vcmp.eq.s32.totalorder %v660, %v438
        %vm699 = vcmp.eq.s32.totalorder %v663, %v437
        %vm700 = vcmp.eq.s32.totalorder %v663, %v438
        %vm701 = vcmp.eq.s32.totalorder %v666, %v437
        %vm702 = vcmp.eq.s32.totalorder %v666, %v438
        %vm703 = vcmp.eq.s32.totalorder %v669, %v437
        %vm704 = vcmp.eq.s32.totalorder %v669, %v438
        %vm705 = vcmp.eq.s32.totalorder %v672, %v437
        %vm706 = vcmp.eq.s32.totalorder %v672, %v438
        %vm707 = vcmp.eq.s32.totalorder %v675, %v437
        %vm708 = vcmp.eq.s32.totalorder %v675, %v438
        %vm709 = vcmp.eq.s32.totalorder %v678, %v437
        %vm710 = vcmp.eq.s32.totalorder %v678, %v438
        %vm711 = vmor %vm599, %vm679
        %vm712 = vmor %vm600, %vm680
        %vm713 = vmor %vm601, %vm681
        %vm714 = vmor %vm602, %vm682
        %vm715 = vmor %vm603, %vm683
        %vm716 = vmor %vm604, %vm684
        %vm717 = vmor %vm605, %vm685
        %vm718 = vmor %vm606, %vm686
        %vm719 = vmor %vm607, %vm687
        %vm720 = vmor %vm608, %vm688
        %vm721 = vmor %vm609, %vm689
        %vm722 = vmor %vm610, %vm690
        %vm723 = vmor %vm611, %vm691
        %vm724 = vmor %vm612, %vm692
        %vm725 = vmor %vm613, %vm693
        %vm726 = vmor %vm614, %vm694
        %vm727 = vmor %vm615, %vm695
        %vm728 = vmor %vm616, %vm696
        %vm729 = vmor %vm617, %vm697
        %vm730 = vmor %vm618, %vm698
        %vm731 = vmor %vm619, %vm699
        %vm732 = vmor %vm620, %vm700
        %vm733 = vmor %vm621, %vm701
        %vm734 = vmor %vm622, %vm702
        %vm735 = vmor %vm623, %vm703
        %vm736 = vmor %vm624, %vm704
        %vm737 = vmor %vm625, %vm705
        %vm738 = vmor %vm626, %vm706
        %vm739 = vmor %vm627, %vm707
        %vm740 = vmor %vm628, %vm708
        %vm741 = vmor %vm629, %vm709
        %vm742 = vmor %vm630, %vm710
        %v743 = vsel %vm711, 1, 0
        %v744 = vsel %vm712, 1, 0
        %v745 = vsel %vm713, 1, 0
        %v746 = vsel %vm714, 1, 0
        %v747 = vsel %vm715, 1, 0
        %v748 = vsel %vm716, 1, 0
        %v749 = vsel %vm717, 1, 0
        %v750 = vsel %vm718, 1, 0
        %v751 = vsel %vm719, 1, 0
        %v752 = vsel %vm720, 1, 0
        %v753 = vsel %vm721, 1, 0
        %v754 = vsel %vm722, 1, 0
        %v755 = vsel %vm723, 1, 0
        %v756 = vsel %vm724, 1, 0
        %v757 = vsel %vm725, 1, 0
        %v758 = vsel %vm726, 1, 0
        %v759 = vsel %vm727, 1, 0
        %v760 = vsel %vm728, 1, 0
        %v761 = vsel %vm729, 1, 0
        %v762 = vsel %vm730, 1, 0
        %v763 = vsel %vm731, 1, 0
        %v764 = vsel %vm732, 1, 0
        %v765 = vsel %vm733, 1, 0
        %v766 = vsel %vm734, 1, 0
        %v767 = vsel %vm735, 1, 0
        %v768 = vsel %vm736, 1, 0
        %v769 = vsel %vm737, 1, 0
        %v770 = vsel %vm738, 1, 0
        %v771 = vsel %vm739, 1, 0
        %v772 = vsel %vm740, 1, 0
        %v773 = vsel %vm741, 1, 0
        %v774 = vsel %vm742, 1, 0
        %v775 = vcvt.s32.f32 %v743
        %v776 = vcvt.s32.f32 %v744
        %v777 = vcvt.s32.f32 %v745
        %v778 = vcvt.s32.f32 %v746
        %v779 = vcvt.s32.f32 %v747
        %v780 = vcvt.s32.f32 %v748
        %v781 = vcvt.s32.f32 %v749
        %v782 = vcvt.s32.f32 %v750
        %v783 = vcvt.s32.f32 %v751
        %v784 = vcvt.s32.f32 %v752
        %v785 = vcvt.s32.f32 %v753
        %v786 = vcvt.s32.f32 %v754
        %v787 = vcvt.s32.f32 %v755
        %v788 = vcvt.s32.f32 %v756
        %v789 = vcvt.s32.f32 %v757
        %v790 = vcvt.s32.f32 %v758
        %v791 = vcvt.s32.f32 %v759
        %v792 = vcvt.s32.f32 %v760
        %v793 = vcvt.s32.f32 %v761
        %v794 = vcvt.s32.f32 %v762
        %v795 = vcvt.s32.f32 %v763
        %v796 = vcvt.s32.f32 %v764
        %v797 = vcvt.s32.f32 %v765
        %v798 = vcvt.s32.f32 %v766
        %v799 = vcvt.s32.f32 %v767
        %v800 = vcvt.s32.f32 %v768
        %v801 = vcvt.s32.f32 %v769
        %v802 = vcvt.s32.f32 %v770
        %v803 = vcvt.s32.f32 %v771
        %v804 = vcvt.s32.f32 %v772
        %v805 = vcvt.s32.f32 %v773
        %v806 = vcvt.s32.f32 %v774
        %v807 = vpack.c.bf16 %v777, %v775
        %v808 = vpack.c.bf16 %v778, %v776
        %v809 = vpack.c.bf16 %v781, %v779
        %v810 = vpack.c.bf16 %v782, %v780
        %v811 = vpack.c.bf16 %v785, %v783
        %v812 = vpack.c.bf16 %v786, %v784
        %v813 = vpack.c.bf16 %v789, %v787
        %v814 = vpack.c.bf16 %v790, %v788
        %v815 = vpack.c.bf16 %v793, %v791
        %v816 = vpack.c.bf16 %v794, %v792
        %v817 = vpack.c.bf16 %v797, %v795
        %v818 = vpack.c.bf16 %v798, %v796
        %v819 = vpack.c.bf16 %v801, %v799
        %v820 = vpack.c.bf16 %v802, %v800
        %v821 = vpack.c.bf16 %v805, %v803
        %v822 = vpack.c.bf16 %v806, %v804
        %v823 = vld [vmem:[#allocation2] sm:$0xf]
        %v824 = vld [vmem:[#allocation2 + $0x4] sm:$0xf]
        %v825 = vld [vmem:[#allocation2 + $0x8] sm:$0xf]
        %v826 = vld [vmem:[#allocation2 + $0xc] sm:$0xf]
        %v827 = vld [vmem:[#allocation2 + $0x10] sm:$0xf]
        %v828 = vld [vmem:[#allocation2 + $0x14] sm:$0xf]
        %v829 = vld [vmem:[#allocation2 + $0x18] sm:$0xf]
        %v830 = vld [vmem:[#allocation2 + $0x1c] sm:$0xf]
        %v831 = vld [vmem:[#allocation2 + $0x20] sm:$0xf]
        %v832 = vld [vmem:[#allocation2 + $0x24] sm:$0xf]
        %v833 = vld [vmem:[#allocation2 + $0x28] sm:$0xf]
        %v834 = vld [vmem:[#allocation2 + $0x2c] sm:$0xf]
        %v835 = vld [vmem:[#allocation2 + $0x30] sm:$0xf]
        %v836 = vld [vmem:[#allocation2 + $0x34] sm:$0xf]
        %v837 = vld [vmem:[#allocation2 + $0x38] sm:$0xf]
        %v838 = vld [vmem:[#allocation2 + $0x3c] sm:$0xf]
        %v839 = vld [vmem:[#allocation2 + $0x40] sm:$0xf]
        %v840 = vld [vmem:[#allocation2 + $0x44] sm:$0xf]
        %v841 = vld [vmem:[#allocation2 + $0x48] sm:$0xf]
        %v842 = vld [vmem:[#allocation2 + $0x4c] sm:$0xf]
        %v843 = vld [vmem:[#allocation2 + $0x50] sm:$0xf]
        %v844 = vld [vmem:[#allocation2 + $0x54] sm:$0xf]
        %v845 = vld [vmem:[#allocation2 + $0x58] sm:$0xf]
        %v846 = vld [vmem:[#allocation2 + $0x5c] sm:$0xf]
        %v847 = vld [vmem:[#allocation2 + $0x60] sm:$0x3]
        %v848 = vld [vmem:[#allocation5] sm:$0xf]
        %v849 = vld [vmem:[#allocation5 + $0x4] sm:$0xf]
        %v850 = vld [vmem:[#allocation5 + $0x8] sm:$0xf]
        %v851 = vld [vmem:[#allocation5 + $0xc] sm:$0xf]
        %v852 = vld [vmem:[#allocation5 + $0x10] sm:$0xf]
        %v853 = vld [vmem:[#allocation5 + $0x14] sm:$0xf]
        %v854 = vld [vmem:[#allocation5 + $0x18] sm:$0xf]
        %v855 = vld [vmem:[#allocation5 + $0x1c] sm:$0xf]
        %v856 = vld [vmem:[#allocation5 + $0x20] sm:$0xf]
        %v857 = vld [vmem:[#allocation5 + $0x24] sm:$0xf]
        %v858 = vld [vmem:[#allocation5 + $0x28] sm:$0xf]
        %v859 = vld [vmem:[#allocation5 + $0x2c] sm:$0xf]
        %v860 = vld [vmem:[#allocation5 + $0x30] sm:$0xf]
        %v861 = vld [vmem:[#allocation5 + $0x34] sm:$0xf]
        %v862 = vld [vmem:[#allocation5 + $0x38] sm:$0xf]
        %v863 = vld [vmem:[#allocation5 + $0x3c] sm:$0xf]
        %v864 = vld [vmem:[#allocation5 + $0x40] sm:$0xf]
        %v865 = vld [vmem:[#allocation5 + $0x44] sm:$0xf]
        %v866 = vld [vmem:[#allocation5 + $0x48] sm:$0xf]
        %v867 = vld [vmem:[#allocation5 + $0x4c] sm:$0xf]
        %v868 = vld [vmem:[#allocation5 + $0x50] sm:$0xf]
        %v869 = vld [vmem:[#allocation5 + $0x54] sm:$0xf]
        %v870 = vld [vmem:[#allocation5 + $0x58] sm:$0xf]
        %v871 = vld [vmem:[#allocation5 + $0x5c] sm:$0xf]
        %v872 = vld [vmem:[#allocation5 + $0x60] sm:$0x3]
        %v898 = vunpack.c.l.b16 %v848
        %v899 = vunpack.c.l.b16 %v849
        %v900 = vunpack.c.l.b16 %v850
        %v901 = vunpack.c.l.b16 %v851
        %v902 = vunpack.c.l.b16 %v852
        %v903 = vunpack.c.l.b16 %v853
        %v904 = vunpack.c.l.b16 %v854
        %v905 = vunpack.c.l.b16 %v855
        %v906 = vunpack.c.l.b16 %v856
        %v907 = vunpack.c.l.b16 %v857
        %v908 = vunpack.c.l.b16 %v858
        %v909 = vunpack.c.l.b16 %v859
        %v910 = vunpack.c.l.b16 %v860
        %v911 = vunpack.c.l.b16 %v861
        %v912 = vunpack.c.l.b16 %v862
        %v913 = vunpack.c.l.b16 %v863
        %v914 = vunpack.c.l.b16 %v864
        %v915 = vunpack.c.l.b16 %v865
        %v916 = vunpack.c.l.b16 %v866
        %v917 = vunpack.c.l.b16 %v867
        %v918 = vunpack.c.l.b16 %v868
        %v919 = vunpack.c.l.b16 %v869
        %v920 = vunpack.c.l.b16 %v870
        %v921 = vunpack.c.l.b16 %v871
        %v922 = vunpack.c.l.b16 %v872
        %v923 = vpack.c.b16 %v899, %v898
        %v924 = vpack.c.b16 %v901, %v900
        %v925 = vpack.c.b16 %v903, %v902
        %v926 = vpack.c.b16 %v905, %v904
        %v927 = vpack.c.b16 %v907, %v906
        %v928 = vpack.c.b16 %v909, %v908
        %v929 = vpack.c.b16 %v911, %v910
        %v930 = vpack.c.b16 %v913, %v912
        %v931 = vpack.c.b16 %v915, %v914
        %v932 = vpack.c.b16 %v917, %v916
        %v933 = vpack.c.b16 %v919, %v918
        %v934 = vpack.c.b16 %v921, %v920
        %v935 = vpack.c.b16 %v922, %v922
        %vm948 = vcmask 547840
        %v950 = vsel %vm948, %v808, 0
        %v953 = vsel %vm948, %v810, 0
        %v956 = vsel %vm948, %v812, 0
        %v959 = vsel %vm948, %v814, 0
        %v962 = vsel %vm948, %v816, 0
        %v965 = vsel %vm948, %v818, 0
        %v968 = vsel %vm948, %v820, 0
        %v971 = vsel %vm948, %v822, 0
        %vm973 = vcmask 1040384
        %vm974 = vcmask 1041408
        %v975 = vsel %vm973, 4294967295, 65535
        %v976 = vsel %vm974, %v975, 0
        %v978 = vand.u32 %v935, %v976
        %980 = vmatprep.subr.bf16.mxu0 0
        %981 = vmatpush1.bf16.msra.mxu0 %v923
        %982 = vmatprep.subr.bf16.mxu0 0
        %983 = vmatpush1.bf16.msra.mxu0 %v924
        %984 = vmatprep.subr.bf16.mxu0 0
        %985 = vmatpush1.bf16.msra.mxu0 %v925
        %986 = vmatprep.subr.bf16.mxu0 0
        %987 = vmatpush1.bf16.msra.mxu0 %v926
        %988 = vmatprep.subr.bf16.mxu0 0
        %989 = vmatpush1.bf16.msra.mxu0 %v927
        %990 = vmatprep.subr.bf16.mxu0 0
        %991 = vmatpush1.bf16.msra.mxu0 %v928
        %992 = vmatprep.subr.bf16.mxu0 0
        %993 = vmatpush1.bf16.msra.mxu0 %v929
        %994 = vmatprep.subr.bf16.mxu0 0
        %995 = vmatpush1.bf16.msra.mxu0 %v930
        %996 = vmatprep.subr.bf16.mxu0 0
        %997 = vmatpush1.bf16.msra.mxu0 %v931
        %998 = vmatprep.subr.bf16.mxu0 0
        %999 = vmatpush1.bf16.msra.mxu0 %v932
        %1000 = vmatprep.subr.bf16.mxu0 0
        %1001 = vmatpush1.bf16.msra.mxu0 %v933
        %1002 = vmatprep.subr.bf16.mxu0 0
        %1003 = vmatpush1.bf16.msra.mxu0 %v934
        %1004 = vmatprep.subr.bf16.mxu0 0
        %1005 = vmatpush1.bf16.msra.mxu0 %v978
        %1006 = vmatprep.subr.bf16.mxu0 0
        %1007 = vmatpush1.bf16.msra.mxu0 0
        %1008 = vmatprep.subr.bf16.mxu0 0
        %1009 = vmatpush1.bf16.msra.mxu0 0
        %1010 = vmatprep.subr.bf16.mxu0 0
        %1011 = vmatpush1.bf16.msra.mxu0 0
        %1012 = vmatprep.mubr.bf16.mxu0 %v950
        %1013 = vmatmul.mubr.bf16.gmra.mrb[0].mxu0 %v807
        %v1014 = vpop.f32.mrb[0].mxu0
        %v1015 = vadd.f32 0.0, %v1014
        %v1016 = vpop.f32.mrb[0].mxu0
        %v1017 = vpop.f32.mrb[0].mxu0
        %v1018 = vadd.f32 0.0, %v1017
        %v1019 = vpop.f32.mrb[0].mxu0
        %1020 = vmatprep.mubr.bf16.mxu0 %v953
        %1021 = vmatmul.mubr.bf16.gmra.mrb[0].mxu0 %v809
        %v1022 = vpop.f32.mrb[0].mxu0
        %v1023 = vadd.f32 0.0, %v1022
        %v1024 = vpop.f32.mrb[0].mxu0
        %v1025 = vpop.f32.mrb[0].mxu0
        %v1026 = vadd.f32 0.0, %v1025
        %v1027 = vpop.f32.mrb[0].mxu0
        %1028 = vmatprep.mubr.bf16.mxu0 %v956
        %1029 = vmatmul.mubr.bf16.gmra.mrb[0].mxu0 %v811
        %v1030 = vpop.f32.mrb[0].mxu0
        %v1031 = vadd.f32 0.0, %v1030
        %v1032 = vpop.f32.mrb[0].mxu0
        %v1033 = vpop.f32.mrb[0].mxu0
        %v1034 = vadd.f32 0.0, %v1033
        %v1035 = vpop.f32.mrb[0].mxu0
        %1036 = vmatprep.mubr.bf16.mxu0 %v959
        %1037 = vmatmul.mubr.bf16.gmra.mrb[0].mxu0 %v813
        %v1038 = vpop.f32.mrb[0].mxu0
        %v1039 = vadd.f32 0.0, %v1038
        %v1040 = vpop.f32.mrb[0].mxu0
        %v1041 = vpop.f32.mrb[0].mxu0
        %v1042 = vadd.f32 0.0, %v1041
        %v1043 = vpop.f32.mrb[0].mxu0
        %1044 = vmatprep.mubr.bf16.mxu0 %v962
        %1045 = vmatmul.mubr.bf16.gmra.mrb[0].mxu0 %v815
        %v1046 = vpop.f32.mrb[0].mxu0
        %v1047 = vadd.f32 0.0, %v1046
        %v1048 = vpop.f32.mrb[0].mxu0
        %v1049 = vpop.f32.mrb[0].mxu0
        %v1050 = vadd.f32 0.0, %v1049
        %v1051 = vpop.f32.mrb[0].mxu0
        %1052 = vmatprep.mubr.bf16.mxu0 %v965
        %1053 = vmatmul.mubr.bf16.gmra.mrb[0].mxu0 %v817
        %v1054 = vpop.f32.mrb[0].mxu0
        %v1055 = vadd.f32 0.0, %v1054
        %v1056 = vpop.f32.mrb[0].mxu0
        %v1057 = vpop.f32.mrb[0].mxu0
        %v1058 = vadd.f32 0.0, %v1057
        %v1059 = vpop.f32.mrb[0].mxu0
        %1060 = vmatprep.mubr.bf16.mxu0 %v968
        %1061 = vmatmul.mubr.bf16.gmra.mrb[0].mxu0 %v819
        %v1062 = vpop.f32.mrb[0].mxu0
        %v1063 = vadd.f32 0.0, %v1062
        %v1064 = vpop.f32.mrb[0].mxu0
        %v1065 = vpop.f32.mrb[0].mxu0
        %v1066 = vadd.f32 0.0, %v1065
        %v1067 = vpop.f32.mrb[0].mxu0
        %1068 = vmatprep.mubr.bf16.mxu0 %v971
        %1069 = vmatmul.mubr.bf16.gmra.mrb[0].mxu0 %v821
        %v1070 = vpop.f32.mrb[0].mxu0
        %v1071 = vadd.f32 0.0, %v1070
        %v1072 = vpop.f32.mrb[0].mxu0
        %v1073 = vpop.f32.mrb[0].mxu0
        %v1074 = vadd.f32 0.0, %v1073
        %v1075 = vpop.f32.mrb[0].mxu0
        %1076 = vdwg.mxu0
        %v1102 = vunpack.c.l.b16 %v823
        %v1103 = vunpack.c.l.b16 %v824
        %v1104 = vunpack.c.l.b16 %v825
        %v1105 = vunpack.c.l.b16 %v826
        %v1106 = vunpack.c.l.b16 %v827
        %v1107 = vunpack.c.l.b16 %v828
        %v1108 = vunpack.c.l.b16 %v829
        %v1109 = vunpack.c.l.b16 %v830
        %v1110 = vunpack.c.l.b16 %v831
        %v1111 = vunpack.c.l.b16 %v832
        %v1112 = vunpack.c.l.b16 %v833
        %v1113 = vunpack.c.l.b16 %v834
        %v1114 = vunpack.c.l.b16 %v835
        %v1115 = vunpack.c.l.b16 %v836
        %v1116 = vunpack.c.l.b16 %v837
        %v1117 = vunpack.c.l.b16 %v838
        %v1118 = vunpack.c.l.b16 %v839
        %v1119 = vunpack.c.l.b16 %v840
        %v1120 = vunpack.c.l.b16 %v841
        %v1121 = vunpack.c.l.b16 %v842
        %v1122 = vunpack.c.l.b16 %v843
        %v1123 = vunpack.c.l.b16 %v844
        %v1124 = vunpack.c.l.b16 %v845
        %v1125 = vunpack.c.l.b16 %v846
        %v1126 = vunpack.c.l.b16 %v847
        %v1127 = vpack.c.b16 %v1103, %v1102
        %v1128 = vpack.c.b16 %v1105, %v1104
        %v1129 = vpack.c.b16 %v1107, %v1106
        %v1130 = vpack.c.b16 %v1109, %v1108
        %v1131 = vpack.c.b16 %v1111, %v1110
        %v1132 = vpack.c.b16 %v1113, %v1112
        %v1133 = vpack.c.b16 %v1115, %v1114
        %v1134 = vpack.c.b16 %v1117, %v1116
        %v1135 = vpack.c.b16 %v1119, %v1118
        %v1136 = vpack.c.b16 %v1121, %v1120
        %v1137 = vpack.c.b16 %v1123, %v1122
        %v1138 = vpack.c.b16 %v1125, %v1124
        %v1139 = vpack.c.b16 %v1126, %v1126
        %v1153 = vand.u32 %v1139, %v976
        %1155 = vmatprep.subr.bf16.mxu0 0
        %1156 = vmatpush1.bf16.msra.mxu0 %v1127
        %1157 = vmatprep.subr.bf16.mxu0 0
        %1158 = vmatpush1.bf16.msra.mxu0 %v1128
        %1159 = vmatprep.subr.bf16.mxu0 0
        %1160 = vmatpush1.bf16.msra.mxu0 %v1129
        %1161 = vmatprep.subr.bf16.mxu0 0
        %1162 = vmatpush1.bf16.msra.mxu0 %v1130
        %1163 = vmatprep.subr.bf16.mxu0 0
        %1164 = vmatpush1.bf16.msra.mxu0 %v1131
        %1165 = vmatprep.subr.bf16.mxu0 0
        %1166 = vmatpush1.bf16.msra.mxu0 %v1132
        %1167 = vmatprep.subr.bf16.mxu0 0
        %1168 = vmatpush1.bf16.msra.mxu0 %v1133
        %1169 = vmatprep.subr.bf16.mxu0 0
        %1170 = vmatpush1.bf16.msra.mxu0 %v1134
        %1171 = vmatprep.subr.bf16.mxu0 0
        %1172 = vmatpush1.bf16.msra.mxu0 %v1135
        %1173 = vmatprep.subr.bf16.mxu0 0
        %1174 = vmatpush1.bf16.msra.mxu0 %v1136
        %1175 = vmatprep.subr.bf16.mxu0 0
        %1176 = vmatpush1.bf16.msra.mxu0 %v1137
        %1177 = vmatprep.subr.bf16.mxu0 0
        %1178 = vmatpush1.bf16.msra.mxu0 %v1138
        %1179 = vmatprep.subr.bf16.mxu0 0
        %1180 = vmatpush1.bf16.msra.mxu0 %v1153
        %1181 = vmatprep.subr.bf16.mxu0 0
        %1182 = vmatpush1.bf16.msra.mxu0 0
        %1183 = vmatprep.subr.bf16.mxu0 0
        %1184 = vmatpush1.bf16.msra.mxu0 0
        %1185 = vmatprep.subr.bf16.mxu0 0
        %1186 = vmatpush1.bf16.msra.mxu0 0
        %1187 = vmatprep.mubr.bf16.mxu0 %v950
        %1188 = vmatmul.mubr.bf16.gmra.mrb[0].mxu0 %v807
        %v1189 = vpop.f32.mrb[0].mxu0
        %v1190 = vadd.f32 %v1015, %v1189
        %v1191 = vpop.f32.mrb[0].mxu0
        %v1192 = vpop.f32.mrb[0].mxu0
        %v1193 = vadd.f32 %v1018, %v1192
        %v1194 = vpop.f32.mrb[0].mxu0
        %1195 = vmatprep.mubr.bf16.mxu0 %v953
        %1196 = vmatmul.mubr.bf16.gmra.mrb[0].mxu0 %v809
        %v1197 = vpop.f32.mrb[0].mxu0
        %v1198 = vadd.f32 %v1023, %v1197
        %v1199 = vpop.f32.mrb[0].mxu0
        %v1200 = vpop.f32.mrb[0].mxu0
        %v1201 = vadd.f32 %v1026, %v1200
        %v1202 = vpop.f32.mrb[0].mxu0
        %1203 = vmatprep.mubr.bf16.mxu0 %v956
        %1204 = vmatmul.mubr.bf16.gmra.mrb[0].mxu0 %v811
        %v1205 = vpop.f32.mrb[0].mxu0
        %v1206 = vadd.f32 %v1031, %v1205
        %v1207 = vpop.f32.mrb[0].mxu0
        %v1208 = vpop.f32.mrb[0].mxu0
        %v1209 = vadd.f32 %v1034, %v1208
        %v1210 = vpop.f32.mrb[0].mxu0
        %1211 = vmatprep.mubr.bf16.mxu0 %v959
        %1212 = vmatmul.mubr.bf16.gmra.mrb[0].mxu0 %v813
        %v1213 = vpop.f32.mrb[0].mxu0
        %v1214 = vadd.f32 %v1039, %v1213
        %v1215 = vpop.f32.mrb[0].mxu0
        %v1216 = vpop.f32.mrb[0].mxu0
        %v1217 = vadd.f32 %v1042, %v1216
        %v1218 = vpop.f32.mrb[0].mxu0
        %1219 = vmatprep.mubr.bf16.mxu0 %v962
        %1220 = vmatmul.mubr.bf16.gmra.mrb[0].mxu0 %v815
        %v1221 = vpop.f32.mrb[0].mxu0
        %v1222 = vadd.f32 %v1047, %v1221
        %v1223 = vpop.f32.mrb[0].mxu0
        %v1224 = vpop.f32.mrb[0].mxu0
        %v1225 = vadd.f32 %v1050, %v1224
        %v1226 = vpop.f32.mrb[0].mxu0
        %1227 = vmatprep.mubr.bf16.mxu0 %v965
        %1228 = vmatmul.mubr.bf16.gmra.mrb[0].mxu0 %v817
        %v1229 = vpop.f32.mrb[0].mxu0
        %v1230 = vadd.f32 %v1055, %v1229
        %v1231 = vpop.f32.mrb[0].mxu0
        %v1232 = vpop.f32.mrb[0].mxu0
        %v1233 = vadd.f32 %v1058, %v1232
        %v1234 = vpop.f32.mrb[0].mxu0
        %1235 = vmatprep.mubr.bf16.mxu0 %v968
        %1236 = vmatmul.mubr.bf16.gmra.mrb[0].mxu0 %v819
        %v1237 = vpop.f32.mrb[0].mxu0
        %v1238 = vadd.f32 %v1063, %v1237
        %v1239 = vpop.f32.mrb[0].mxu0
        %v1240 = vpop.f32.mrb[0].mxu0
        %v1241 = vadd.f32 %v1066, %v1240
        %v1242 = vpop.f32.mrb[0].mxu0
        %1243 = vmatprep.mubr.bf16.mxu0 %v971
        %1244 = vmatmul.mubr.bf16.gmra.mrb[0].mxu0 %v821
        %v1245 = vpop.f32.mrb[0].mxu0
        %v1246 = vadd.f32 %v1071, %v1245
        %v1247 = vpop.f32.mrb[0].mxu0
        %v1248 = vpop.f32.mrb[0].mxu0
        %v1249 = vadd.f32 %v1074, %v1248
        %v1250 = vpop.f32.mrb[0].mxu0
        %1251 = vdwg.mxu0
        %v1252 = vmax.f32 %v1190, %v1193
        %v1253 = vrot.slane %v1252, 4
        %v1254 = vmax.f32 %v1252, %v1253
        %v1255 = vrot.slane %v1254, 2
        %v1256 = vmax.f32 %v1254, %v1255
        %v1257 = vrot.slane %v1256, 1
        %v1258 = vmax.f32 %v1256, %v1257
        %v1259 = vmax.f32 %v1198, %v1201
        %v1260 = vrot.slane %v1259, 4
        %v1261 = vmax.f32 %v1259, %v1260
        %v1262 = vrot.slane %v1261, 2
        %v1263 = vmax.f32 %v1261, %v1262
        %v1264 = vrot.slane %v1263, 1
        %v1265 = vmax.f32 %v1263, %v1264
        %v1266 = vmax.f32 %v1206, %v1209
        %v1267 = vrot.slane %v1266, 4
        %v1268 = vmax.f32 %v1266, %v1267
        %v1269 = vrot.slane %v1268, 2
        %v1270 = vmax.f32 %v1268, %v1269
        %v1271 = vrot.slane %v1270, 1
        %v1272 = vmax.f32 %v1270, %v1271
        %v1273 = vmax.f32 %v1214, %v1217
        %v1274 = vrot.slane %v1273, 4
        %v1275 = vmax.f32 %v1273, %v1274
        %v1276 = vrot.slane %v1275, 2
        %v1277 = vmax.f32 %v1275, %v1276
        %v1278 = vrot.slane %v1277, 1
        %v1279 = vmax.f32 %v1277, %v1278
        %v1280 = vmax.f32 %v1222, %v1225
        %v1281 = vrot.slane %v1280, 4
        %v1282 = vmax.f32 %v1280, %v1281
        %v1283 = vrot.slane %v1282, 2
        %v1284 = vmax.f32 %v1282, %v1283
        %v1285 = vrot.slane %v1284, 1
        %v1286 = vmax.f32 %v1284, %v1285
        %v1287 = vmax.f32 %v1230, %v1233
        %v1288 = vrot.slane %v1287, 4
        %v1289 = vmax.f32 %v1287, %v1288
        %v1290 = vrot.slane %v1289, 2
        %v1291 = vmax.f32 %v1289, %v1290
        %v1292 = vrot.slane %v1291, 1
        %v1293 = vmax.f32 %v1291, %v1292
        %v1294 = vmax.f32 %v1238, %v1241
        %v1295 = vrot.slane %v1294, 4
        %v1296 = vmax.f32 %v1294, %v1295
        %v1297 = vrot.slane %v1296, 2
        %v1298 = vmax.f32 %v1296, %v1297
        %v1299 = vrot.slane %v1298, 1
        %v1300 = vmax.f32 %v1298, %v1299
        %v1301 = vmax.f32 %v1246, %v1249
        %v1302 = vrot.slane %v1301, 4
        %v1303 = vmax.f32 %v1301, %v1302
        %v1304 = vrot.slane %v1303, 2
        %v1305 = vmax.f32 %v1303, %v1304
        %v1306 = vrot.slane %v1305, 1
        %v1307 = vmax.f32 %v1305, %v1306
        %v1308 = vld [vmem:[%s3] sm:$0x1]
        %v1310 = vlaneseq
        %v1311 = vshrl.u32 %v1310, 7
        %v1312 = vsub.s32 0, %v1311
        %v1313 = vrot.slane %v1308, %v1312
        %v1315 = vadd.f32 %v1258, %v1313
        %v1316 = vadd.f32 %v1265, %v1313
        %v1317 = vadd.f32 %v1272, %v1313
        %v1318 = vadd.f32 %v1279, %v1313
        %v1319 = vadd.f32 %v1286, %v1313
        %v1320 = vadd.f32 %v1293, %v1313
        %v1321 = vadd.f32 %v1300, %v1313
        %v1322 = vadd.f32 %v1307, %v1313
        %v1323 = vmax.f32 %v1315, 0.0
        %v1324 = vmax.f32 %v1316, 0.0
        %v1325 = vmax.f32 %v1317, 0.0
        %v1326 = vmax.f32 %v1318, 0.0
        %v1327 = vmax.f32 %v1319, 0.0
        %v1328 = vmax.f32 %v1320, 0.0
        %v1329 = vmax.f32 %v1321, 0.0
        %v1330 = vmax.f32 %v1322, 0.0
        %v1331 = vld [vmem:[%s4] sm:$0xff]
        %v1332 = vld [vmem:[%s4 + $0x8] sm:$0xff]
        %v1333 = vld [vmem:[%s4 + $0x10] sm:$0xff]
        %v1334 = vld [vmem:[%s4 + $0x18] sm:$0xff]
        %v1335 = vld [vmem:[%s4 + $0x20] sm:$0xff]
        %v1336 = vld [vmem:[%s4 + $0x28] sm:$0xff]
        %v1337 = vld [vmem:[%s4 + $0x30] sm:$0xff]
        %v1338 = vld [vmem:[%s4 + $0x38] sm:$0xff]
        %v1339 = vld [vmem:[%s4 + $0x40] sm:$0xff]
        %v1340 = vld [vmem:[%s4 + $0x48] sm:$0xff]
        %v1341 = vld [vmem:[%s4 + $0x50] sm:$0xff]
        %v1342 = vld [vmem:[%s4 + $0x58] sm:$0xff]
        %v1343 = vld [vmem:[%s4 + $0x60] sm:$0xff]
        %v1344 = vld [vmem:[%s4 + $0x68] sm:$0xff]
        %v1345 = vld [vmem:[%s4 + $0x70] sm:$0xff]
        %v1346 = vld [vmem:[%s4 + $0x78] sm:$0xff]
        %v1347 = vld [vmem:[%s4 + $0x80] sm:$0xff]
        %v1348 = vld [vmem:[%s4 + $0x88] sm:$0xff]
        %v1349 = vld [vmem:[%s4 + $0x90] sm:$0xff]
        %v1350 = vld [vmem:[%s4 + $0x98] sm:$0xff]
        %v1351 = vld [vmem:[%s4 + $0xa0] sm:$0xff]
        %v1352 = vld [vmem:[%s4 + $0xa8] sm:$0xff]
        %v1353 = vld [vmem:[%s4 + $0xb0] sm:$0xff]
        %v1354 = vld [vmem:[%s4 + $0xb8] sm:$0xff]
        %v1355 = vld [vmem:[%s4 + $0xc0] sm:$0xff]
        %v1356 = vld [vmem:[%s4 + $0xc8] sm:$0xff]
        %v1357 = vld [vmem:[%s4 + $0xd0] sm:$0xff]
        %v1358 = vld [vmem:[%s4 + $0xd8] sm:$0xff]
        %v1359 = vld [vmem:[%s4 + $0xe0] sm:$0xff]
        %v1360 = vld [vmem:[%s4 + $0xe8] sm:$0xff]
        %v1361 = vld [vmem:[%s4 + $0xf0] sm:$0xff]
        %v1362 = vld [vmem:[%s4 + $0xf8] sm:$0xff]
        %v1363 = vld [vmem:[%s5] sm:$0x3]
        %v1365 = vlaneseq
        %v1366 = vshrl.u32 %v1365, 7
        %v1367 = vsub.s32 0, %v1366
        %v1368 = vrot.slane %v1363, %v1367
        %v1369 = vlaneseq
        %v1370 = vshrl.u32 %v1369, 7
        %v1371 = vsub.s32 1, %v1370
        %v1372 = vrot.slane %v1363, %v1371
        %v1383 = vrot.slane %v1324, 7
        %vm1384 = vcmask 1041409
        %v1385 = vsel %vm1384, %v1383, %v1323
        %v1386 = vrot.slane %v1325, 6
        %vm1387 = vcmask 1042434
        %v1388 = vsel %vm1387, %v1386, %v1385
        %v1389 = vrot.slane %v1326, 5
        %vm1390 = vcmask 1043459
        %v1391 = vsel %vm1390, %v1389, %v1388
        %v1392 = vrot.slane %v1327, 4
        %vm1393 = vcmask 1044484
        %v1394 = vsel %vm1393, %v1392, %v1391
        %v1395 = vrot.slane %v1328, 3
        %vm1396 = vcmask 1045509
        %v1397 = vsel %vm1396, %v1395, %v1394
        %v1398 = vrot.slane %v1329, 2
        %vm1399 = vcmask 1046534
        %v1400 = vsel %vm1399, %v1398, %v1397
        %v1401 = vrot.slane %v1330, 1
        %vm1402 = vcmask 1047559
        %v1403 = vsel %vm1402, %v1401, %v1400
        %1405 = vmatprep.subr.mxu0 %v1332
        %1406 = vmatpush1.msra.mxu0 %v1331
        %1407 = vmatprep.subr.mxu0 %v1334
        %1408 = vmatpush1.msra.mxu0 %v1333
        %1409 = vmatprep.subr.mxu0 %v1336
        %1410 = vmatpush1.msra.mxu0 %v1335
        %1411 = vmatprep.subr.mxu0 %v1338
        %1412 = vmatpush1.msra.mxu0 %v1337
        %1413 = vmatprep.subr.mxu0 %v1340
        %1414 = vmatpush1.msra.mxu0 %v1339
        %1415 = vmatprep.subr.mxu0 %v1342
        %1416 = vmatpush1.msra.mxu0 %v1341
        %1417 = vmatprep.subr.mxu0 %v1344
        %1418 = vmatpush1.msra.mxu0 %v1343
        %1419 = vmatprep.subr.mxu0 %v1346
        %1420 = vmatpush1.msra.mxu0 %v1345
        %1421 = vmatprep.subr.mxu0 %v1348
        %1422 = vmatpush1.msra.mxu0 %v1347
        %1423 = vmatprep.subr.mxu0 %v1350
        %1424 = vmatpush1.msra.mxu0 %v1349
        %1425 = vmatprep.subr.mxu0 %v1352
        %1426 = vmatpush1.msra.mxu0 %v1351
        %1427 = vmatprep.subr.mxu0 %v1354
        %1428 = vmatpush1.msra.mxu0 %v1353
        %1429 = vmatprep.subr.mxu0 %v1356
        %1430 = vmatpush1.msra.mxu0 %v1355
        %1431 = vmatprep.subr.mxu0 %v1358
        %1432 = vmatpush1.msra.mxu0 %v1357
        %1433 = vmatprep.subr.mxu0 %v1360
        %1434 = vmatpush1.msra.mxu0 %v1359
        %1435 = vmatprep.subr.mxu0 %v1362
        %1436 = vmatpush1.msra.mxu0 %v1361
        %1437 = vmatprep.subr.mxu0 0.0
        %1438 = vmatpush1.msra.mxu0 0.0
        %1439 = vmatprep.subr.mxu0 0.0
        %1440 = vmatpush1.msra.mxu0 0.0
        %1441 = vmatprep.subr.mxu0 0.0
        %1442 = vmatpush1.msra.mxu0 0.0
        %1443 = vmatprep.subr.mxu0 0.0
        %1444 = vmatpush1.msra.mxu0 0.0
        %1445 = vmatprep.subr.mxu0 0.0
        %1446 = vmatpush1.msra.mxu0 0.0
        %1447 = vmatprep.subr.mxu0 0.0
        %1448 = vmatpush1.msra.mxu0 0.0
        %1449 = vmatprep.subr.mxu0 0.0
        %1450 = vmatpush1.msra.mxu0 0.0
        %1451 = vmatprep.subr.mxu0 0.0
        %1452 = vmatpush1.msra.mxu0 0.0
        %1453 = vmatprep.subr.mxu0 0.0
        %1454 = vmatpush1.msra.mxu0 0.0
        %1455 = vmatprep.subr.mxu0 0.0
        %1456 = vmatpush1.msra.mxu0 0.0
        %1457 = vmatprep.subr.mxu0 0.0
        %1458 = vmatpush1.msra.mxu0 0.0
        %1459 = vmatprep.subr.mxu0 0.0
        %1460 = vmatpush1.msra.mxu0 0.0
        %1461 = vmatprep.subr.mxu0 0.0
        %1462 = vmatpush1.msra.mxu0 0.0
        %1463 = vmatprep.subr.mxu0 0.0
        %1464 = vmatpush1.msra.mxu0 0.0
        %1465 = vmatprep.subr.mxu0 0.0
        %1466 = vmatpush1.msra.mxu0 0.0
        %1467 = vmatprep.subr.mxu0 0.0
        %1468 = vmatpush1.msra.mxu0 0.0
        %1469 = vmatprep.mubr.f32.mxu0 0.0
        %1470 = vmatmul.mubr.f32.gmra.mrb[0].mxu0 %v1403
        %v1471 = vpop.f32.mrb[0].mxu0
        %v1472 = vadd.f32 %v1368, %v1471
        %v1473 = vpop.f32.mrb[0].mxu0
        %v1474 = vadd.f32 %v1372, %v1473
        %1475 = vdwg.mxu0
        %v1476 = vmax.f32 %v1472, 0.0
        %v1477 = vxor.u32 %v1474, 2147483648
        %v1478 = vmul.f32 %v1477, 1.442695
        %v1479 = vpow.pop %v1478
        %v1480 = vadd.f32 %v1479, 1.0
        %v1481 = vrcp.pop %v1480
        %v1482 = vmul.f32 1.0, %v1481
        %v1483 = vmul.f32 %v1482, %v1403
        %v1484 = vsub.f32 1.0, %v1482
        %v1485 = vmul.f32 %v1484, %v1476
        %v1486 = vadd.f32 %v1483, %v1485
        %v1487 = vld [vmem:[#allocation7] sm:$0xff]
        %v1488 = vld [vmem:[#allocation7 + $0x8] sm:$0xff]
        %v1489 = vld [vmem:[#allocation7 + $0x10] sm:$0xff]
        %v1490 = vld [vmem:[#allocation7 + $0x18] sm:$0xff]
        %v1491 = vld [vmem:[#allocation7 + $0x20] sm:$0xff]
        %v1492 = vld [vmem:[#allocation7 + $0x28] sm:$0xff]
        %v1493 = vld [vmem:[#allocation7 + $0x30] sm:$0xff]
        %v1494 = vld [vmem:[#allocation7 + $0x38] sm:$0xff]
        %v1495 = vld [vmem:[#allocation7 + $0x40] sm:$0xff]
        %v1496 = vld [vmem:[#allocation7 + $0x48] sm:$0xff]
        %v1497 = vld [vmem:[#allocation7 + $0x50] sm:$0xff]
        %v1498 = vld [vmem:[#allocation7 + $0x58] sm:$0xff]
        %v1499 = vld [vmem:[#allocation7 + $0x60] sm:$0xff]
        %v1500 = vld [vmem:[#allocation7 + $0x68] sm:$0xff]
        %v1501 = vld [vmem:[#allocation7 + $0x70] sm:$0xff]
        %v1502 = vld [vmem:[#allocation7 + $0x78] sm:$0xff]
        %v1503 = vld [vmem:[#allocation7 + $0x80] sm:$0xff]
        %v1504 = vld [vmem:[#allocation7 + $0x88] sm:$0xff]
        %v1505 = vld [vmem:[#allocation7 + $0x90] sm:$0xff]
        %v1506 = vld [vmem:[#allocation7 + $0x98] sm:$0xff]
        %v1507 = vld [vmem:[#allocation7 + $0xa0] sm:$0xff]
        %v1508 = vld [vmem:[#allocation7 + $0xa8] sm:$0xff]
        %v1509 = vld [vmem:[#allocation7 + $0xb0] sm:$0xff]
        %v1510 = vld [vmem:[#allocation7 + $0xb8] sm:$0xff]
        %v1511 = vld [vmem:[#allocation7 + $0xc0] sm:$0xff]
        %v1512 = vld [vmem:[#allocation7 + $0xc8] sm:$0xff]
        %v1513 = vld [vmem:[#allocation7 + $0xd0] sm:$0xff]
        %v1514 = vld [vmem:[#allocation7 + $0xd8] sm:$0xff]
        %v1515 = vld [vmem:[#allocation7 + $0xe0] sm:$0xff]
        %v1516 = vld [vmem:[#allocation7 + $0xe8] sm:$0xff]
        %v1517 = vld [vmem:[#allocation7 + $0xf0] sm:$0xff]
        %v1518 = vld [vmem:[#allocation7 + $0xf8] sm:$0xff]
        %v1519 = vld [vmem:[%s7] sm:$0x3]
        %v1521 = vlaneseq
        %v1522 = vshrl.u32 %v1521, 7
        %v1523 = vsub.s32 0, %v1522
        %v1524 = vrot.slane %v1519, %v1523
        %v1525 = vlaneseq
        %v1526 = vshrl.u32 %v1525, 7
        %v1527 = vsub.s32 1, %v1526
        %v1528 = vrot.slane %v1519, %v1527
        %1531 = vmatprep.subr.mxu0 %v1488
        %1532 = vmatpush1.msra.mxu0 %v1487
        %1533 = vmatprep.subr.mxu0 %v1490
        %1534 = vmatpush1.msra.mxu0 %v1489
        %1535 = vmatprep.subr.mxu0 %v1492
        %1536 = vmatpush1.msra.mxu0 %v1491
        %1537 = vmatprep.subr.mxu0 %v1494
        %1538 = vmatpush1.msra.mxu0 %v1493
        %1539 = vmatprep.subr.mxu0 %v1496
        %1540 = vmatpush1.msra.mxu0 %v1495
        %1541 = vmatprep.subr.mxu0 %v1498
        %1542 = vmatpush1.msra.mxu0 %v1497
        %1543 = vmatprep.subr.mxu0 %v1500
        %1544 = vmatpush1.msra.mxu0 %v1499
        %1545 = vmatprep.subr.mxu0 %v1502
        %1546 = vmatpush1.msra.mxu0 %v1501
        %1547 = vmatprep.subr.mxu0 %v1504
        %1548 = vmatpush1.msra.mxu0 %v1503
        %1549 = vmatprep.subr.mxu0 %v1506
        %1550 = vmatpush1.msra.mxu0 %v1505
        %1551 = vmatprep.subr.mxu0 %v1508
        %1552 = vmatpush1.msra.mxu0 %v1507
        %1553 = vmatprep.subr.mxu0 %v1510
        %1554 = vmatpush1.msra.mxu0 %v1509
        %1555 = vmatprep.subr.mxu0 %v1512
        %1556 = vmatpush1.msra.mxu0 %v1511
        %1557 = vmatprep.subr.mxu0 %v1514
        %1558 = vmatpush1.msra.mxu0 %v1513
        %1559 = vmatprep.subr.mxu0 %v1516
        %1560 = vmatpush1.msra.mxu0 %v1515
        %1561 = vmatprep.subr.mxu0 %v1518
        %1562 = vmatpush1.msra.mxu0 %v1517
        %1563 = vmatprep.subr.mxu0 0.0
        %1564 = vmatpush1.msra.mxu0 0.0
        %1565 = vmatprep.subr.mxu0 0.0
        %1566 = vmatpush1.msra.mxu0 0.0
        %1567 = vmatprep.subr.mxu0 0.0
        %1568 = vmatpush1.msra.mxu0 0.0
        %1569 = vmatprep.subr.mxu0 0.0
        %1570 = vmatpush1.msra.mxu0 0.0
        %1571 = vmatprep.subr.mxu0 0.0
        %1572 = vmatpush1.msra.mxu0 0.0
        %1573 = vmatprep.subr.mxu0 0.0
        %1574 = vmatpush1.msra.mxu0 0.0
        %1575 = vmatprep.subr.mxu0 0.0
        %1576 = vmatpush1.msra.mxu0 0.0
        %1577 = vmatprep.subr.mxu0 0.0
        %1578 = vmatpush1.msra.mxu0 0.0
        %1579 = vmatprep.subr.mxu0 0.0
        %1580 = vmatpush1.msra.mxu0 0.0
        %1581 = vmatprep.subr.mxu0 0.0
        %1582 = vmatpush1.msra.mxu0 0.0
        %1583 = vmatprep.subr.mxu0 0.0
        %1584 = vmatpush1.msra.mxu0 0.0
        %1585 = vmatprep.subr.mxu0 0.0
        %1586 = vmatpush1.msra.mxu0 0.0
        %1587 = vmatprep.subr.mxu0 0.0
        %1588 = vmatpush1.msra.mxu0 0.0
        %1589 = vmatprep.subr.mxu0 0.0
        %1590 = vmatpush1.msra.mxu0 0.0
        %1591 = vmatprep.subr.mxu0 0.0
        %1592 = vmatpush1.msra.mxu0 0.0
        %1593 = vmatprep.subr.mxu0 0.0
        %1594 = vmatpush1.msra.mxu0 0.0
        %1595 = vmatprep.mubr.f32.mxu0 0.0
        %1596 = vmatmul.mubr.f32.gmra.mrb[0].mxu0 %v1486
        %v1597 = vpop.f32.mrb[0].mxu0
        %v1598 = vadd.f32 %v1524, %v1597
        %v1599 = vpop.f32.mrb[0].mxu0
        %v1600 = vadd.f32 %v1528, %v1599
        %1601 = vdwg.mxu0
        %v1602 = vmax.f32 %v1598, 0.0
        %v1603 = vxor.u32 %v1600, 2147483648
        %v1604 = vmul.f32 %v1603, 1.442695
        %v1605 = vpow.pop %v1604
        %v1606 = vadd.f32 %v1605, 1.0
        %v1607 = vrcp.pop %v1606
        %v1608 = vmul.f32 1.0, %v1607
        %v1609 = vmul.f32 %v1608, %v1486
        %v1610 = vsub.f32 1.0, %v1608
        %v1611 = vmul.f32 %v1610, %v1602
        %v1612 = vadd.f32 %v1609, %v1611
        %v1613 = vld [vmem:[#allocation8] sm:$0xff]
        %v1614 = vld [vmem:[#allocation8 + $0x8] sm:$0xff]
        %v1615 = vld [vmem:[#allocation8 + $0x10] sm:$0xff]
        %v1616 = vld [vmem:[#allocation8 + $0x18] sm:$0xff]
        %v1617 = vld [vmem:[#allocation8 + $0x20] sm:$0xff]
        %v1618 = vld [vmem:[#allocation8 + $0x28] sm:$0xff]
        %v1619 = vld [vmem:[#allocation8 + $0x30] sm:$0xff]
        %v1620 = vld [vmem:[#allocation8 + $0x38] sm:$0xff]
        %v1621 = vld [vmem:[#allocation8 + $0x40] sm:$0xff]
        %v1622 = vld [vmem:[#allocation8 + $0x48] sm:$0xff]
        %v1623 = vld [vmem:[#allocation8 + $0x50] sm:$0xff]
        %v1624 = vld [vmem:[#allocation8 + $0x58] sm:$0xff]
        %v1625 = vld [vmem:[#allocation8 + $0x60] sm:$0xff]
        %v1626 = vld [vmem:[#allocation8 + $0x68] sm:$0xff]
        %v1627 = vld [vmem:[#allocation8 + $0x70] sm:$0xff]
        %v1628 = vld [vmem:[#allocation8 + $0x78] sm:$0xff]
        %v1629 = vld [vmem:[%s9] sm:$0x1]
        %v1631 = vlaneseq
        %v1632 = vshrl.u32 %v1631, 7
        %v1633 = vsub.s32 0, %v1632
        %v1634 = vrot.slane %v1629, %v1633
        %1636 = vmatprep.subr.mxu0 0.0
        %1637 = vmatpush1.msra.mxu0 %v1613
        %1638 = vmatprep.subr.mxu0 0.0
        %1639 = vmatpush1.msra.mxu0 %v1614
        %1640 = vmatprep.subr.mxu0 0.0
        %1641 = vmatpush1.msra.mxu0 %v1615
        %1642 = vmatprep.subr.mxu0 0.0
        %1643 = vmatpush1.msra.mxu0 %v1616
        %1644 = vmatprep.subr.mxu0 0.0
        %1645 = vmatpush1.msra.mxu0 %v1617
        %1646 = vmatprep.subr.mxu0 0.0
        %1647 = vmatpush1.msra.mxu0 %v1618
        %1648 = vmatprep.subr.mxu0 0.0
        %1649 = vmatpush1.msra.mxu0 %v1619
        %1650 = vmatprep.subr.mxu0 0.0
        %1651 = vmatpush1.msra.mxu0 %v1620
        %1652 = vmatprep.subr.mxu0 0.0
        %1653 = vmatpush1.msra.mxu0 %v1621
        %1654 = vmatprep.subr.mxu0 0.0
        %1655 = vmatpush1.msra.mxu0 %v1622
        %1656 = vmatprep.subr.mxu0 0.0
        %1657 = vmatpush1.msra.mxu0 %v1623
        %1658 = vmatprep.subr.mxu0 0.0
        %1659 = vmatpush1.msra.mxu0 %v1624
        %1660 = vmatprep.subr.mxu0 0.0
        %1661 = vmatpush1.msra.mxu0 %v1625
        %1662 = vmatprep.subr.mxu0 0.0
        %1663 = vmatpush1.msra.mxu0 %v1626
        %1664 = vmatprep.subr.mxu0 0.0
        %1665 = vmatpush1.msra.mxu0 %v1627
        %1666 = vmatprep.subr.mxu0 0.0
        %1667 = vmatpush1.msra.mxu0 %v1628
        %1668 = vmatprep.subr.mxu0 0.0
        %1669 = vmatpush1.msra.mxu0 0.0
        %1670 = vmatprep.subr.mxu0 0.0
        %1671 = vmatpush1.msra.mxu0 0.0
        %1672 = vmatprep.subr.mxu0 0.0
        %1673 = vmatpush1.msra.mxu0 0.0
        %1674 = vmatprep.subr.mxu0 0.0
        %1675 = vmatpush1.msra.mxu0 0.0
        %1676 = vmatprep.subr.mxu0 0.0
        %1677 = vmatpush1.msra.mxu0 0.0
        %1678 = vmatprep.subr.mxu0 0.0
        %1679 = vmatpush1.msra.mxu0 0.0
        %1680 = vmatprep.subr.mxu0 0.0
        %1681 = vmatpush1.msra.mxu0 0.0
        %1682 = vmatprep.subr.mxu0 0.0
        %1683 = vmatpush1.msra.mxu0 0.0
        %1684 = vmatprep.subr.mxu0 0.0
        %1685 = vmatpush1.msra.mxu0 0.0
        %1686 = vmatprep.subr.mxu0 0.0
        %1687 = vmatpush1.msra.mxu0 0.0
        %1688 = vmatprep.subr.mxu0 0.0
        %1689 = vmatpush1.msra.mxu0 0.0
        %1690 = vmatprep.subr.mxu0 0.0
        %1691 = vmatpush1.msra.mxu0 0.0
        %1692 = vmatprep.subr.mxu0 0.0
        %1693 = vmatpush1.msra.mxu0 0.0
        %1694 = vmatprep.subr.mxu0 0.0
        %1695 = vmatpush1.msra.mxu0 0.0
        %1696 = vmatprep.subr.mxu0 0.0
        %1697 = vmatpush1.msra.mxu0 0.0
        %1698 = vmatprep.subr.mxu0 0.0
        %1699 = vmatpush1.msra.mxu0 0.0
        %1700 = vmatprep.mubr.f32.mxu0 0.0
        %1701 = vmatmul.mubr.f32.gmra.mrb[0].mxu0 %v1612
        %v1702 = vpop.f32.mrb[0].mxu0
        %v1703 = vadd.f32 %v1634, %v1702
        %v1704 = vpop.f32.mrb[0].mxu0
        %1705 = vdwg.mxu0
        %1706 = vst [vmem:[%s412] sm:$0xff] %v1703
        %s1707 = sand.u32 %s250, 1
        %s1708 = scalar_lea.sflag [#allocation4], %s1707
        %s1709 = sand.u32 %s250, 1
        %s1710 = smul.addr %s1709, 8
        %s1711 = scalar_lea.vmem [#allocation10], %s1710
        // Predicated region
        $region77: #{tpu_custom_call.1} parent=59 // pred_check
          %p1712 = pneg %p260
        $region78: #{tpu_custom_call.1} parent=59 // pred_check_branch
          %1714 = sbr.rel (%p1712) target = $region80
        $region79: #{tpu_custom_call.1} parent=59 // pred_region
          %s1716 = ssub.s32 128, 128
          %1717 = vsyncadd %s1708, %s1716
          %s1718 = smul.addr %s27, 128
          %s1719 = scalar_lea.hbm %s10, %s1718
          %s1721 = sshll.u32 %s1711, 4
          %s1722 = int_to_ptr.vmem [resolvable:$true] %s1721
          %1724 = dma.vmem_to_hbm [thread:$0]  %s1722, 128, %s1719, %s1708
        $region80: #{tpu_custom_call.1} parent=59 // pred_fallthru
          _
      $region60: #{tpu_custom_call.1} parent=5 // pred_fallthru
        _
      %p1725 = scmp.le.s32.totalorder 2, %s22
      // Predicated region
      $region81: #{tpu_custom_call.1} parent=5 // pred_check
        %p1726 = pneg %p1725
      $region82: #{tpu_custom_call.1} parent=5 // pred_check_branch
        %1728 = sbr.rel (%p1726) target = $region84
      $region83: #{tpu_custom_call.1} parent=5 // pred_region
        %s1729 = ssub.s32 %s22, 2
        // Predicated region
        $region85: #{tpu_custom_call.1} parent=83 // pred_check
          %p1730 = pneg %p266
        $region86: #{tpu_custom_call.1} parent=83 // pred_check_branch
          %1732 = sbr.rel (%p1730) target = $region88
        $region87: #{tpu_custom_call.1} parent=83 // pred_region
          %s1733 = sand.u32 %s251, 1
          %s1734 = scalar_lea.sflag [#allocation4], %s1733
          %s1735 = sand.u32 %s251, 1
          %s1736 = smul.addr %s1735, 8
          %s1737 = scalar_lea.vmem [#allocation10], %s1736
          %1738 = dma.done %s1734, 128
        $region88: #{tpu_custom_call.1} parent=83 // pred_fallthru
          _
      $region84: #{tpu_custom_call.1} parent=5 // pred_fallthru
        _
    $region6: #{tpu_custom_call.1} parent=1 // loop_footer
      %s26 = sadd.s32 1, %s22
    $region7: #{tpu_custom_call.1} parent=1 // loop_footer_branch
      %21 = sbr.rel target = $region3
    $region8: #{tpu_custom_call.1} parent=1 // loop_exit
      _
    %1739 = vsyncpa [#allocation3], 1
    %s1740 = scalar_lea.sflag [#allocation3], 1
    %1741 = vsyncpa %s1740, 1
    %1742 = vsyncpa [#allocation6], 1
    %1743 = vsyncpa [#allocation9], 1
    %1744 = vsyncpa [#allocation4], 1
    %s1745 = scalar_lea.sflag [#allocation4], 1
    %1746 = vsyncpa %s1745, 1

// kernel: tpu_custom_call.1
$region0: #{tpu_custom_call.1}
  #allocation0 [shape = 'u32[]', space=smem, size = 0x4, offset = 0x4, fixed_abs, tag = 'smem constant byte address 0x4 - core index']
  #allocation1 [shape = 'u32[144,128]{1,0:T(1,128)}', space=vmem, size = 0x12000, scoped, tag = 'internal scratch']
  %s0 = inlined_call_operand.vmem [shape: s32[256,3], index: 0, kind: input, shape index: {}]
  %s1 = inlined_call_operand.hbm [shape: bf16[195,128], index: 1, kind: input, shape index: {}]
  %s2 = inlined_call_operand.hbm [shape: bf16[195,128], index: 2, kind: input, shape index: {}]
  %s3 = inlined_call_operand.vmem [shape: f32[1,128], index: 3, kind: input, shape index: {}]
  %s4 = inlined_call_operand.vmem [shape: f32[128,256], index: 4, kind: input, shape index: {}]
  %s5 = inlined_call_operand.vmem [shape: f32[1,256], index: 5, kind: input, shape index: {}]
  %s6 = inlined_call_operand.hbm [shape: f32[128,256], index: 6, kind: input, shape index: {}]
  %s7 = inlined_call_operand.vmem [shape: f32[1,256], index: 7, kind: input, shape index: {}]
  %s8 = inlined_call_operand.hbm [shape: f32[128,128], index: 8, kind: input, shape index: {}]
  %s9 = inlined_call_operand.vmem [shape: f32[1,128], index: 9, kind: input, shape index: {}]
  %s10 = inlined_call_operand.hbm [shape: f32[16,128], index: 10, kind: output, shape index: {}]
  %s11 = sld [smem:[#allocation0]]
  $region89: #{tpu_custom_call.1} parent=0
    _
  %s13 = ssub.s32 1, %s11
  %s14 = scalar_select 0, %s13, %s11
  $region1: #{tpu_custom_call.1} parent=0
    #allocation2 [shape = 'u8[51200]{0}', space=vmem, size = 0xc800, scoped, tag = 'input window, operand 1, single buffered']
    #allocation3 [shape = 's32[2]{0}', space=sflag, size = 0x8, scoped, tag = 'scoped memory for tpu_custom_call.1']
    #allocation4 [shape = 's32[2]{0}', space=sflag, size = 0x8, scoped, tag = 'scoped memory for tpu_custom_call.1']
    #allocation5 [shape = 'u8[51200]{0}', space=vmem, size = 0xc800, scoped, tag = 'input window, operand 2, single buffered']
    #allocation6 [shape = 's32[1]{0}', space=sflag, size = 0x4, scoped, tag = 'scoped memory for tpu_custom_call.1']
    #allocation7 [shape = 'u8[131072]{0}', space=vmem, size = 0x20000, scoped, tag = 'input window, operand 6, single buffered']
    #allocation8 [shape = 'u8[65536]{0}', space=vmem, size = 0x10000, scoped, tag = 'input window, operand 8, single buffered']
    #allocation9 [shape = 's32[1]{0}', space=sflag, size = 0x4, scoped, tag = 'scoped memory for tpu_custom_call.1']
    #allocation10 [shape = 'u8[8192]{0}', space=vmem, size = 0x2000, scoped, tag = 'output window, operand 0']
    %15 = vsyncpa [#allocation3], 0
    %16 = vsyncpa [#allocation6], 0
    %17 = vsyncpa [#allocation9], 0
    %18 = vsyncpa [#allocation4], 0
    %s19 = scalar_lea.sflag [#allocation4], 1
    %20 = vsyncpa %s19, 0
    loop: start=0, step=1, limit=4
    $region2: #{tpu_custom_call.1} parent=1 // loop_pre_header
      _
    $region3: #{tpu_custom_call.1} parent=1 // loop_header
      %s22 = sphi 0, %s26
      %p23 = scmp.ge.s32.totalorder %s22, 4
      %s32 = sphi 0, %s34
      %s35 = sphi 0, %s32
      %s36 = sphi 0, %s35
      %s52 = sphi 0, %s36
      %s56 = sphi 0, %s56
      %s58 = sphi 0, %s56
      %s59 = sphi 0, %s58
      %s73 = sphi 0, %s59
      %s77 = sphi 0, %s77
      %s79 = sphi 0, %s77
      %s80 = sphi 0, %s79
      %s94 = sphi 0, %s80
      %s98 = sphi 0, %s98
      %s100 = sphi 0, %s98
      %s101 = sphi 0, %s100
      %s115 = sphi 0, %s101
      %s119 = sphi 0, %s119
      %s121 = sphi 0, %s119
      %s122 = sphi 0, %s121
      %s136 = sphi 0, %s122
      %s140 = sphi 0, %s140
      %s142 = sphi 0, %s140
      %s143 = sphi 0, %s142
      %s157 = sphi 0, %s143
      %s161 = sphi 0, %s161
      %s163 = sphi 0, %s161
      %s164 = sphi 0, %s163
      %s178 = sphi 0, %s164
      %s182 = sphi 0, %s182
      %s184 = sphi 0, %s182
      %s185 = sphi 0, %s184
      %s199 = sphi 0, %s185
      %s203 = sphi 0, %s203
      %s205 = sphi 0, %s203
      %s206 = sphi 0, %s205
      %s220 = sphi 0, %s206
      %s224 = sphi 0, %s224
      %s226 = sphi 0, %s224
      %s227 = sphi 0, %s226
      %s241 = sphi 0, %s227
      %s247 = sphi 0, %s249
      %s250 = sphi 0, %s247
      %s251 = sphi 0, %s250
      %s267 = sphi 0, %s251
    $region4: #{tpu_custom_call.1} parent=1 // loop_header_branch
      %25 = sbr.rel (%p23) target = $region8
    $region5: #{tpu_custom_call.1} parent=1 // loop_body
      %s27 = ssub.s32 %s22, 1
      %s28 = ssub.s32 %s22, 2
      %s29 = sadd.s32 %s22, 1
      %s30 = ssub.s32 %s22, %s29
      %p31 = scmp.eq.s32.totalorder %s30, 0
      %s33 = sadd.s32 %s32, 1
      %s34 = scalar_select %p31, %s32, %s33
      %p37 = pneg %p31
      %p38 = scmp.eq.s32.totalorder %s22, 1
      %p39 = por %p37, %p38
      %p40 = scmp.ne.s32.totalorder %s32, %s35
      %p41 = scmp.eq.s32.totalorder %s22, 0
      %p42 = por %p40, %p41
      %p43 = scmp.ne.s32.totalorder %s32, %s35
      %p44 = scmp.eq.s32.totalorder %s27, 1
      %p45 = por %p43, %p44
      %p46 = scmp.ne.s32.totalorder %s35, %s36
      %p47 = scmp.eq.s32.totalorder %s27, 0
      %p48 = por %p46, %p47
      %p49 = scmp.ne.s32.totalorder %s35, %s36
      %p50 = scmp.eq.s32.totalorder %s28, 1
      %p51 = por %p49, %p50
      %p53 = scmp.ne.s32.totalorder %s36, %s52
      %p54 = scmp.eq.s32.totalorder %s28, 0
      %p55 = por %p53, %p54
      %s57 = sadd.s32 %s56, 1
      %p60 = scmp.eq.s32.totalorder %s22, 1
      %p61 = scmp.ne.s32.totalorder %s56, %s58
      %p62 = scmp.eq.s32.totalorder %s22, 0
      %p63 = por %p61, %p62
      %p64 = scmp.ne.s32.totalorder %s56, %s58
      %p65 = scmp.eq.s32.totalorder %s27, 1
      %p66 = por %p64, %p65
      %p67 = scmp.ne.s32.totalorder %s58, %s59
      %p68 = scmp.eq.s32.totalorder %s27, 0
      %p69 = por %p67, %p68
      %p70 = scmp.ne.s32.totalorder %s58, %s59
      %p71 = scmp.eq.s32.totalorder %s28, 1
      %p72 = por %p70, %p71
      %p74 = scmp.ne.s32.totalorder %s59, %s73
      %p75 = scmp.eq.s32.totalorder %s28, 0
      %p76 = por %p74, %p75
      %s78 = sadd.s32 %s77, 1
      %p81 = scmp.eq.s32.totalorder %s22, 1
      %p82 = scmp.ne.s32.totalorder %s77, %s79
      %p83 = scmp.eq.s32.totalorder %s22, 0
      %p84 = por %p82, %p83
      %p85 = scmp.ne.s32.totalorder %s77, %s79
      %p86 = scmp.eq.s32.totalorder %s27, 1
      %p87 = por %p85, %p86
      %p88 = scmp.ne.s32.totalorder %s79, %s80
      %p89 = scmp.eq.s32.totalorder %s27, 0
      %p90 = por %p88, %p89
      %p91 = scmp.ne.s32.totalorder %s79, %s80
      %p92 = scmp.eq.s32.totalorder %s28, 1
      %p93 = por %p91, %p92
      %p95 = scmp.ne.s32.totalorder %s80, %s94
      %p96 = scmp.eq.s32.totalorder %s28, 0
      %p97 = por %p95, %p96
      %s99 = sadd.s32 %s98, 1
      %p102 = scmp.eq.s32.totalorder %s22, 1
      %p103 = scmp.ne.s32.totalorder %s98, %s100
      %p104 = scmp.eq.s32.totalorder %s22, 0
      %p105 = por %p103, %p104
      %p106 = scmp.ne.s32.totalorder %s98, %s100
      %p107 = scmp.eq.s32.totalorder %s27, 1
      %p108 = por %p106, %p107
      %p109 = scmp.ne.s32.totalorder %s100, %s101
      %p110 = scmp.eq.s32.totalorder %s27, 0
      %p111 = por %p109, %p110
      %p112 = scmp.ne.s32.totalorder %s100, %s101
      %p113 = scmp.eq.s32.totalorder %s28, 1
      %p114 = por %p112, %p113
      %p116 = scmp.ne.s32.totalorder %s101, %s115
      %p117 = scmp.eq.s32.totalorder %s28, 0
      %p118 = por %p116, %p117
      %s120 = sadd.s32 %s119, 1
      %p123 = scmp.eq.s32.totalorder %s22, 1
      %p124 = scmp.ne.s32.totalorder %s119, %s121
      %p125 = scmp.eq.s32.totalorder %s22, 0
      %p126 = por %p124, %p125
      %p127 = scmp.ne.s32.totalorder %s119, %s121
      %p128 = scmp.eq.s32.totalorder %s27, 1
      %p129 = por %p127, %p128
      %p130 = scmp.ne.s32.totalorder %s121, %s122
      %p131 = scmp.eq.s32.totalorder %s27, 0
      %p132 = por %p130, %p131
      %p133 = scmp.ne.s32.totalorder %s121, %s122
      %p134 = scmp.eq.s32.totalorder %s28, 1
      %p135 = por %p133, %p134
      %p137 = scmp.ne.s32.totalorder %s122, %s136
      %p138 = scmp.eq.s32.totalorder %s28, 0
      %p139 = por %p137, %p138
      %s141 = sadd.s32 %s140, 1
      %p144 = scmp.eq.s32.totalorder %s22, 1
      %p145 = scmp.ne.s32.totalorder %s140, %s142
      %p146 = scmp.eq.s32.totalorder %s22, 0
      %p147 = por %p145, %p146
      %p148 = scmp.ne.s32.totalorder %s140, %s142
      %p149 = scmp.eq.s32.totalorder %s27, 1
      %p150 = por %p148, %p149
      %p151 = scmp.ne.s32.totalorder %s142, %s143
      %p152 = scmp.eq.s32.totalorder %s27, 0
      %p153 = por %p151, %p152
      %p154 = scmp.ne.s32.totalorder %s142, %s143
      %p155 = scmp.eq.s32.totalorder %s28, 1
      %p156 = por %p154, %p155
      %p158 = scmp.ne.s32.totalorder %s143, %s157
      %p159 = scmp.eq.s32.totalorder %s28, 0
      %p160 = por %p158, %p159
      %s162 = sadd.s32 %s161, 1
      %p165 = scmp.eq.s32.totalorder %s22, 1
      %p166 = scmp.ne.s32.totalorder %s161, %s163
      %p167 = scmp.eq.s32.totalorder %s22, 0
      %p168 = por %p166, %p167
      %p169 = scmp.ne.s32.totalorder %s161, %s163
      %p170 = scmp.eq.s32.totalorder %s27, 1
      %p171 = por %p169, %p170
      %p172 = scmp.ne.s32.totalorder %s163, %s164
      %p173 = scmp.eq.s32.totalorder %s27, 0
      %p174 = por %p172, %p173
      %p175 = scmp.ne.s32.totalorder %s163, %s164
      %p176 = scmp.eq.s32.totalorder %s28, 1
      %p177 = por %p175, %p176
      %p179 = scmp.ne.s32.totalorder %s164, %s178
      %p180 = scmp.eq.s32.totalorder %s28, 0
      %p181 = por %p179, %p180
      %s183 = sadd.s32 %s182, 1
      %p186 = scmp.eq.s32.totalorder %s22, 1
      %p187 = scmp.ne.s32.totalorder %s182, %s184
      %p188 = scmp.eq.s32.totalorder %s22, 0
      %p189 = por %p187, %p188
      %p190 = scmp.ne.s32.totalorder %s182, %s184
      %p191 = scmp.eq.s32.totalorder %s27, 1
      %p192 = por %p190, %p191
      %p193 = scmp.ne.s32.totalorder %s184, %s185
      %p194 = scmp.eq.s32.totalorder %s27, 0
      %p195 = por %p193, %p194
      %p196 = scmp.ne.s32.totalorder %s184, %s185
      %p197 = scmp.eq.s32.totalorder %s28, 1
      %p198 = por %p196, %p197
      %p200 = scmp.ne.s32.totalorder %s185, %s199
      %p201 = scmp.eq.s32.totalorder %s28, 0
      %p202 = por %p200, %p201
      %s204 = sadd.s32 %s203, 1
      %p207 = scmp.eq.s32.totalorder %s22, 1
      %p208 = scmp.ne.s32.totalorder %s203, %s205
      %p209 = scmp.eq.s32.totalorder %s22, 0
      %p210 = por %p208, %p209
      %p211 = scmp.ne.s32.totalorder %s203, %s205
      %p212 = scmp.eq.s32.totalorder %s27, 1
      %p213 = por %p211, %p212
      %p214 = scmp.ne.s32.totalorder %s205, %s206
      %p215 = scmp.eq.s32.totalorder %s27, 0
      %p216 = por %p214, %p215
      %p217 = scmp.ne.s32.totalorder %s205, %s206
      %p218 = scmp.eq.s32.totalorder %s28, 1
      %p219 = por %p217, %p218
      %p221 = scmp.ne.s32.totalorder %s206, %s220
      %p222 = scmp.eq.s32.totalorder %s28, 0
      %p223 = por %p221, %p222
      %s225 = sadd.s32 %s224, 1
      %p228 = scmp.eq.s32.totalorder %s22, 1
      %p229 = scmp.ne.s32.totalorder %s224, %s226
      %p230 = scmp.eq.s32.totalorder %s22, 0
      %p231 = por %p229, %p230
      %p232 = scmp.ne.s32.totalorder %s224, %s226
      %p233 = scmp.eq.s32.totalorder %s27, 1
      %p234 = por %p232, %p233
      %p235 = scmp.ne.s32.totalorder %s226, %s227
      %p236 = scmp.eq.s32.totalorder %s27, 0
      %p237 = por %p235, %p236
      %p238 = scmp.ne.s32.totalorder %s226, %s227
      %p239 = scmp.eq.s32.totalorder %s28, 1
      %p240 = por %p238, %p239
      %p242 = scmp.ne.s32.totalorder %s227, %s241
      %p243 = scmp.eq.s32.totalorder %s28, 0
      %p244 = por %p242, %p243
      %s245 = ssub.s32 %s22, %s29
      %p246 = scmp.eq.s32.totalorder %s245, 0
      %s248 = sadd.s32 %s247, 1
      %s249 = scalar_select %p246, %s247, %s248
      %p252 = pneg %p246
      %p253 = scmp.eq.s32.totalorder %s22, 1
      %p254 = por %p252, %p253
      %p255 = scmp.ne.s32.totalorder %s247, %s250
      %p256 = scmp.eq.s32.totalorder %s22, 0
      %p257 = por %p255, %p256
      %p258 = scmp.ne.s32.totalorder %s247, %s250
      %p259 = scmp.eq.s32.totalorder %s27, 1
      %p260 = por %p258, %p259
      %p261 = scmp.ne.s32.totalorder %s250, %s251
      %p262 = scmp.eq.s32.totalorder %s27, 0
      %p263 = por %p261, %p262
      %p264 = scmp.ne.s32.totalorder %s250, %s251
      %p265 = scmp.eq.s32.totalorder %s28, 1
      %p266 = por %p264, %p265
      %p268 = scmp.ne.s32.totalorder %s251, %s267
      %p269 = scmp.eq.s32.totalorder %s28, 0
      %p270 = por %p268, %p269
      %p271 = scmp.le.s32.totalorder 1, %s22
      %p272 = scmp.lt.s32.totalorder %s22, 3
      %p273 = pnand %p271, %p272
      %p274 = pneg %p273
      // Predicated region
      $region9: #{tpu_custom_call.1} parent=5 // pred_check
        _
      $region10: #{tpu_custom_call.1} parent=5 // pred_check_branch
        %276 = sbr.rel (%p273) target = $region12
      $region11: #{tpu_custom_call.1} parent=5 // pred_region
        %s277 = ssub.s32 %s22, 1
        // Predicated region
        $region13: #{tpu_custom_call.1} parent=11 // pred_check
          %p278 = pneg %p69
        $region14: #{tpu_custom_call.1} parent=11 // pred_check_branch
          %280 = sbr.rel (%p278) target = $region16
        $region15: #{tpu_custom_call.1} parent=11 // pred_region
          %s282 = ssub.s32 1600, 1600
          %283 = vsyncadd [#allocation3], %s282
          %s284 = sshll.u32 [#allocation2], 4
          %s285 = int_to_ptr.vmem [resolvable:$true] %s284
          %290 = dma.hbm_to_vmem [thread:$0]  %s1, 1600, %s285, [#allocation3], 64, 64, 4
        $region16: #{tpu_custom_call.1} parent=11 // pred_fallthru
          _
        // Predicated region
        $region17: #{tpu_custom_call.1} parent=11 // pred_check
          %p291 = pneg %p90
        $region18: #{tpu_custom_call.1} parent=11 // pred_check_branch
          %293 = sbr.rel (%p291) target = $region20
        $region19: #{tpu_custom_call.1} parent=11 // pred_region
          %s295 = ssub.s32 1600, 1600
          %296 = vsyncadd [#allocation6], %s295
          %s297 = sshll.u32 [#allocation5], 4
          %s298 = int_to_ptr.vmem [resolvable:$true] %s297
          %303 = dma.hbm_to_vmem [thread:$0]  %s2, 1600, %s298, [#allocation6], 64, 64, 4
        $region20: #{tpu_custom_call.1} parent=11 // pred_fallthru
          _
        // Predicated region
        $region21: #{tpu_custom_call.1} parent=11 // pred_check
          %p304 = pneg %p111
        $region22: #{tpu_custom_call.1} parent=11 // pred_check_branch
          %306 = sbr.rel (%p304) target = $region24
        $region23: #{tpu_custom_call.1} parent=11 // pred_region
          _
        $region24: #{tpu_custom_call.1} parent=11 // pred_fallthru
          _
        // Predicated region
        $region25: #{tpu_custom_call.1} parent=11 // pred_check
          %p307 = pneg %p132
        $region26: #{tpu_custom_call.1} parent=11 // pred_check_branch
          %309 = sbr.rel (%p307) target = $region28
        $region27: #{tpu_custom_call.1} parent=11 // pred_region
          _
        $region28: #{tpu_custom_call.1} parent=11 // pred_fallthru
          _
        // Predicated region
        $region29: #{tpu_custom_call.1} parent=11 // pred_check
          %p310 = pneg %p153
        $region30: #{tpu_custom_call.1} parent=11 // pred_check_branch
          %312 = sbr.rel (%p310) target = $region32
        $region31: #{tpu_custom_call.1} parent=11 // pred_region
          _
        $region32: #{tpu_custom_call.1} parent=11 // pred_fallthru
          _
        // Predicated region
        $region33: #{tpu_custom_call.1} parent=11 // pred_check
          %p313 = pneg %p174
        $region34: #{tpu_custom_call.1} parent=11 // pred_check_branch
          %315 = sbr.rel (%p313) target = $region36
        $region35: #{tpu_custom_call.1} parent=11 // pred_region
          %s317 = ssub.s32 4096, 4096
          %318 = vsyncadd [#allocation6], %s317
          %s319 = sshll.u32 [#allocation7], 4
          %s320 = int_to_ptr.vmem [resolvable:$true] %s319
          %325 = dma.hbm_to_vmem [thread:$0]  %s6, 4096, %s320, [#allocation6], 256, 256, 16
        $region36: #{tpu_custom_call.1} parent=11 // pred_fallthru
          _
        // Predicated region
        $region37: #{tpu_custom_call.1} parent=11 // pred_check
          %p326 = pneg %p195
        $region38: #{tpu_custom_call.1} parent=11 // pred_check_branch
          %328 = sbr.rel (%p326) target = $region40
        $region39: #{tpu_custom_call.1} parent=11 // pred_region
          _
        $region40: #{tpu_custom_call.1} parent=11 // pred_fallthru
          _
        // Predicated region
        $region41: #{tpu_custom_call.1} parent=11 // pred_check
          %p329 = pneg %p216
        $region42: #{tpu_custom_call.1} parent=11 // pred_check_branch
          %331 = sbr.rel (%p329) target = $region44
        $region43: #{tpu_custom_call.1} parent=11 // pred_region
          %s333 = ssub.s32 2048, 2048
          %334 = vsyncadd [#allocation9], %s333
          %s335 = sshll.u32 [#allocation8], 4
          %s336 = int_to_ptr.vmem [resolvable:$true] %s335
          %341 = dma.hbm_to_vmem [thread:$0]  %s8, 2048, %s336, [#allocation9], 128, 128, 8
        $region44: #{tpu_custom_call.1} parent=11 // pred_fallthru
          _
        // Predicated region
        $region45: #{tpu_custom_call.1} parent=11 // pred_check
          %p342 = pneg %p237
        $region46: #{tpu_custom_call.1} parent=11 // pred_check_branch
          %344 = sbr.rel (%p342) target = $region48
        $region47: #{tpu_custom_call.1} parent=11 // pred_region
          _
        $region48: #{tpu_custom_call.1} parent=11 // pred_fallthru
          _
      $region12: #{tpu_custom_call.1} parent=5 // pred_fallthru
        _
      %p345 = scmp.lt.s32.totalorder %s22, 2
      // Predicated region
      $region49: #{tpu_custom_call.1} parent=5 // pred_check
        %p346 = pneg %p345
      $region50: #{tpu_custom_call.1} parent=5 // pred_check_branch
        %348 = sbr.rel (%p346) target = $region52
      $region51: #{tpu_custom_call.1} parent=5 // pred_region
        // Predicated region
        $region53: #{tpu_custom_call.1} parent=51 // pred_check
          %p349 = pneg %p42
        $region54: #{tpu_custom_call.1} parent=51 // pred_check_branch
          %351 = sbr.rel (%p349) target = $region56
        $region55: #{tpu_custom_call.1} parent=51 // pred_region
          %s352 = smul.u32 16, %s22
          %p353 = scmp.lt.s32.totalorder %s352, 31
          %s354 = scalar_select %p353, %s352, 31
          %s355 = smul.addr %s354, 8
          %s356 = scalar_lea.vmem %s0, %s355
          %s357 = smul.u32 16, %s22
        $region56: #{tpu_custom_call.1} parent=51 // pred_fallthru
          _
      $region52: #{tpu_custom_call.1} parent=5 // pred_fallthru
        _
      %p358 = scmp.le.s32.totalorder 1, %s22
      %p359 = scmp.lt.s32.totalorder %s22, 3
      %p360 = pnand %p358, %p359
      %p361 = pneg %p360
      // Predicated region
      $region57: #{tpu_custom_call.1} parent=5 // pred_check
        _
      $region58: #{tpu_custom_call.1} parent=5 // pred_check_branch
        %363 = sbr.rel (%p360) target = $region60
      $region59: #{tpu_custom_call.1} parent=5 // pred_region
        %s364 = ssub.s32 %s22, 1
        // Predicated region
        $region61: #{tpu_custom_call.1} parent=59 // pred_check
          %p365 = pneg %p69
        $region62: #{tpu_custom_call.1} parent=59 // pred_check_branch
          %367 = sbr.rel (%p365) target = $region64
        $region63: #{tpu_custom_call.1} parent=59 // pred_region
          %368 = dma.done [#allocation3], 1600
        $region64: #{tpu_custom_call.1} parent=59 // pred_fallthru
          _
        // Predicated region
        $region65: #{tpu_custom_call.1} parent=59 // pred_check
          %p369 = pneg %p90
        $region66: #{tpu_custom_call.1} parent=59 // pred_check_branch
          %371 = sbr.rel (%p369) target = $region68
        $region67: #{tpu_custom_call.1} parent=59 // pred_region
          %372 = dma.done [#allocation6], 1600
        $region68: #{tpu_custom_call.1} parent=59 // pred_fallthru
          _
        // Predicated region
        $region69: #{tpu_custom_call.1} parent=59 // pred_check
          %p373 = pneg %p174
        $region70: #{tpu_custom_call.1} parent=59 // pred_check_branch
          %375 = sbr.rel (%p373) target = $region72
        $region71: #{tpu_custom_call.1} parent=59 // pred_region
          %376 = dma.done [#allocation6], 4096
        $region72: #{tpu_custom_call.1} parent=59 // pred_fallthru
          _
        // Predicated region
        $region73: #{tpu_custom_call.1} parent=59 // pred_check
          %p377 = pneg %p216
        $region74: #{tpu_custom_call.1} parent=59 // pred_check_branch
          %379 = sbr.rel (%p377) target = $region76
        $region75: #{tpu_custom_call.1} parent=59 // pred_region
          %380 = dma.done [#allocation9], 2048
        $region76: #{tpu_custom_call.1} parent=59 // pred_fallthru
          _
        %s381 = smul.u32 16, %s27
        %p382 = scmp.lt.s32.totalorder %s381, 31
        %s383 = scalar_select %p382, %s381, 31
        %s384 = smul.addr %s383, 8
        %s385 = scalar_lea.vmem %s0, %s384
        %p386 = pneg %p48
        %p387 = pneg %p45
        %p388 = pneg %p69
        %p389 = pneg %p66
        %p390 = pneg %p90
        %p391 = pneg %p87
        %p392 = pneg %p111
        %p393 = pneg %p108
        %p394 = pneg %p132
        %p395 = pneg %p129
        %p396 = pneg %p153
        %p397 = pneg %p150
        %p398 = pneg %p174
        %p399 = pneg %p171
        %p400 = pneg %p195
        %p401 = pneg %p192
        %p402 = pneg %p216
        %p403 = pneg %p213
        %p404 = pneg %p237
        %p405 = pneg %p234
        %p406 = pneg %p263
        %p407 = pneg %p260
        %s408 = sand.u32 %s250, 1
        %s409 = scalar_lea.sflag [#allocation4], %s408
        %s410 = sand.u32 %s250, 1
        %s411 = smul.addr %s410, 8
        %s412 = scalar_lea.vmem [#allocation10], %s411
        %s413 = smul.u32 16, %s27
        %p414 = scmp.lt.s32.totalorder %s413, 31
        %s415 = scalar_select %p414, %s413, 31
        %s416 = smul.addr %s415, 8
        %s417 = scalar_lea.vmem %s0, %s416
        %s418 = smul.u32 16, %s27
        %v420 = vld [vmem:[%s417] sm:$0xff]
        %v421 = vld [vmem:[%s417 + $0x8] sm:$0xff]
        %v422 = vld [vmem:[%s417 + $0x10] sm:$0xff]
        %v423 = vld [vmem:[%s417 + $0x18] sm:$0xff]
        %v424 = vld [vmem:[%s417 + $0x20] sm:$0xff]
        %v425 = vld [vmem:[%s417 + $0x28] sm:$0xff]
        %v426 = vld [vmem:[%s417 + $0x30] sm:$0xff]
        %v427 = vld [vmem:[%s417 + $0x38] sm:$0xff]
        %v428 = vld [vmem:[%s417 + $0x40] sm:$0xff]
        %v429 = vld [vmem:[%s417 + $0x48] sm:$0xff]
        %v430 = vld [vmem:[%s417 + $0x50] sm:$0xff]
        %v431 = vld [vmem:[%s417 + $0x58] sm:$0xff]
        %v432 = vld [vmem:[%s417 + $0x60] sm:$0xff]
        %v433 = vld [vmem:[%s417 + $0x68] sm:$0xff]
        %v434 = vld [vmem:[%s417 + $0x70] sm:$0xff]
        %v435 = vld [vmem:[%s417 + $0x78] sm:$0xff]
        %v436 = vlaneseq
        %v437 = vand.u32 %v436, 127
        %v438 = vadd.s32 %v437, 128
        %439 = vset.pattern.permute.xlu0 0
        %440 = vperm.xlu0 %439, %v420
        %v441 = vpop.permute.xlu0 %440
        %442 = vset.pattern.permute.xlu0 0
        %443 = vperm.xlu0 %442, %v421
        %v444 = vpop.permute.xlu0 %443
        %445 = vset.pattern.permute.xlu0 0
        %446 = vperm.xlu0 %445, %v422
        %v447 = vpop.permute.xlu0 %446
        %448 = vset.pattern.permute.xlu0 0
        %449 = vperm.xlu0 %448, %v423
        %v450 = vpop.permute.xlu0 %449
        %451 = vset.pattern.permute.xlu0 0
        %452 = vperm.xlu0 %451, %v424
        %v453 = vpop.permute.xlu0 %452
        %454 = vset.pattern.permute.xlu0 0
        %455 = vperm.xlu0 %454, %v425
        %v456 = vpop.permute.xlu0 %455
        %457 = vset.pattern.permute.xlu0 0
        %458 = vperm.xlu0 %457, %v426
        %v459 = vpop.permute.xlu0 %458
        %460 = vset.pattern.permute.xlu0 0
        %461 = vperm.xlu0 %460, %v427
        %v462 = vpop.permute.xlu0 %461
        %463 = vset.pattern.permute.xlu0 0
        %464 = vperm.xlu0 %463, %v428
        %v465 = vpop.permute.xlu0 %464
        %466 = vset.pattern.permute.xlu0 0
        %467 = vperm.xlu0 %466, %v429
        %v468 = vpop.permute.xlu0 %467
        %469 = vset.pattern.permute.xlu0 0
        %470 = vperm.xlu0 %469, %v430
        %v471 = vpop.permute.xlu0 %470
        %472 = vset.pattern.permute.xlu0 0
        %473 = vperm.xlu0 %472, %v431
        %v474 = vpop.permute.xlu0 %473
        %475 = vset.pattern.permute.xlu0 0
        %476 = vperm.xlu0 %475, %v432
        %v477 = vpop.permute.xlu0 %476
        %478 = vset.pattern.permute.xlu0 0
        %479 = vperm.xlu0 %478, %v433
        %v480 = vpop.permute.xlu0 %479
        %481 = vset.pattern.permute.xlu0 0
        %482 = vperm.xlu0 %481, %v434
        %v483 = vpop.permute.xlu0 %482
        %484 = vset.pattern.permute.xlu0 0
        %485 = vperm.xlu0 %484, %v435
        %v486 = vpop.permute.xlu0 %485
        %vm487 = vcmp.eq.s32.totalorder %v441, %v437
        %vm488 = vcmp.eq.s32.totalorder %v441, %v438
        %vm489 = vcmp.eq.s32.totalorder %v444, %v437
        %vm490 = vcmp.eq.s32.totalorder %v444, %v438
        %vm491 = vcmp.eq.s32.totalorder %v447, %v437
        %vm492 = vcmp.eq.s32.totalorder %v447, %v438
        %vm493 = vcmp.eq.s32.totalorder %v450, %v437
        %vm494 = vcmp.eq.s32.totalorder %v450, %v438
        %vm495 = vcmp.eq.s32.totalorder %v453, %v437
        %vm496 = vcmp.eq.s32.totalorder %v453, %v438
        %vm497 = vcmp.eq.s32.totalorder %v456, %v437
        %vm498 = vcmp.eq.s32.totalorder %v456, %v438
        %vm499 = vcmp.eq.s32.totalorder %v459, %v437
        %vm500 = vcmp.eq.s32.totalorder %v459, %v438
        %vm501 = vcmp.eq.s32.totalorder %v462, %v437
        %vm502 = vcmp.eq.s32.totalorder %v462, %v438
        %vm503 = vcmp.eq.s32.totalorder %v465, %v437
        %vm504 = vcmp.eq.s32.totalorder %v465, %v438
        %vm505 = vcmp.eq.s32.totalorder %v468, %v437
        %vm506 = vcmp.eq.s32.totalorder %v468, %v438
        %vm507 = vcmp.eq.s32.totalorder %v471, %v437
        %vm508 = vcmp.eq.s32.totalorder %v471, %v438
        %vm509 = vcmp.eq.s32.totalorder %v474, %v437
        %vm510 = vcmp.eq.s32.totalorder %v474, %v438
        %vm511 = vcmp.eq.s32.totalorder %v477, %v437
        %vm512 = vcmp.eq.s32.totalorder %v477, %v438
        %vm513 = vcmp.eq.s32.totalorder %v480, %v437
        %vm514 = vcmp.eq.s32.totalorder %v480, %v438
        %vm515 = vcmp.eq.s32.totalorder %v483, %v437
        %vm516 = vcmp.eq.s32.totalorder %v483, %v438
        %vm517 = vcmp.eq.s32.totalorder %v486, %v437
        %vm518 = vcmp.eq.s32.totalorder %v486, %v438
        %519 = vset.pattern.permute.xlu0 1
        %520 = vperm.xlu0 %519, %v420
        %v521 = vpop.permute.xlu0 %520
        %522 = vset.pattern.permute.xlu0 1
        %523 = vperm.xlu0 %522, %v421
        %v524 = vpop.permute.xlu0 %523
        %525 = vset.pattern.permute.xlu0 1
        %526 = vperm.xlu0 %525, %v422
        %v527 = vpop.permute.xlu0 %526
        %528 = vset.pattern.permute.xlu0 1
        %529 = vperm.xlu0 %528, %v423
        %v530 = vpop.permute.xlu0 %529
        %531 = vset.pattern.permute.xlu0 1
        %532 = vperm.xlu0 %531, %v424
        %v533 = vpop.permute.xlu0 %532
        %534 = vset.pattern.permute.xlu0 1
        %535 = vperm.xlu0 %534, %v425
        %v536 = vpop.permute.xlu0 %535
        %537 = vset.pattern.permute.xlu0 1
        %538 = vperm.xlu0 %537, %v426
        %v539 = vpop.permute.xlu0 %538
        %540 = vset.pattern.permute.xlu0 1
        %541 = vperm.xlu0 %540, %v427
        %v542 = vpop.permute.xlu0 %541
        %543 = vset.pattern.permute.xlu0 1
        %544 = vperm.xlu0 %543, %v428
        %v545 = vpop.permute.xlu0 %544
        %546 = vset.pattern.permute.xlu0 1
        %547 = vperm.xlu0 %546, %v429
        %v548 = vpop.permute.xlu0 %547
        %549 = vset.pattern.permute.xlu0 1
        %550 = vperm.xlu0 %549, %v430
        %v551 = vpop.permute.xlu0 %550
        %552 = vset.pattern.permute.xlu0 1
        %553 = vperm.xlu0 %552, %v431
        %v554 = vpop.permute.xlu0 %553
        %555 = vset.pattern.permute.xlu0 1
        %556 = vperm.xlu0 %555, %v432
        %v557 = vpop.permute.xlu0 %556
        %558 = vset.pattern.permute.xlu0 1
        %559 = vperm.xlu0 %558, %v433
        %v560 = vpop.permute.xlu0 %559
        %561 = vset.pattern.permute.xlu0 1
        %562 = vperm.xlu0 %561, %v434
        %v563 = vpop.permute.xlu0 %562
        %564 = vset.pattern.permute.xlu0 1
        %565 = vperm.xlu0 %564, %v435
        %v566 = vpop.permute.xlu0 %565
        %vm567 = vcmp.eq.s32.totalorder %v521, %v437
        %vm568 = vcmp.eq.s32.totalorder %v521, %v438
        %vm569 = vcmp.eq.s32.totalorder %v524, %v437
        %vm570 = vcmp.eq.s32.totalorder %v524, %v438
        %vm571 = vcmp.eq.s32.totalorder %v527, %v437
        %vm572 = vcmp.eq.s32.totalorder %v527, %v438
        %vm573 = vcmp.eq.s32.totalorder %v530, %v437
        %vm574 = vcmp.eq.s32.totalorder %v530, %v438
        %vm575 = vcmp.eq.s32.totalorder %v533, %v437
        %vm576 = vcmp.eq.s32.totalorder %v533, %v438
        %vm577 = vcmp.eq.s32.totalorder %v536, %v437
        %vm578 = vcmp.eq.s32.totalorder %v536, %v438
        %vm579 = vcmp.eq.s32.totalorder %v539, %v437
        %vm580 = vcmp.eq.s32.totalorder %v539, %v438
        %vm581 = vcmp.eq.s32.totalorder %v542, %v437
        %vm582 = vcmp.eq.s32.totalorder %v542, %v438
        %vm583 = vcmp.eq.s32.totalorder %v545, %v437
        %vm584 = vcmp.eq.s32.totalorder %v545, %v438
        %vm585 = vcmp.eq.s32.totalorder %v548, %v437
        %vm586 = vcmp.eq.s32.totalorder %v548, %v438
        %vm587 = vcmp.eq.s32.totalorder %v551, %v437
        %vm588 = vcmp.eq.s32.totalorder %v551, %v438
        %vm589 = vcmp.eq.s32.totalorder %v554, %v437
        %vm590 = vcmp.eq.s32.totalorder %v554, %v438
        %vm591 = vcmp.eq.s32.totalorder %v557, %v437
        %vm592 = vcmp.eq.s32.totalorder %v557, %v438
        %vm593 = vcmp.eq.s32.totalorder %v560, %v437
        %vm594 = vcmp.eq.s32.totalorder %v560, %v438
        %vm595 = vcmp.eq.s32.totalorder %v563, %v437
        %vm596 = vcmp.eq.s32.totalorder %v563, %v438
        %vm597 = vcmp.eq.s32.totalorder %v566, %v437
        %vm598 = vcmp.eq.s32.totalorder %v566, %v438
        %vm599 = vmor %vm487, %vm567
        %vm600 = vmor %vm488, %vm568
        %vm601 = vmor %vm489, %vm569
        %vm602 = vmor %vm490, %vm570
        %vm603 = vmor %vm491, %vm571
        %vm604 = vmor %vm492, %vm572
        %vm605 = vmor %vm493, %vm573
        %vm606 = vmor %vm494, %vm574
        %vm607 = vmor %vm495, %vm575
        %vm608 = vmor %vm496, %vm576
        %vm609 = vmor %vm497, %vm577
        %vm610 = vmor %vm498, %vm578
        %vm611 = vmor %vm499, %vm579
        %vm612 = vmor %vm500, %vm580
        %vm613 = vmor %vm501, %vm581
        %vm614 = vmor %vm502, %vm582
        %vm615 = vmor %vm503, %vm583
        %vm616 = vmor %vm504, %vm584
        %vm617 = vmor %vm505, %vm585
        %vm618 = vmor %vm506, %vm586
        %vm619 = vmor %vm507, %vm587
        %vm620 = vmor %vm508, %vm588
        %vm621 = vmor %vm509, %vm589
        %vm622 = vmor %vm510, %vm590
        %vm623 = vmor %vm511, %vm591
        %vm624 = vmor %vm512, %vm592
        %vm625 = vmor %vm513, %vm593
        %vm626 = vmor %vm514, %vm594
        %vm627 = vmor %vm515, %vm595
        %vm628 = vmor %vm516, %vm596
        %vm629 = vmor %vm517, %vm597
        %vm630 = vmor %vm518, %vm598
        %631 = vset.pattern.permute.xlu0 2
        %632 = vperm.xlu0 %631, %v420
        %v633 = vpop.permute.xlu0 %632
        %634 = vset.pattern.permute.xlu0 2
        %635 = vperm.xlu0 %634, %v421
        %v636 = vpop.permute.xlu0 %635
        %637 = vset.pattern.permute.xlu0 2
        %638 = vperm.xlu0 %637, %v422
        %v639 = vpop.permute.xlu0 %638
        %640 = vset.pattern.permute.xlu0 2
        %641 = vperm.xlu0 %640, %v423
        %v642 = vpop.permute.xlu0 %641
        %643 = vset.pattern.permute.xlu0 2
        %644 = vperm.xlu0 %643, %v424
        %v645 = vpop.permute.xlu0 %644
        %646 = vset.pattern.permute.xlu0 2
        %647 = vperm.xlu0 %646, %v425
        %v648 = vpop.permute.xlu0 %647
        %649 = vset.pattern.permute.xlu0 2
        %650 = vperm.xlu0 %649, %v426
        %v651 = vpop.permute.xlu0 %650
        %652 = vset.pattern.permute.xlu0 2
        %653 = vperm.xlu0 %652, %v427
        %v654 = vpop.permute.xlu0 %653
        %655 = vset.pattern.permute.xlu0 2
        %656 = vperm.xlu0 %655, %v428
        %v657 = vpop.permute.xlu0 %656
        %658 = vset.pattern.permute.xlu0 2
        %659 = vperm.xlu0 %658, %v429
        %v660 = vpop.permute.xlu0 %659
        %661 = vset.pattern.permute.xlu0 2
        %662 = vperm.xlu0 %661, %v430
        %v663 = vpop.permute.xlu0 %662
        %664 = vset.pattern.permute.xlu0 2
        %665 = vperm.xlu0 %664, %v431
        %v666 = vpop.permute.xlu0 %665
        %667 = vset.pattern.permute.xlu0 2
        %668 = vperm.xlu0 %667, %v432
        %v669 = vpop.permute.xlu0 %668
        %670 = vset.pattern.permute.xlu0 2
        %671 = vperm.xlu0 %670, %v433
        %v672 = vpop.permute.xlu0 %671
        %673 = vset.pattern.permute.xlu0 2
        %674 = vperm.xlu0 %673, %v434
        %v675 = vpop.permute.xlu0 %674
        %676 = vset.pattern.permute.xlu0 2
        %677 = vperm.xlu0 %676, %v435
        %v678 = vpop.permute.xlu0 %677
        %vm679 = vcmp.eq.s32.totalorder %v633, %v437
        %vm680 = vcmp.eq.s32.totalorder %v633, %v438
        %vm681 = vcmp.eq.s32.totalorder %v636, %v437
        %vm682 = vcmp.eq.s32.totalorder %v636, %v438
        %vm683 = vcmp.eq.s32.totalorder %v639, %v437
        %vm684 = vcmp.eq.s32.totalorder %v639, %v438
        %vm685 = vcmp.eq.s32.totalorder %v642, %v437
        %vm686 = vcmp.eq.s32.totalorder %v642, %v438
        %vm687 = vcmp.eq.s32.totalorder %v645, %v437
        %vm688 = vcmp.eq.s32.totalorder %v645, %v438
        %vm689 = vcmp.eq.s32.totalorder %v648, %v437
        %vm690 = vcmp.eq.s32.totalorder %v648, %v438
        %vm691 = vcmp.eq.s32.totalorder %v651, %v437
        %vm692 = vcmp.eq.s32.totalorder %v651, %v438
        %vm693 = vcmp.eq.s32.totalorder %v654, %v437
        %vm694 = vcmp.eq.s32.totalorder %v654, %v438
        %vm695 = vcmp.eq.s32.totalorder %v657, %v437
        %vm696 = vcmp.eq.s32.totalorder %v657, %v438
        %vm697 = vcmp.eq.s32.totalorder %v660, %v437
        %vm698 = vcmp.eq.s32.totalorder %v660, %v438
        %vm699 = vcmp.eq.s32.totalorder %v663, %v437
        %vm700 = vcmp.eq.s32.totalorder %v663, %v438
        %vm701 = vcmp.eq.s32.totalorder %v666, %v437
        %vm702 = vcmp.eq.s32.totalorder %v666, %v438
        %vm703 = vcmp.eq.s32.totalorder %v669, %v437
        %vm704 = vcmp.eq.s32.totalorder %v669, %v438
        %vm705 = vcmp.eq.s32.totalorder %v672, %v437
        %vm706 = vcmp.eq.s32.totalorder %v672, %v438
        %vm707 = vcmp.eq.s32.totalorder %v675, %v437
        %vm708 = vcmp.eq.s32.totalorder %v675, %v438
        %vm709 = vcmp.eq.s32.totalorder %v678, %v437
        %vm710 = vcmp.eq.s32.totalorder %v678, %v438
        %vm711 = vmor %vm599, %vm679
        %vm712 = vmor %vm600, %vm680
        %vm713 = vmor %vm601, %vm681
        %vm714 = vmor %vm602, %vm682
        %vm715 = vmor %vm603, %vm683
        %vm716 = vmor %vm604, %vm684
        %vm717 = vmor %vm605, %vm685
        %vm718 = vmor %vm606, %vm686
        %vm719 = vmor %vm607, %vm687
        %vm720 = vmor %vm608, %vm688
        %vm721 = vmor %vm609, %vm689
        %vm722 = vmor %vm610, %vm690
        %vm723 = vmor %vm611, %vm691
        %vm724 = vmor %vm612, %vm692
        %vm725 = vmor %vm613, %vm693
        %vm726 = vmor %vm614, %vm694
        %vm727 = vmor %vm615, %vm695
        %vm728 = vmor %vm616, %vm696
        %vm729 = vmor %vm617, %vm697
        %vm730 = vmor %vm618, %vm698
        %vm731 = vmor %vm619, %vm699
        %vm732 = vmor %vm620, %vm700
        %vm733 = vmor %vm621, %vm701
        %vm734 = vmor %vm622, %vm702
        %vm735 = vmor %vm623, %vm703
        %vm736 = vmor %vm624, %vm704
        %vm737 = vmor %vm625, %vm705
        %vm738 = vmor %vm626, %vm706
        %vm739 = vmor %vm627, %vm707
        %vm740 = vmor %vm628, %vm708
        %vm741 = vmor %vm629, %vm709
        %vm742 = vmor %vm630, %vm710
        %v743 = vsel %vm711, 1, 0
        %v744 = vsel %vm712, 1, 0
        %v745 = vsel %vm713, 1, 0
        %v746 = vsel %vm714, 1, 0
        %v747 = vsel %vm715, 1, 0
        %v748 = vsel %vm716, 1, 0
        %v749 = vsel %vm717, 1, 0
        %v750 = vsel %vm718, 1, 0
        %v751 = vsel %vm719, 1, 0
        %v752 = vsel %vm720, 1, 0
        %v753 = vsel %vm721, 1, 0
        %v754 = vsel %vm722, 1, 0
        %v755 = vsel %vm723, 1, 0
        %v756 = vsel %vm724, 1, 0
        %v757 = vsel %vm725, 1, 0
        %v758 = vsel %vm726, 1, 0
        %v759 = vsel %vm727, 1, 0
        %v760 = vsel %vm728, 1, 0
        %v761 = vsel %vm729, 1, 0
        %v762 = vsel %vm730, 1, 0
        %v763 = vsel %vm731, 1, 0
        %v764 = vsel %vm732, 1, 0
        %v765 = vsel %vm733, 1, 0
        %v766 = vsel %vm734, 1, 0
        %v767 = vsel %vm735, 1, 0
        %v768 = vsel %vm736, 1, 0
        %v769 = vsel %vm737, 1, 0
        %v770 = vsel %vm738, 1, 0
        %v771 = vsel %vm739, 1, 0
        %v772 = vsel %vm740, 1, 0
        %v773 = vsel %vm741, 1, 0
        %v774 = vsel %vm742, 1, 0
        %v775 = vcvt.s32.f32 %v743
        %v776 = vcvt.s32.f32 %v744
        %v777 = vcvt.s32.f32 %v745
        %v778 = vcvt.s32.f32 %v746
        %v779 = vcvt.s32.f32 %v747
        %v780 = vcvt.s32.f32 %v748
        %v781 = vcvt.s32.f32 %v749
        %v782 = vcvt.s32.f32 %v750
        %v783 = vcvt.s32.f32 %v751
        %v784 = vcvt.s32.f32 %v752
        %v785 = vcvt.s32.f32 %v753
        %v786 = vcvt.s32.f32 %v754
        %v787 = vcvt.s32.f32 %v755
        %v788 = vcvt.s32.f32 %v756
        %v789 = vcvt.s32.f32 %v757
        %v790 = vcvt.s32.f32 %v758
        %v791 = vcvt.s32.f32 %v759
        %v792 = vcvt.s32.f32 %v760
        %v793 = vcvt.s32.f32 %v761
        %v794 = vcvt.s32.f32 %v762
        %v795 = vcvt.s32.f32 %v763
        %v796 = vcvt.s32.f32 %v764
        %v797 = vcvt.s32.f32 %v765
        %v798 = vcvt.s32.f32 %v766
        %v799 = vcvt.s32.f32 %v767
        %v800 = vcvt.s32.f32 %v768
        %v801 = vcvt.s32.f32 %v769
        %v802 = vcvt.s32.f32 %v770
        %v803 = vcvt.s32.f32 %v771
        %v804 = vcvt.s32.f32 %v772
        %v805 = vcvt.s32.f32 %v773
        %v806 = vcvt.s32.f32 %v774
        %v807 = vpack.c.bf16 %v777, %v775
        %v808 = vpack.c.bf16 %v778, %v776
        %v809 = vpack.c.bf16 %v781, %v779
        %v810 = vpack.c.bf16 %v782, %v780
        %v811 = vpack.c.bf16 %v785, %v783
        %v812 = vpack.c.bf16 %v786, %v784
        %v813 = vpack.c.bf16 %v789, %v787
        %v814 = vpack.c.bf16 %v790, %v788
        %v815 = vpack.c.bf16 %v793, %v791
        %v816 = vpack.c.bf16 %v794, %v792
        %v817 = vpack.c.bf16 %v797, %v795
        %v818 = vpack.c.bf16 %v798, %v796
        %v819 = vpack.c.bf16 %v801, %v799
        %v820 = vpack.c.bf16 %v802, %v800
        %v821 = vpack.c.bf16 %v805, %v803
        %v822 = vpack.c.bf16 %v806, %v804
        %v823 = vld [vmem:[#allocation2] sm:$0xf]
        %v824 = vld [vmem:[#allocation2 + $0x4] sm:$0xf]
        %v825 = vld [vmem:[#allocation2 + $0x8] sm:$0xf]
        %v826 = vld [vmem:[#allocation2 + $0xc] sm:$0xf]
        %v827 = vld [vmem:[#allocation2 + $0x10] sm:$0xf]
        %v828 = vld [vmem:[#allocation2 + $0x14] sm:$0xf]
        %v829 = vld [vmem:[#allocation2 + $0x18] sm:$0xf]
        %v830 = vld [vmem:[#allocation2 + $0x1c] sm:$0xf]
        %v831 = vld [vmem:[#allocation2 + $0x20] sm:$0xf]
        %v832 = vld [vmem:[#allocation2 + $0x24] sm:$0xf]
        %v833 = vld [vmem:[#allocation2 + $0x28] sm:$0xf]
        %v834 = vld [vmem:[#allocation2 + $0x2c] sm:$0xf]
        %v835 = vld [vmem:[#allocation2 + $0x30] sm:$0xf]
        %v836 = vld [vmem:[#allocation2 + $0x34] sm:$0xf]
        %v837 = vld [vmem:[#allocation2 + $0x38] sm:$0xf]
        %v838 = vld [vmem:[#allocation2 + $0x3c] sm:$0xf]
        %v839 = vld [vmem:[#allocation2 + $0x40] sm:$0xf]
        %v840 = vld [vmem:[#allocation2 + $0x44] sm:$0xf]
        %v841 = vld [vmem:[#allocation2 + $0x48] sm:$0xf]
        %v842 = vld [vmem:[#allocation2 + $0x4c] sm:$0xf]
        %v843 = vld [vmem:[#allocation2 + $0x50] sm:$0xf]
        %v844 = vld [vmem:[#allocation2 + $0x54] sm:$0xf]
        %v845 = vld [vmem:[#allocation2 + $0x58] sm:$0xf]
        %v846 = vld [vmem:[#allocation2 + $0x5c] sm:$0xf]
        %v847 = vld [vmem:[#allocation2 + $0x60] sm:$0x3]
        %v848 = vld [vmem:[#allocation5] sm:$0xf]
        %v849 = vld [vmem:[#allocation5 + $0x4] sm:$0xf]
        %v850 = vld [vmem:[#allocation5 + $0x8] sm:$0xf]
        %v851 = vld [vmem:[#allocation5 + $0xc] sm:$0xf]
        %v852 = vld [vmem:[#allocation5 + $0x10] sm:$0xf]
        %v853 = vld [vmem:[#allocation5 + $0x14] sm:$0xf]
        %v854 = vld [vmem:[#allocation5 + $0x18] sm:$0xf]
        %v855 = vld [vmem:[#allocation5 + $0x1c] sm:$0xf]
        %v856 = vld [vmem:[#allocation5 + $0x20] sm:$0xf]
        %v857 = vld [vmem:[#allocation5 + $0x24] sm:$0xf]
        %v858 = vld [vmem:[#allocation5 + $0x28] sm:$0xf]
        %v859 = vld [vmem:[#allocation5 + $0x2c] sm:$0xf]
        %v860 = vld [vmem:[#allocation5 + $0x30] sm:$0xf]
        %v861 = vld [vmem:[#allocation5 + $0x34] sm:$0xf]
        %v862 = vld [vmem:[#allocation5 + $0x38] sm:$0xf]
        %v863 = vld [vmem:[#allocation5 + $0x3c] sm:$0xf]
        %v864 = vld [vmem:[#allocation5 + $0x40] sm:$0xf]
        %v865 = vld [vmem:[#allocation5 + $0x44] sm:$0xf]
        %v866 = vld [vmem:[#allocation5 + $0x48] sm:$0xf]
        %v867 = vld [vmem:[#allocation5 + $0x4c] sm:$0xf]
        %v868 = vld [vmem:[#allocation5 + $0x50] sm:$0xf]
        %v869 = vld [vmem:[#allocation5 + $0x54] sm:$0xf]
        %v870 = vld [vmem:[#allocation5 + $0x58] sm:$0xf]
        %v871 = vld [vmem:[#allocation5 + $0x5c] sm:$0xf]
        %v872 = vld [vmem:[#allocation5 + $0x60] sm:$0x3]
        %v898 = vunpack.c.l.b16 %v848
        %v899 = vunpack.c.l.b16 %v849
        %v900 = vunpack.c.l.b16 %v850
        %v901 = vunpack.c.l.b16 %v851
        %v902 = vunpack.c.l.b16 %v852
        %v903 = vunpack.c.l.b16 %v853
        %v904 = vunpack.c.l.b16 %v854
        %v905 = vunpack.c.l.b16 %v855
        %v906 = vunpack.c.l.b16 %v856
        %v907 = vunpack.c.l.b16 %v857
        %v908 = vunpack.c.l.b16 %v858
        %v909 = vunpack.c.l.b16 %v859
        %v910 = vunpack.c.l.b16 %v860
        %v911 = vunpack.c.l.b16 %v861
        %v912 = vunpack.c.l.b16 %v862
        %v913 = vunpack.c.l.b16 %v863
        %v914 = vunpack.c.l.b16 %v864
        %v915 = vunpack.c.l.b16 %v865
        %v916 = vunpack.c.l.b16 %v866
        %v917 = vunpack.c.l.b16 %v867
        %v918 = vunpack.c.l.b16 %v868
        %v919 = vunpack.c.l.b16 %v869
        %v920 = vunpack.c.l.b16 %v870
        %v921 = vunpack.c.l.b16 %v871
        %v922 = vunpack.c.l.b16 %v872
        %v923 = vpack.c.b16 %v899, %v898
        %v924 = vpack.c.b16 %v901, %v900
        %v925 = vpack.c.b16 %v903, %v902
        %v926 = vpack.c.b16 %v905, %v904
        %v927 = vpack.c.b16 %v907, %v906
        %v928 = vpack.c.b16 %v909, %v908
        %v929 = vpack.c.b16 %v911, %v910
        %v930 = vpack.c.b16 %v913, %v912
        %v931 = vpack.c.b16 %v915, %v914
        %v932 = vpack.c.b16 %v917, %v916
        %v933 = vpack.c.b16 %v919, %v918
        %v934 = vpack.c.b16 %v921, %v920
        %v935 = vpack.c.b16 %v922, %v922
        %vm948 = vcmask 547840
        %v950 = vsel %vm948, %v808, 0
        %v953 = vsel %vm948, %v810, 0
        %v956 = vsel %vm948, %v812, 0
        %v959 = vsel %vm948, %v814, 0
        %v962 = vsel %vm948, %v816, 0
        %v965 = vsel %vm948, %v818, 0
        %v968 = vsel %vm948, %v820, 0
        %v971 = vsel %vm948, %v822, 0
        %vm973 = vcmask 1040384
        %vm974 = vcmask 1041408
        %v975 = vsel %vm973, 4294967295, 65535
        %v976 = vsel %vm974, %v975, 0
        %v978 = vand.u32 %v935, %v976
        %980 = vmatprep.subr.bf16.mxu0 0
        %981 = vmatpush1.bf16.msra.mxu0 %v923
        %982 = vmatprep.subr.bf16.mxu0 0
        %983 = vmatpush1.bf16.msra.mxu0 %v924
        %984 = vmatprep.subr.bf16.mxu0 0
        %985 = vmatpush1.bf16.msra.mxu0 %v925
        %986 = vmatprep.subr.bf16.mxu0 0
        %987 = vmatpush1.bf16.msra.mxu0 %v926
        %988 = vmatprep.subr.bf16.mxu0 0
        %989 = vmatpush1.bf16.msra.mxu0 %v927
        %990 = vmatprep.subr.bf16.mxu0 0
        %991 = vmatpush1.bf16.msra.mxu0 %v928
        %992 = vmatprep.subr.bf16.mxu0 0
        %993 = vmatpush1.bf16.msra.mxu0 %v929
        %994 = vmatprep.subr.bf16.mxu0 0
        %995 = vmatpush1.bf16.msra.mxu0 %v930
        %996 = vmatprep.subr.bf16.mxu0 0
        %997 = vmatpush1.bf16.msra.mxu0 %v931
        %998 = vmatprep.subr.bf16.mxu0 0
        %999 = vmatpush1.bf16.msra.mxu0 %v932
        %1000 = vmatprep.subr.bf16.mxu0 0
        %1001 = vmatpush1.bf16.msra.mxu0 %v933
        %1002 = vmatprep.subr.bf16.mxu0 0
        %1003 = vmatpush1.bf16.msra.mxu0 %v934
        %1004 = vmatprep.subr.bf16.mxu0 0
        %1005 = vmatpush1.bf16.msra.mxu0 %v978
        %1006 = vmatprep.subr.bf16.mxu0 0
        %1007 = vmatpush1.bf16.msra.mxu0 0
        %1008 = vmatprep.subr.bf16.mxu0 0
        %1009 = vmatpush1.bf16.msra.mxu0 0
        %1010 = vmatprep.subr.bf16.mxu0 0
        %1011 = vmatpush1.bf16.msra.mxu0 0
        %1012 = vmatprep.mubr.bf16.mxu0 %v950
        %1013 = vmatmul.mubr.bf16.gmra.mrb[0].mxu0 %v807
        %v1014 = vpop.f32.mrb[0].mxu0
        %v1015 = vadd.f32 0.0, %v1014
        %v1016 = vpop.f32.mrb[0].mxu0
        %v1017 = vpop.f32.mrb[0].mxu0
        %v1018 = vadd.f32 0.0, %v1017
        %v1019 = vpop.f32.mrb[0].mxu0
        %1020 = vmatprep.mubr.bf16.mxu0 %v953
        %1021 = vmatmul.mubr.bf16.gmra.mrb[0].mxu0 %v809
        %v1022 = vpop.f32.mrb[0].mxu0
        %v1023 = vadd.f32 0.0, %v1022
        %v1024 = vpop.f32.mrb[0].mxu0
        %v1025 = vpop.f32.mrb[0].mxu0
        %v1026 = vadd.f32 0.0, %v1025
        %v1027 = vpop.f32.mrb[0].mxu0
        %1028 = vmatprep.mubr.bf16.mxu0 %v956
        %1029 = vmatmul.mubr.bf16.gmra.mrb[0].mxu0 %v811
        %v1030 = vpop.f32.mrb[0].mxu0
        %v1031 = vadd.f32 0.0, %v1030
        %v1032 = vpop.f32.mrb[0].mxu0
        %v1033 = vpop.f32.mrb[0].mxu0
        %v1034 = vadd.f32 0.0, %v1033
        %v1035 = vpop.f32.mrb[0].mxu0
        %1036 = vmatprep.mubr.bf16.mxu0 %v959
        %1037 = vmatmul.mubr.bf16.gmra.mrb[0].mxu0 %v813
        %v1038 = vpop.f32.mrb[0].mxu0
        %v1039 = vadd.f32 0.0, %v1038
        %v1040 = vpop.f32.mrb[0].mxu0
        %v1041 = vpop.f32.mrb[0].mxu0
        %v1042 = vadd.f32 0.0, %v1041
        %v1043 = vpop.f32.mrb[0].mxu0
        %1044 = vmatprep.mubr.bf16.mxu0 %v962
        %1045 = vmatmul.mubr.bf16.gmra.mrb[0].mxu0 %v815
        %v1046 = vpop.f32.mrb[0].mxu0
        %v1047 = vadd.f32 0.0, %v1046
        %v1048 = vpop.f32.mrb[0].mxu0
        %v1049 = vpop.f32.mrb[0].mxu0
        %v1050 = vadd.f32 0.0, %v1049
        %v1051 = vpop.f32.mrb[0].mxu0
        %1052 = vmatprep.mubr.bf16.mxu0 %v965
        %1053 = vmatmul.mubr.bf16.gmra.mrb[0].mxu0 %v817
        %v1054 = vpop.f32.mrb[0].mxu0
        %v1055 = vadd.f32 0.0, %v1054
        %v1056 = vpop.f32.mrb[0].mxu0
        %v1057 = vpop.f32.mrb[0].mxu0
        %v1058 = vadd.f32 0.0, %v1057
        %v1059 = vpop.f32.mrb[0].mxu0
        %1060 = vmatprep.mubr.bf16.mxu0 %v968
        %1061 = vmatmul.mubr.bf16.gmra.mrb[0].mxu0 %v819
        %v1062 = vpop.f32.mrb[0].mxu0
        %v1063 = vadd.f32 0.0, %v1062
        %v1064 = vpop.f32.mrb[0].mxu0
        %v1065 = vpop.f32.mrb[0].mxu0
        %v1066 = vadd.f32 0.0, %v1065
        %v1067 = vpop.f32.mrb[0].mxu0
        %1068 = vmatprep.mubr.bf16.mxu0 %v971
        %1069 = vmatmul.mubr.bf16.gmra.mrb[0].mxu0 %v821
        %v1070 = vpop.f32.mrb[0].mxu0
        %v1071 = vadd.f32 0.0, %v1070
        %v1072 = vpop.f32.mrb[0].mxu0
        %v1073 = vpop.f32.mrb[0].mxu0
        %v1074 = vadd.f32 0.0, %v1073
        %v1075 = vpop.f32.mrb[0].mxu0
        %1076 = vdwg.mxu0
        %v1102 = vunpack.c.l.b16 %v823
        %v1103 = vunpack.c.l.b16 %v824
        %v1104 = vunpack.c.l.b16 %v825
        %v1105 = vunpack.c.l.b16 %v826
        %v1106 = vunpack.c.l.b16 %v827
        %v1107 = vunpack.c.l.b16 %v828
        %v1108 = vunpack.c.l.b16 %v829
        %v1109 = vunpack.c.l.b16 %v830
        %v1110 = vunpack.c.l.b16 %v831
        %v1111 = vunpack.c.l.b16 %v832
        %v1112 = vunpack.c.l.b16 %v833
        %v1113 = vunpack.c.l.b16 %v834
        %v1114 = vunpack.c.l.b16 %v835
        %v1115 = vunpack.c.l.b16 %v836
        %v1116 = vunpack.c.l.b16 %v837
        %v1117 = vunpack.c.l.b16 %v838
        %v1118 = vunpack.c.l.b16 %v839
        %v1119 = vunpack.c.l.b16 %v840
        %v1120 = vunpack.c.l.b16 %v841
        %v1121 = vunpack.c.l.b16 %v842
        %v1122 = vunpack.c.l.b16 %v843
        %v1123 = vunpack.c.l.b16 %v844
        %v1124 = vunpack.c.l.b16 %v845
        %v1125 = vunpack.c.l.b16 %v846
        %v1126 = vunpack.c.l.b16 %v847
        %v1127 = vpack.c.b16 %v1103, %v1102
        %v1128 = vpack.c.b16 %v1105, %v1104
        %v1129 = vpack.c.b16 %v1107, %v1106
        %v1130 = vpack.c.b16 %v1109, %v1108
        %v1131 = vpack.c.b16 %v1111, %v1110
        %v1132 = vpack.c.b16 %v1113, %v1112
        %v1133 = vpack.c.b16 %v1115, %v1114
        %v1134 = vpack.c.b16 %v1117, %v1116
        %v1135 = vpack.c.b16 %v1119, %v1118
        %v1136 = vpack.c.b16 %v1121, %v1120
        %v1137 = vpack.c.b16 %v1123, %v1122
        %v1138 = vpack.c.b16 %v1125, %v1124
        %v1139 = vpack.c.b16 %v1126, %v1126
        %v1153 = vand.u32 %v1139, %v976
        %1155 = vmatprep.subr.bf16.mxu0 0
        %1156 = vmatpush1.bf16.msra.mxu0 %v1127
        %1157 = vmatprep.subr.bf16.mxu0 0
        %1158 = vmatpush1.bf16.msra.mxu0 %v1128
        %1159 = vmatprep.subr.bf16.mxu0 0
        %1160 = vmatpush1.bf16.msra.mxu0 %v1129
        %1161 = vmatprep.subr.bf16.mxu0 0
        %1162 = vmatpush1.bf16.msra.mxu0 %v1130
        %1163 = vmatprep.subr.bf16.mxu0 0
        %1164 = vmatpush1.bf16.msra.mxu0 %v1131
        %1165 = vmatprep.subr.bf16.mxu0 0
        %1166 = vmatpush1.bf16.msra.mxu0 %v1132
        %1167 = vmatprep.subr.bf16.mxu0 0
        %1168 = vmatpush1.bf16.msra.mxu0 %v1133
        %1169 = vmatprep.subr.bf16.mxu0 0
        %1170 = vmatpush1.bf16.msra.mxu0 %v1134
        %1171 = vmatprep.subr.bf16.mxu0 0
        %1172 = vmatpush1.bf16.msra.mxu0 %v1135
        %1173 = vmatprep.subr.bf16.mxu0 0
        %1174 = vmatpush1.bf16.msra.mxu0 %v1136
        %1175 = vmatprep.subr.bf16.mxu0 0
        %1176 = vmatpush1.bf16.msra.mxu0 %v1137
        %1177 = vmatprep.subr.bf16.mxu0 0
        %1178 = vmatpush1.bf16.msra.mxu0 %v1138
        %1179 = vmatprep.subr.bf16.mxu0 0
        %1180 = vmatpush1.bf16.msra.mxu0 %v1153
        %1181 = vmatprep.subr.bf16.mxu0 0
        %1182 = vmatpush1.bf16.msra.mxu0 0
        %1183 = vmatprep.subr.bf16.mxu0 0
        %1184 = vmatpush1.bf16.msra.mxu0 0
        %1185 = vmatprep.subr.bf16.mxu0 0
        %1186 = vmatpush1.bf16.msra.mxu0 0
        %1187 = vmatprep.mubr.bf16.mxu0 %v950
        %1188 = vmatmul.mubr.bf16.gmra.mrb[0].mxu0 %v807
        %v1189 = vpop.f32.mrb[0].mxu0
        %v1190 = vadd.f32 %v1015, %v1189
        %v1191 = vpop.f32.mrb[0].mxu0
        %v1192 = vpop.f32.mrb[0].mxu0
        %v1193 = vadd.f32 %v1018, %v1192
        %v1194 = vpop.f32.mrb[0].mxu0
        %1195 = vmatprep.mubr.bf16.mxu0 %v953
        %1196 = vmatmul.mubr.bf16.gmra.mrb[0].mxu0 %v809
        %v1197 = vpop.f32.mrb[0].mxu0
        %v1198 = vadd.f32 %v1023, %v1197
        %v1199 = vpop.f32.mrb[0].mxu0
        %v1200 = vpop.f32.mrb[0].mxu0
        %v1201 = vadd.f32 %v1026, %v1200
        %v1202 = vpop.f32.mrb[0].mxu0
        %1203 = vmatprep.mubr.bf16.mxu0 %v956
        %1204 = vmatmul.mubr.bf16.gmra.mrb[0].mxu0 %v811
        %v1205 = vpop.f32.mrb[0].mxu0
        %v1206 = vadd.f32 %v1031, %v1205
        %v1207 = vpop.f32.mrb[0].mxu0
        %v1208 = vpop.f32.mrb[0].mxu0
        %v1209 = vadd.f32 %v1034, %v1208
        %v1210 = vpop.f32.mrb[0].mxu0
        %1211 = vmatprep.mubr.bf16.mxu0 %v959
        %1212 = vmatmul.mubr.bf16.gmra.mrb[0].mxu0 %v813
        %v1213 = vpop.f32.mrb[0].mxu0
        %v1214 = vadd.f32 %v1039, %v1213
        %v1215 = vpop.f32.mrb[0].mxu0
        %v1216 = vpop.f32.mrb[0].mxu0
        %v1217 = vadd.f32 %v1042, %v1216
        %v1218 = vpop.f32.mrb[0].mxu0
        %1219 = vmatprep.mubr.bf16.mxu0 %v962
        %1220 = vmatmul.mubr.bf16.gmra.mrb[0].mxu0 %v815
        %v1221 = vpop.f32.mrb[0].mxu0
        %v1222 = vadd.f32 %v1047, %v1221
        %v1223 = vpop.f32.mrb[0].mxu0
        %v1224 = vpop.f32.mrb[0].mxu0
        %v1225 = vadd.f32 %v1050, %v1224
        %v1226 = vpop.f32.mrb[0].mxu0
        %1227 = vmatprep.mubr.bf16.mxu0 %v965
        %1228 = vmatmul.mubr.bf16.gmra.mrb[0].mxu0 %v817
        %v1229 = vpop.f32.mrb[0].mxu0
        %v1230 = vadd.f32 %v1055, %v1229
        %v1231 = vpop.f32.mrb[0].mxu0
        %v1232 = vpop.f32.mrb[0].mxu0
        %v1233 = vadd.f32 %v1058, %v1232
        %v1234 = vpop.f32.mrb[0].mxu0
        %1235 = vmatprep.mubr.bf16.mxu0 %v968
        %1236 = vmatmul.mubr.bf16.gmra.mrb[0].mxu0 %v819
        %v1237 = vpop.f32.mrb[0].mxu0
        %v1238 = vadd.f32 %v1063, %v1237
        %v1239 = vpop.f32.mrb[0].mxu0
        %v1240 = vpop.f32.mrb[0].mxu0
        %v1241 = vadd.f32 %v1066, %v1240
        %v1242 = vpop.f32.mrb[0].mxu0
        %1243 = vmatprep.mubr.bf16.mxu0 %v971
        %1244 = vmatmul.mubr.bf16.gmra.mrb[0].mxu0 %v821
        %v1245 = vpop.f32.mrb[0].mxu0
        %v1246 = vadd.f32 %v1071, %v1245
        %v1247 = vpop.f32.mrb[0].mxu0
        %v1248 = vpop.f32.mrb[0].mxu0
        %v1249 = vadd.f32 %v1074, %v1248
        %v1250 = vpop.f32.mrb[0].mxu0
        %1251 = vdwg.mxu0
        %v1252 = vmax.f32 %v1190, %v1193
        %v1253 = vrot.slane %v1252, 4
        %v1254 = vmax.f32 %v1252, %v1253
        %v1255 = vrot.slane %v1254, 2
        %v1256 = vmax.f32 %v1254, %v1255
        %v1257 = vrot.slane %v1256, 1
        %v1258 = vmax.f32 %v1256, %v1257
        %v1259 = vmax.f32 %v1198, %v1201
        %v1260 = vrot.slane %v1259, 4
        %v1261 = vmax.f32 %v1259, %v1260
        %v1262 = vrot.slane %v1261, 2
        %v1263 = vmax.f32 %v1261, %v1262
        %v1264 = vrot.slane %v1263, 1
        %v1265 = vmax.f32 %v1263, %v1264
        %v1266 = vmax.f32 %v1206, %v1209
        %v1267 = vrot.slane %v1266, 4
        %v1268 = vmax.f32 %v1266, %v1267
        %v1269 = vrot.slane %v1268, 2
        %v1270 = vmax.f32 %v1268, %v1269
        %v1271 = vrot.slane %v1270, 1
        %v1272 = vmax.f32 %v1270, %v1271
        %v1273 = vmax.f32 %v1214, %v1217
        %v1274 = vrot.slane %v1273, 4
        %v1275 = vmax.f32 %v1273, %v1274
        %v1276 = vrot.slane %v1275, 2
        %v1277 = vmax.f32 %v1275, %v1276
        %v1278 = vrot.slane %v1277, 1
        %v1279 = vmax.f32 %v1277, %v1278
        %v1280 = vmax.f32 %v1222, %v1225
        %v1281 = vrot.slane %v1280, 4
        %v1282 = vmax.f32 %v1280, %v1281
        %v1283 = vrot.slane %v1282, 2
        %v1284 = vmax.f32 %v1282, %v1283
        %v1285 = vrot.slane %v1284, 1
        %v1286 = vmax.f32 %v1284, %v1285
        %v1287 = vmax.f32 %v1230, %v1233
        %v1288 = vrot.slane %v1287, 4
        %v1289 = vmax.f32 %v1287, %v1288
        %v1290 = vrot.slane %v1289, 2
        %v1291 = vmax.f32 %v1289, %v1290
        %v1292 = vrot.slane %v1291, 1
        %v1293 = vmax.f32 %v1291, %v1292
        %v1294 = vmax.f32 %v1238, %v1241
        %v1295 = vrot.slane %v1294, 4
        %v1296 = vmax.f32 %v1294, %v1295
        %v1297 = vrot.slane %v1296, 2
        %v1298 = vmax.f32 %v1296, %v1297
        %v1299 = vrot.slane %v1298, 1
        %v1300 = vmax.f32 %v1298, %v1299
        %v1301 = vmax.f32 %v1246, %v1249
        %v1302 = vrot.slane %v1301, 4
        %v1303 = vmax.f32 %v1301, %v1302
        %v1304 = vrot.slane %v1303, 2
        %v1305 = vmax.f32 %v1303, %v1304
        %v1306 = vrot.slane %v1305, 1
        %v1307 = vmax.f32 %v1305, %v1306
        %v1308 = vld [vmem:[%s3] sm:$0x1]
        %v1310 = vlaneseq
        %v1311 = vshrl.u32 %v1310, 7
        %v1312 = vsub.s32 0, %v1311
        %v1313 = vrot.slane %v1308, %v1312
        %v1315 = vadd.f32 %v1258, %v1313
        %v1316 = vadd.f32 %v1265, %v1313
        %v1317 = vadd.f32 %v1272, %v1313
        %v1318 = vadd.f32 %v1279, %v1313
        %v1319 = vadd.f32 %v1286, %v1313
        %v1320 = vadd.f32 %v1293, %v1313
        %v1321 = vadd.f32 %v1300, %v1313
        %v1322 = vadd.f32 %v1307, %v1313
        %v1323 = vmax.f32 %v1315, 0.0
        %v1324 = vmax.f32 %v1316, 0.0
        %v1325 = vmax.f32 %v1317, 0.0
        %v1326 = vmax.f32 %v1318, 0.0
        %v1327 = vmax.f32 %v1319, 0.0
        %v1328 = vmax.f32 %v1320, 0.0
        %v1329 = vmax.f32 %v1321, 0.0
        %v1330 = vmax.f32 %v1322, 0.0
        %v1331 = vld [vmem:[%s4] sm:$0xff]
        %v1332 = vld [vmem:[%s4 + $0x8] sm:$0xff]
        %v1333 = vld [vmem:[%s4 + $0x10] sm:$0xff]
        %v1334 = vld [vmem:[%s4 + $0x18] sm:$0xff]
        %v1335 = vld [vmem:[%s4 + $0x20] sm:$0xff]
        %v1336 = vld [vmem:[%s4 + $0x28] sm:$0xff]
        %v1337 = vld [vmem:[%s4 + $0x30] sm:$0xff]
        %v1338 = vld [vmem:[%s4 + $0x38] sm:$0xff]
        %v1339 = vld [vmem:[%s4 + $0x40] sm:$0xff]
        %v1340 = vld [vmem:[%s4 + $0x48] sm:$0xff]
        %v1341 = vld [vmem:[%s4 + $0x50] sm:$0xff]
        %v1342 = vld [vmem:[%s4 + $0x58] sm:$0xff]
        %v1343 = vld [vmem:[%s4 + $0x60] sm:$0xff]
        %v1344 = vld [vmem:[%s4 + $0x68] sm:$0xff]
        %v1345 = vld [vmem:[%s4 + $0x70] sm:$0xff]
        %v1346 = vld [vmem:[%s4 + $0x78] sm:$0xff]
        %v1347 = vld [vmem:[%s4 + $0x80] sm:$0xff]
        %v1348 = vld [vmem:[%s4 + $0x88] sm:$0xff]
        %v1349 = vld [vmem:[%s4 + $0x90] sm:$0xff]
        %v1350 = vld [vmem:[%s4 + $0x98] sm:$0xff]
        %v1351 = vld [vmem:[%s4 + $0xa0] sm:$0xff]
        %v1352 = vld [vmem:[%s4 + $0xa8] sm:$0xff]
        %v1353 = vld [vmem:[%s4 + $0xb0] sm:$0xff]
        %v1354 = vld [vmem:[%s4 + $0xb8] sm:$0xff]
        %v1355 = vld [vmem:[%s4 + $0xc0] sm:$0xff]
        %v1356 = vld [vmem:[%s4 + $0xc8] sm:$0xff]
        %v1357 = vld [vmem:[%s4 + $0xd0] sm:$0xff]
        %v1358 = vld [vmem:[%s4 + $0xd8] sm:$0xff]
        %v1359 = vld [vmem:[%s4 + $0xe0] sm:$0xff]
        %v1360 = vld [vmem:[%s4 + $0xe8] sm:$0xff]
        %v1361 = vld [vmem:[%s4 + $0xf0] sm:$0xff]
        %v1362 = vld [vmem:[%s4 + $0xf8] sm:$0xff]
        %v1363 = vld [vmem:[%s5] sm:$0x3]
        %v1365 = vlaneseq
        %v1366 = vshrl.u32 %v1365, 7
        %v1367 = vsub.s32 0, %v1366
        %v1368 = vrot.slane %v1363, %v1367
        %v1369 = vlaneseq
        %v1370 = vshrl.u32 %v1369, 7
        %v1371 = vsub.s32 1, %v1370
        %v1372 = vrot.slane %v1363, %v1371
        %v1383 = vrot.slane %v1324, 7
        %vm1384 = vcmask 1041409
        %v1385 = vsel %vm1384, %v1383, %v1323
        %v1386 = vrot.slane %v1325, 6
        %vm1387 = vcmask 1042434
        %v1388 = vsel %vm1387, %v1386, %v1385
        %v1389 = vrot.slane %v1326, 5
        %vm1390 = vcmask 1043459
        %v1391 = vsel %vm1390, %v1389, %v1388
        %v1392 = vrot.slane %v1327, 4
        %vm1393 = vcmask 1044484
        %v1394 = vsel %vm1393, %v1392, %v1391
        %v1395 = vrot.slane %v1328, 3
        %vm1396 = vcmask 1045509
        %v1397 = vsel %vm1396, %v1395, %v1394
        %v1398 = vrot.slane %v1329, 2
        %vm1399 = vcmask 1046534
        %v1400 = vsel %vm1399, %v1398, %v1397
        %v1401 = vrot.slane %v1330, 1
        %vm1402 = vcmask 1047559
        %v1403 = vsel %vm1402, %v1401, %v1400
        %1405 = vmatprep.subr.mxu0 %v1332
        %1406 = vmatpush1.msra.mxu0 %v1331
        %1407 = vmatprep.subr.mxu0 %v1334
        %1408 = vmatpush1.msra.mxu0 %v1333
        %1409 = vmatprep.subr.mxu0 %v1336
        %1410 = vmatpush1.msra.mxu0 %v1335
        %1411 = vmatprep.subr.mxu0 %v1338
        %1412 = vmatpush1.msra.mxu0 %v1337
        %1413 = vmatprep.subr.mxu0 %v1340
        %1414 = vmatpush1.msra.mxu0 %v1339
        %1415 = vmatprep.subr.mxu0 %v1342
        %1416 = vmatpush1.msra.mxu0 %v1341
        %1417 = vmatprep.subr.mxu0 %v1344
        %1418 = vmatpush1.msra.mxu0 %v1343
        %1419 = vmatprep.subr.mxu0 %v1346
        %1420 = vmatpush1.msra.mxu0 %v1345
        %1421 = vmatprep.subr.mxu0 %v1348
        %1422 = vmatpush1.msra.mxu0 %v1347
        %1423 = vmatprep.subr.mxu0 %v1350
        %1424 = vmatpush1.msra.mxu0 %v1349
        %1425 = vmatprep.subr.mxu0 %v1352
        %1426 = vmatpush1.msra.mxu0 %v1351
        %1427 = vmatprep.subr.mxu0 %v1354
        %1428 = vmatpush1.msra.mxu0 %v1353
        %1429 = vmatprep.subr.mxu0 %v1356
        %1430 = vmatpush1.msra.mxu0 %v1355
        %1431 = vmatprep.subr.mxu0 %v1358
        %1432 = vmatpush1.msra.mxu0 %v1357
        %1433 = vmatprep.subr.mxu0 %v1360
        %1434 = vmatpush1.msra.mxu0 %v1359
        %1435 = vmatprep.subr.mxu0 %v1362
        %1436 = vmatpush1.msra.mxu0 %v1361
        %1437 = vmatprep.subr.mxu0 0.0
        %1438 = vmatpush1.msra.mxu0 0.0
        %1439 = vmatprep.subr.mxu0 0.0
        %1440 = vmatpush1.msra.mxu0 0.0
        %1441 = vmatprep.subr.mxu0 0.0
        %1442 = vmatpush1.msra.mxu0 0.0
        %1443 = vmatprep.subr.mxu0 0.0
        %1444 = vmatpush1.msra.mxu0 0.0
        %1445 = vmatprep.subr.mxu0 0.0
        %1446 = vmatpush1.msra.mxu0 0.0
        %1447 = vmatprep.subr.mxu0 0.0
        %1448 = vmatpush1.msra.mxu0 0.0
        %1449 = vmatprep.subr.mxu0 0.0
        %1450 = vmatpush1.msra.mxu0 0.0
        %1451 = vmatprep.subr.mxu0 0.0
        %1452 = vmatpush1.msra.mxu0 0.0
        %1453 = vmatprep.subr.mxu0 0.0
        %1454 = vmatpush1.msra.mxu0 0.0
        %1455 = vmatprep.subr.mxu0 0.0
        %1456 = vmatpush1.msra.mxu0 0.0
        %1457 = vmatprep.subr.mxu0 0.0
        %1458 = vmatpush1.msra.mxu0 0.0
        %1459 = vmatprep.subr.mxu0 0.0
        %1460 = vmatpush1.msra.mxu0 0.0
        %1461 = vmatprep.subr.mxu0 0.0
        %1462 = vmatpush1.msra.mxu0 0.0
        %1463 = vmatprep.subr.mxu0 0.0
        %1464 = vmatpush1.msra.mxu0 0.0
        %1465 = vmatprep.subr.mxu0 0.0
        %1466 = vmatpush1.msra.mxu0 0.0
        %1467 = vmatprep.subr.mxu0 0.0
        %1468 = vmatpush1.msra.mxu0 0.0
        %1469 = vmatprep.mubr.f32.mxu0 0.0
        %1470 = vmatmul.mubr.f32.gmra.mrb[0].mxu0 %v1403
        %v1471 = vpop.f32.mrb[0].mxu0
        %v1472 = vadd.f32 %v1368, %v1471
        %v1473 = vpop.f32.mrb[0].mxu0
        %v1474 = vadd.f32 %v1372, %v1473
        %1475 = vdwg.mxu0
        %v1476 = vmax.f32 %v1472, 0.0
        %v1477 = vxor.u32 %v1474, 2147483648
        %v1478 = vmul.f32 %v1477, 1.442695
        %v1479 = vpow.pop %v1478
        %v1480 = vadd.f32 %v1479, 1.0
        %v1481 = vrcp.pop %v1480
        %v1482 = vmul.f32 1.0, %v1481
        %v1483 = vmul.f32 %v1482, %v1403
        %v1484 = vsub.f32 1.0, %v1482
        %v1485 = vmul.f32 %v1484, %v1476
        %v1486 = vadd.f32 %v1483, %v1485
        %v1487 = vld [vmem:[#allocation7] sm:$0xff]
        %v1488 = vld [vmem:[#allocation7 + $0x8] sm:$0xff]
        %v1489 = vld [vmem:[#allocation7 + $0x10] sm:$0xff]
        %v1490 = vld [vmem:[#allocation7 + $0x18] sm:$0xff]
        %v1491 = vld [vmem:[#allocation7 + $0x20] sm:$0xff]
        %v1492 = vld [vmem:[#allocation7 + $0x28] sm:$0xff]
        %v1493 = vld [vmem:[#allocation7 + $0x30] sm:$0xff]
        %v1494 = vld [vmem:[#allocation7 + $0x38] sm:$0xff]
        %v1495 = vld [vmem:[#allocation7 + $0x40] sm:$0xff]
        %v1496 = vld [vmem:[#allocation7 + $0x48] sm:$0xff]
        %v1497 = vld [vmem:[#allocation7 + $0x50] sm:$0xff]
        %v1498 = vld [vmem:[#allocation7 + $0x58] sm:$0xff]
        %v1499 = vld [vmem:[#allocation7 + $0x60] sm:$0xff]
        %v1500 = vld [vmem:[#allocation7 + $0x68] sm:$0xff]
        %v1501 = vld [vmem:[#allocation7 + $0x70] sm:$0xff]
        %v1502 = vld [vmem:[#allocation7 + $0x78] sm:$0xff]
        %v1503 = vld [vmem:[#allocation7 + $0x80] sm:$0xff]
        %v1504 = vld [vmem:[#allocation7 + $0x88] sm:$0xff]
        %v1505 = vld [vmem:[#allocation7 + $0x90] sm:$0xff]
        %v1506 = vld [vmem:[#allocation7 + $0x98] sm:$0xff]
        %v1507 = vld [vmem:[#allocation7 + $0xa0] sm:$0xff]
        %v1508 = vld [vmem:[#allocation7 + $0xa8] sm:$0xff]
        %v1509 = vld [vmem:[#allocation7 + $0xb0] sm:$0xff]
        %v1510 = vld [vmem:[#allocation7 + $0xb8] sm:$0xff]
        %v1511 = vld [vmem:[#allocation7 + $0xc0] sm:$0xff]
        %v1512 = vld [vmem:[#allocation7 + $0xc8] sm:$0xff]
        %v1513 = vld [vmem:[#allocation7 + $0xd0] sm:$0xff]
        %v1514 = vld [vmem:[#allocation7 + $0xd8] sm:$0xff]
        %v1515 = vld [vmem:[#allocation7 + $0xe0] sm:$0xff]
        %v1516 = vld [vmem:[#allocation7 + $0xe8] sm:$0xff]
        %v1517 = vld [vmem:[#allocation7 + $0xf0] sm:$0xff]
        %v1518 = vld [vmem:[#allocation7 + $0xf8] sm:$0xff]
        %v1519 = vld [vmem:[%s7] sm:$0x3]
        %v1521 = vlaneseq
        %v1522 = vshrl.u32 %v1521, 7
        %v1523 = vsub.s32 0, %v1522
        %v1524 = vrot.slane %v1519, %v1523
        %v1525 = vlaneseq
        %v1526 = vshrl.u32 %v1525, 7
        %v1527 = vsub.s32 1, %v1526
        %v1528 = vrot.slane %v1519, %v1527
        %1531 = vmatprep.subr.mxu0 %v1488
        %1532 = vmatpush1.msra.mxu0 %v1487
        %1533 = vmatprep.subr.mxu0 %v1490
        %1534 = vmatpush1.msra.mxu0 %v1489
        %1535 = vmatprep.subr.mxu0 %v1492
        %1536 = vmatpush1.msra.mxu0 %v1491
        %1537 = vmatprep.subr.mxu0 %v1494
        %1538 = vmatpush1.msra.mxu0 %v1493
        %1539 = vmatprep.subr.mxu0 %v1496
        %1540 = vmatpush1.msra.mxu0 %v1495
        %1541 = vmatprep.subr.mxu0 %v1498
        %1542 = vmatpush1.msra.mxu0 %v1497
        %1543 = vmatprep.subr.mxu0 %v1500
        %1544 = vmatpush1.msra.mxu0 %v1499
        %1545 = vmatprep.subr.mxu0 %v1502
        %1546 = vmatpush1.msra.mxu0 %v1501
        %1547 = vmatprep.subr.mxu0 %v1504
        %1548 = vmatpush1.msra.mxu0 %v1503
        %1549 = vmatprep.subr.mxu0 %v1506
        %1550 = vmatpush1.msra.mxu0 %v1505
        %1551 = vmatprep.subr.mxu0 %v1508
        %1552 = vmatpush1.msra.mxu0 %v1507
        %1553 = vmatprep.subr.mxu0 %v1510
        %1554 = vmatpush1.msra.mxu0 %v1509
        %1555 = vmatprep.subr.mxu0 %v1512
        %1556 = vmatpush1.msra.mxu0 %v1511
        %1557 = vmatprep.subr.mxu0 %v1514
        %1558 = vmatpush1.msra.mxu0 %v1513
        %1559 = vmatprep.subr.mxu0 %v1516
        %1560 = vmatpush1.msra.mxu0 %v1515
        %1561 = vmatprep.subr.mxu0 %v1518
        %1562 = vmatpush1.msra.mxu0 %v1517
        %1563 = vmatprep.subr.mxu0 0.0
        %1564 = vmatpush1.msra.mxu0 0.0
        %1565 = vmatprep.subr.mxu0 0.0
        %1566 = vmatpush1.msra.mxu0 0.0
        %1567 = vmatprep.subr.mxu0 0.0
        %1568 = vmatpush1.msra.mxu0 0.0
        %1569 = vmatprep.subr.mxu0 0.0
        %1570 = vmatpush1.msra.mxu0 0.0
        %1571 = vmatprep.subr.mxu0 0.0
        %1572 = vmatpush1.msra.mxu0 0.0
        %1573 = vmatprep.subr.mxu0 0.0
        %1574 = vmatpush1.msra.mxu0 0.0
        %1575 = vmatprep.subr.mxu0 0.0
        %1576 = vmatpush1.msra.mxu0 0.0
        %1577 = vmatprep.subr.mxu0 0.0
        %1578 = vmatpush1.msra.mxu0 0.0
        %1579 = vmatprep.subr.mxu0 0.0
        %1580 = vmatpush1.msra.mxu0 0.0
        %1581 = vmatprep.subr.mxu0 0.0
        %1582 = vmatpush1.msra.mxu0 0.0
        %1583 = vmatprep.subr.mxu0 0.0
        %1584 = vmatpush1.msra.mxu0 0.0
        %1585 = vmatprep.subr.mxu0 0.0
        %1586 = vmatpush1.msra.mxu0 0.0
        %1587 = vmatprep.subr.mxu0 0.0
        %1588 = vmatpush1.msra.mxu0 0.0
        %1589 = vmatprep.subr.mxu0 0.0
        %1590 = vmatpush1.msra.mxu0 0.0
        %1591 = vmatprep.subr.mxu0 0.0
        %1592 = vmatpush1.msra.mxu0 0.0
        %1593 = vmatprep.subr.mxu0 0.0
        %1594 = vmatpush1.msra.mxu0 0.0
        %1595 = vmatprep.mubr.f32.mxu0 0.0
        %1596 = vmatmul.mubr.f32.gmra.mrb[0].mxu0 %v1486
        %v1597 = vpop.f32.mrb[0].mxu0
        %v1598 = vadd.f32 %v1524, %v1597
        %v1599 = vpop.f32.mrb[0].mxu0
        %v1600 = vadd.f32 %v1528, %v1599
        %1601 = vdwg.mxu0
        %v1602 = vmax.f32 %v1598, 0.0
        %v1603 = vxor.u32 %v1600, 2147483648
        %v1604 = vmul.f32 %v1603, 1.442695
        %v1605 = vpow.pop %v1604
        %v1606 = vadd.f32 %v1605, 1.0
        %v1607 = vrcp.pop %v1606
        %v1608 = vmul.f32 1.0, %v1607
        %v1609 = vmul.f32 %v1608, %v1486
        %v1610 = vsub.f32 1.0, %v1608
        %v1611 = vmul.f32 %v1610, %v1602
        %v1612 = vadd.f32 %v1609, %v1611
        %v1613 = vld [vmem:[#allocation8] sm:$0xff]
        %v1614 = vld [vmem:[#allocation8 + $0x8] sm:$0xff]
        %v1615 = vld [vmem:[#allocation8 + $0x10] sm:$0xff]
        %v1616 = vld [vmem:[#allocation8 + $0x18] sm:$0xff]
        %v1617 = vld [vmem:[#allocation8 + $0x20] sm:$0xff]
        %v1618 = vld [vmem:[#allocation8 + $0x28] sm:$0xff]
        %v1619 = vld [vmem:[#allocation8 + $0x30] sm:$0xff]
        %v1620 = vld [vmem:[#allocation8 + $0x38] sm:$0xff]
        %v1621 = vld [vmem:[#allocation8 + $0x40] sm:$0xff]
        %v1622 = vld [vmem:[#allocation8 + $0x48] sm:$0xff]
        %v1623 = vld [vmem:[#allocation8 + $0x50] sm:$0xff]
        %v1624 = vld [vmem:[#allocation8 + $0x58] sm:$0xff]
        %v1625 = vld [vmem:[#allocation8 + $0x60] sm:$0xff]
        %v1626 = vld [vmem:[#allocation8 + $0x68] sm:$0xff]
        %v1627 = vld [vmem:[#allocation8 + $0x70] sm:$0xff]
        %v1628 = vld [vmem:[#allocation8 + $0x78] sm:$0xff]
        %v1629 = vld [vmem:[%s9] sm:$0x1]
        %v1631 = vlaneseq
        %v1632 = vshrl.u32 %v1631, 7
        %v1633 = vsub.s32 0, %v1632
        %v1634 = vrot.slane %v1629, %v1633
        %1636 = vmatprep.subr.mxu0 0.0
        %1637 = vmatpush1.msra.mxu0 %v1613
        %1638 = vmatprep.subr.mxu0 0.0
        %1639 = vmatpush1.msra.mxu0 %v1614
        %1640 = vmatprep.subr.mxu0 0.0
        %1641 = vmatpush1.msra.mxu0 %v1615
        %1642 = vmatprep.subr.mxu0 0.0
        %1643 = vmatpush1.msra.mxu0 %v1616
        %1644 = vmatprep.subr.mxu0 0.0
        %1645 = vmatpush1.msra.mxu0 %v1617
        %1646 = vmatprep.subr.mxu0 0.0
        %1647 = vmatpush1.msra.mxu0 %v1618
        %1648 = vmatprep.subr.mxu0 0.0
        %1649 = vmatpush1.msra.mxu0 %v1619
        %1650 = vmatprep.subr.mxu0 0.0
        %1651 = vmatpush1.msra.mxu0 %v1620
        %1652 = vmatprep.subr.mxu0 0.0
        %1653 = vmatpush1.msra.mxu0 %v1621
        %1654 = vmatprep.subr.mxu0 0.0
        %1655 = vmatpush1.msra.mxu0 %v1622
        %1656 = vmatprep.subr.mxu0 0.0
        %1657 = vmatpush1.msra.mxu0 %v1623
        %1658 = vmatprep.subr.mxu0 0.0
        %1659 = vmatpush1.msra.mxu0 %v1624
        %1660 = vmatprep.subr.mxu0 0.0
        %1661 = vmatpush1.msra.mxu0 %v1625
        %1662 = vmatprep.subr.mxu0 0.0
        %1663 = vmatpush1.msra.mxu0 %v1626
        %1664 = vmatprep.subr.mxu0 0.0
        %1665 = vmatpush1.msra.mxu0 %v1627
        %1666 = vmatprep.subr.mxu0 0.0
        %1667 = vmatpush1.msra.mxu0 %v1628
        %1668 = vmatprep.subr.mxu0 0.0
        %1669 = vmatpush1.msra.mxu0 0.0
        %1670 = vmatprep.subr.mxu0 0.0
        %1671 = vmatpush1.msra.mxu0 0.0
        %1672 = vmatprep.subr.mxu0 0.0
        %1673 = vmatpush1.msra.mxu0 0.0
        %1674 = vmatprep.subr.mxu0 0.0
        %1675 = vmatpush1.msra.mxu0 0.0
        %1676 = vmatprep.subr.mxu0 0.0
        %1677 = vmatpush1.msra.mxu0 0.0
        %1678 = vmatprep.subr.mxu0 0.0
        %1679 = vmatpush1.msra.mxu0 0.0
        %1680 = vmatprep.subr.mxu0 0.0
        %1681 = vmatpush1.msra.mxu0 0.0
        %1682 = vmatprep.subr.mxu0 0.0
        %1683 = vmatpush1.msra.mxu0 0.0
        %1684 = vmatprep.subr.mxu0 0.0
        %1685 = vmatpush1.msra.mxu0 0.0
        %1686 = vmatprep.subr.mxu0 0.0
        %1687 = vmatpush1.msra.mxu0 0.0
        %1688 = vmatprep.subr.mxu0 0.0
        %1689 = vmatpush1.msra.mxu0 0.0
        %1690 = vmatprep.subr.mxu0 0.0
        %1691 = vmatpush1.msra.mxu0 0.0
        %1692 = vmatprep.subr.mxu0 0.0
        %1693 = vmatpush1.msra.mxu0 0.0
        %1694 = vmatprep.subr.mxu0 0.0
        %1695 = vmatpush1.msra.mxu0 0.0
        %1696 = vmatprep.subr.mxu0 0.0
        %1697 = vmatpush1.msra.mxu0 0.0
        %1698 = vmatprep.subr.mxu0 0.0
        %1699 = vmatpush1.msra.mxu0 0.0
        %1700 = vmatprep.mubr.f32.mxu0 0.0
        %1701 = vmatmul.mubr.f32.gmra.mrb[0].mxu0 %v1612
        %v1702 = vpop.f32.mrb[0].mxu0
        %v1703 = vadd.f32 %v1634, %v1702
        %v1704 = vpop.f32.mrb[0].mxu0
        %1705 = vdwg.mxu0
        %1706 = vst [vmem:[%s412] sm:$0xff] %v1703
        %s1707 = sand.u32 %s250, 1
        %s1708 = scalar_lea.sflag [#allocation4], %s1707
        %s1709 = sand.u32 %s250, 1
        %s1710 = smul.addr %s1709, 8
        %s1711 = scalar_lea.vmem [#allocation10], %s1710
        // Predicated region
        $region77: #{tpu_custom_call.1} parent=59 // pred_check
          %p1712 = pneg %p260
        $region78: #{tpu_custom_call.1} parent=59 // pred_check_branch
          %1714 = sbr.rel (%p1712) target = $region80
        $region79: #{tpu_custom_call.1} parent=59 // pred_region
          %s1716 = ssub.s32 128, 128
          %1717 = vsyncadd %s1708, %s1716
          %s1718 = smul.addr %s27, 128
          %s1719 = scalar_lea.hbm %s10, %s1718
          %s1721 = sshll.u32 %s1711, 4
          %s1722 = int_to_ptr.vmem [resolvable:$true] %s1721
          %1724 = dma.vmem_to_hbm [thread:$0]  %s1722, 128, %s1719, %s1708
        $region80: #{tpu_custom_call.1} parent=59 // pred_fallthru
          _
      $region60: #{tpu_custom_call.1} parent=5 // pred_fallthru
        _
      %p1725 = scmp.le.s32.totalorder 2, %s22
      // Predicated region
      $region81: #{tpu_custom_call.1} parent=5 // pred_check
        %p1726 = pneg %p1725
      $region82: #{tpu_custom_call.1} parent=5 // pred_check_branch
        %1728 = sbr.rel (%p1726) target = $region84
      $region83: #{tpu_custom_call.1} parent=5 // pred_region
        %s1729 = ssub.s32 %s22, 2
        // Predicated region
        $region85: #{tpu_custom_call.1} parent=83 // pred_check
          %p1730 = pneg %p266
        $region86: #{tpu_custom_call.1} parent=83 // pred_check_branch
          %1732 = sbr.rel (%p1730) target = $region88
        $region87: #{tpu_custom_call.1} parent=83 // pred_region
          %s1733 = sand.u32 %s251, 1
          %s1734 = scalar_lea.sflag [#allocation4], %s1733
          %s1735 = sand.u32 %s251, 1
          %s1736 = smul.addr %s1735, 8
          %s1737 = scalar_lea.vmem [#allocation10], %s1736
          %1738 = dma.done %s1734, 128
        $region88: #{tpu_custom_call.1} parent=83 // pred_fallthru
          _
      $region84: #{tpu_custom_call.1} parent=5 // pred_fallthru
        _
    $region6: #{tpu_custom_call.1} parent=1 // loop_footer
      %s26 = sadd.s32 1, %s22
    $region7: #{tpu_custom_call.1} parent=1 // loop_footer_branch
      %21 = sbr.rel target = $region3
    $region8: #{tpu_custom_call.1} parent=1 // loop_exit
      _
    %1739 = vsyncpa [#allocation3], 1
    %s1740 = scalar_lea.sflag [#allocation3], 1
    %1741 = vsyncpa %s1740, 1
    %1742 = vsyncpa [#allocation6], 1
    %1743 = vsyncpa [#allocation9], 1
    %1744 = vsyncpa [#allocation4], 1
    %s1745 = scalar_lea.sflag [#allocation4], 1
    %1746 = vsyncpa %s1745, 1

</llo_original>
